<compile_context>
chip_gen: v7x
topology: tpu7x:2x2x1
jax: 0.10.0
libtpu: 0.0.40
codegen_flags: <defaults>
</compile_context>

<pallas_src>
import math
import functools

import jax
import jax.numpy as jnp
from jax import lax
from jax.experimental import pallas as pl
from jax.experimental.pallas import tpu as pltpu


# ----------------------------- per-generation config -----------------------------

def _device_config():
    """Returns (vmem_limit_bytes, use_bf16_vpu) for the current TPU generation."""
    kind = ""
    try:
        kind = jax.devices()[0].device_kind.lower()
    except Exception:
        pass
    if "v7" in kind or "7x" in kind:
        return 48 * 1024 * 1024, True      # 64 MiB physical VMEM -> leave headroom
    if "v6" in kind:
        return 64 * 1024 * 1024, True      # 128 MiB physical, bf16 VPU
    if "v5" in kind:
        return 64 * 1024 * 1024, False     # no bf16 VALU on v5e
    return 32 * 1024 * 1024, False         # conservative fallback (v2/v3/v4/unknown)


# ----------------------------- Pallas kernels -----------------------------

def node_input_kernel(x_ref, a_ref, deg_ref, px_ref, pa_ref, w_ref, y_ref,
                      *, ci, acc_dtype):
    """Fused linear_input + linear_mask (all-scalar irreps).

    z[n, i*Ca+j] = x[n,i]*a[n,j] via two 0/1 expansion matmuls, then one
    (TN, Ci*Ca) x (Ci*Ca, Ci+Co) matmul.  1/sqrt(node_deg) is applied to the
    first Ci columns (node_features); the last Co columns are node_mask, already
    scaled by sin(pi/8) through the folded weights.  Single fused bf16 output."""
    x_exp = jnp.dot(x_ref[...], px_ref[...], preferred_element_type=acc_dtype)
    a_exp = jnp.dot(a_ref[...], pa_ref[...], preferred_element_type=acc_dtype)
    z = (x_exp * a_exp).astype(jnp.bfloat16)
    y = jnp.dot(z, w_ref[...], preferred_element_type=jnp.float32)    # (TN, Ci+Co)
    inv = lax.rsqrt(deg_ref[...])                                     # (TN, 1)
    col = lax.broadcasted_iota(jnp.int32, y.shape, 1)
    y_ref[...] = jnp.where(col < ci, y * inv, y).astype(y_ref.dtype)


def edge_graph_kernel(ele_ref, w1_ref, ph_ref, pe_ref, w2r_ref, fused_ref,
                      src_ref, dst_ref, ea_ref, a_ref, deg_ref, px_ref,
                      pa_ref, wout_ref, o_ref, agg_ref, *, ci, acc_dtype):
    """Per edge tile: radial MLP (edge2weight) -> 'uvu' scalar tensor product ->
    one-hot gather of node_features[edge_src] -> scatter-sum over edge_dst into a
    resident VMEM accumulator (transposed MXU contraction, single shared iota).

    On the LAST edge tile the node epilogue runs: /sqrt(deg) -> linear_output
    (with c_x folded into the weights) -> add the pre-scaled node_mask, writing
    the resident output block.  Per-edge weights never touch HBM."""
    @pl.when(pl.program_id(0) == 0)
    def _():
        agg_ref[...] = jnp.zeros_like(agg_ref)

    # radial net hidden layer (silu); 1/sqrt(n_basis) folded into w1.
    h = jnp.dot(ele_ref[...], w1_ref[...], preferred_element_type=jnp.float32)
    h = h * jax.nn.sigmoid(h)                                         # silu (EUP)

    # s[e,u] = sum_{h,v} h[e,h]*ea[e,v]*W2[h,u*Ce+v]/sqrt(H*Ce) (scale+perm in w2r)
    h_exp = jnp.dot(h.astype(jnp.bfloat16), ph_ref[...],
                    preferred_element_type=acc_dtype)                 # (TE, H*Ce)
    e_exp = jnp.dot(ea_ref[...], pe_ref[...],
                    preferred_element_type=acc_dtype)                 # (TE, H*Ce)
    z = (h_exp * e_exp).astype(jnp.bfloat16)
    s = jnp.dot(z, w2r_ref[...], preferred_element_type=jnp.float32)  # (TE, Ci)

    # one shared (TE, N) iota for both one-hots (exact 0/1 values in bf16).
    te = ele_ref.shape[0]
    n_nodes = fused_ref.shape[0]
    node_iota = lax.broadcasted_iota(jnp.int32, (te, n_nodes), 1)
    src_oh = (src_ref[...] == node_iota).astype(jnp.bfloat16)
    dst_oh = (dst_ref[...] == node_iota).astype(jnp.bfloat16)

    fused_all = fused_ref[...]                                        # (N, Ci+Co) bf16
    nf = fused_all[:, :ci]                                            # node_features
    x1 = jnp.dot(src_oh, nf, preferred_element_type=jnp.float32)      # gather (TE, Ci)
    msg = (x1 * s).astype(jnp.bfloat16)

    # scatter-sum: agg[n,:] += sum_e dst_oh[e,n]*msg[e,:]  — transposed contraction,
    # the (N, TE) one-hot is never materialized.
    agg_ref[...] += lax.dot_general(dst_oh, msg, (((0,), (0,)), ((), ())),
                                    preferred_element_type=jnp.float32)

    @pl.when(pl.program_id(0) == pl.num_programs(0) - 1)
    def _():
        x = (agg_ref[...] * lax.rsqrt(deg_ref[...])).astype(jnp.bfloat16)
        x_exp = jnp.dot(x, px_ref[...], preferred_element_type=acc_dtype)
        a_exp = jnp.dot(a_ref[...], pa_ref[...], preferred_element_type=acc_dtype)
        zz = (x_exp * a_exp).astype(jnp.bfloat16)
        y = jnp.dot(zz, wout_ref[...], preferred_element_type=jnp.float32)  # (N, Co)
        # out = sin(pi/8)*node_mask + c_x*node_output  (both constants folded in weights)
        o_ref[...] = fused_all[:, ci:].astype(jnp.float32) + y


# ----------------------------- parameter prep -----------------------------

def _expansion_matrices(c_left, c_right, dtype=jnp.bfloat16):
    """P_left[i, i*c_right + j] = 1 ;  P_right[j, i*c_right + j] = 1."""
    k = jnp.arange(c_left * c_right)
    p_left = (jnp.arange(c_left)[:, None] == (k[None, :] // c_right)).astype(dtype)
    p_right = (jnp.arange(c_right)[:, None] == (k[None, :] % c_right)).astype(dtype)
    return p_left, p_right


def prepare_params(params, *, ci, ca, ce, co, nb, nh):
    """Fold constant scales + combine constants into weights, permute w_mlp2 columns,
    concat linear_input/linear_mask, build the 0/1 expansion matrices; cast to bf16."""
    scale_lin = 1.0 / math.sqrt(float(ci * ca))
    c_s = math.sin(math.pi / 8.0)
    m = params["output_mask"].astype(jnp.float32)                 # (1, co)
    cx = 1.0 - m + math.cos(math.pi / 8.0) * m                    # (1, co)

    w_in = params["w_lin_input"].reshape(ci * ca, ci) * scale_lin
    w_mask = params["w_lin_mask"].reshape(ci * ca, co) * (scale_lin * c_s)
    w_out = params["w_lin_output"].reshape(ci * ca, co) * scale_lin * cx
    w1 = params["w_mlp1"] * (1.0 / math.sqrt(float(nb)))
    # w2r[h*Ce+v, u] = w_mlp2[h, u*Ce+v] / sqrt(H*Ce)
    w2r = (params["w_mlp2"].reshape(nh, ci, ce).transpose(0, 2, 1)
           .reshape(nh * ce, ci)) * (1.0 / math.sqrt(float(nh * ce)))

    px, pa = _expansion_matrices(ci, ca)
    ph, pe = _expansion_matrices(nh, ce)
    return {
        "w_lin_cat": jnp.concatenate([w_in, w_mask], axis=1).astype(jnp.bfloat16),
        "w_lin_out2d": w_out.astype(jnp.bfloat16),
        "w_mlp1": w1.astype(jnp.bfloat16),
        "w_mlp2r": w2r.astype(jnp.bfloat16),
        "px": px, "pa": pa, "ph": ph, "pe": pe,
    }


# ----------------------------- forward wrapper -----------------------------

def graph_convolution_forward(p, node_input, node_attr, node_deg,
                              edge_src, edge_dst, edge_attr,
                              edge_length_embedded, numb=None, n=None,
                              *, node_tile=None, edge_tile=None):
    # numb, n accepted for signature parity with the torch module; unused.
    n_nodes, ci = node_input.shape
    n_edges, ce = edge_attr.shape
    ca = node_attr.shape[1]
    nb, nh = edge_length_embedded.shape[1], p["w_mlp1"].shape[1]
    co = p["w_lin_out2d"].shape[1]

    vmem_limit, bf16_vpu = _device_config()
    acc_dtype = jnp.bfloat16 if bf16_vpu else jnp.float32
    if node_tile is None:
        node_tile = 256 if bf16_vpu else 128      # fill the 256/128-row MXU
    if edge_tile is None:
        edge_tile = 512
    node_tile = min(node_tile, n_nodes)
    edge_tile = min(edge_tile, n_edges)
    assert n_nodes % node_tile == 0 and node_tile % 8 == 0
    assert n_edges % edge_tile == 0 and edge_tile % 8 == 0

    x_bf = node_input.astype(jnp.bfloat16)
    a_bf = node_attr.astype(jnp.bfloat16)
    ea_bf = edge_attr.astype(jnp.bfloat16)
    ele_bf = edge_length_embedded.astype(jnp.bfloat16)
    deg = node_deg.astype(jnp.float32)
    src2d = edge_src.astype(jnp.int32).reshape(n_edges, 1)
    dst2d = edge_dst.astype(jnp.int32).reshape(n_edges, 1)

    # --- kernel A: linear_input + linear_mask + /sqrt(deg)  (node-tiled) ----------
    fused = pl.pallas_call(
        functools.partial(node_input_kernel, ci=ci, acc_dtype=acc_dtype),
        grid=(n_nodes // node_tile,),
        in_specs=[
            pl.BlockSpec((node_tile, ci), lambda i: (i, 0)),
            pl.BlockSpec((node_tile, ca), lambda i: (i, 0)),
            pl.BlockSpec((node_tile, 1), lambda i: (i, 0)),
            pl.BlockSpec((ci, ci * ca), lambda i: (0, 0)),
            pl.BlockSpec((ca, ci * ca), lambda i: (0, 0)),
            pl.BlockSpec((ci * ca, ci + co), lambda i: (0, 0)),
        ],
        out_specs=pl.BlockSpec((node_tile, ci + co), lambda i: (i, 0)),
        out_shape=jax.ShapeDtypeStruct((n_nodes, ci + co), jnp.bfloat16),
        compiler_params=pltpu.CompilerParams(
            dimension_semantics=("parallel",), vmem_limit_bytes=vmem_limit),
    )(x_bf, a_bf, deg, p["px"], p["pa"], p["w_lin_cat"])

    # --- kernel B: radial MLP + 'uvu' TP + gather/scatter + fused node epilogue ---
    out = pl.pallas_call(
        functools.partial(edge_graph_kernel, ci=ci, acc_dtype=acc_dtype),
        grid=(n_edges // edge_tile,),
        in_specs=[
            pl.BlockSpec((edge_tile, nb), lambda e: (e, 0)),        # edge_len_emb
            pl.BlockSpec((nb, nh), lambda e: (0, 0)),               # w_mlp1
            pl.BlockSpec((nh, nh * ce), lambda e: (0, 0)),          # P_h
            pl.BlockSpec((ce, nh * ce), lambda e: (0, 0)),          # P_e
            pl.BlockSpec((nh * ce, ci), lambda e: (0, 0)),          # w_mlp2 (permuted)
            pl.BlockSpec((n_nodes, ci + co), lambda e: (0, 0)),     # nf || node_mask
            pl.BlockSpec((edge_tile, 1), lambda e: (e, 0)),         # edge_src
            pl.BlockSpec((edge_tile, 1), lambda e: (e, 0)),         # edge_dst
            pl.BlockSpec((edge_tile, ce), lambda e: (e, 0)),        # edge_attr
            pl.BlockSpec((n_nodes, ca), lambda e: (0, 0)),          # node_attr
            pl.BlockSpec((n_nodes, 1), lambda e: (0, 0)),           # node_deg
            pl.BlockSpec((ci, ci * ca), lambda e: (0, 0)),          # P_x
            pl.BlockSpec((ca, ci * ca), lambda e: (0, 0)),          # P_a
            pl.BlockSpec((ci * ca, co), lambda e: (0, 0)),          # w_lin_output
        ],
        out_specs=pl.BlockSpec((n_nodes, co), lambda e: (0, 0)),    # resident output
        out_shape=jax.ShapeDtypeStruct((n_nodes, co), jnp.float32),
        scratch_shapes=[pltpu.VMEM((n_nodes, ci), jnp.float32)],    # edge aggregate
        compiler_params=pltpu.CompilerParams(
            dimension_semantics=("arbitrary",), vmem_limit_bytes=vmem_limit),
    )(ele_bf, p["w_mlp1"], p["ph"], p["pe"], p["w_mlp2r"], fused,
      src2d, dst2d, ea_bf, a_bf, deg, p["px"], p["pa"], p["w_lin_out2d"])
    return out


# ----------------------------- pure-JAX reference -----------------------------

def _ref_fctp(x, a, w):
    ci, ca = x.shape[1], a.shape[1]
    return jnp.einsum('ni,nj,ijk->nk', x, a, w) / math.sqrt(float(ci * ca))


def reference_forward(params, node_input, node_attr, node_deg,
                      edge_src, edge_dst, edge_attr, edge_length_embedded):
    nif = _ref_fctp(node_input, node_attr, params["w_lin_input"])
    nf = nif / jnp.sqrt(node_deg)
    node_mask = _ref_fctp(node_input, node_attr, params["w_lin_mask"])
    n_in = edge_length_embedded.shape[1]
    h = edge_length_embedded @ params["w_mlp1"] / math.sqrt(float(n_in))
    h = jax.nn.silu(h)
    ew = h @ params["w_mlp2"] / math.sqrt(float(h.shape[1]))
    e = edge_attr.shape[0]
    ci = nf.shape[1]
    ce = edge_attr.shape[1]
    w3 = ew.reshape(e, ci, ce)
    x1 = nf[edge_src]
    msg = x1 * (w3 * edge_attr[:, None, :]).sum(-1) / math.sqrt(float(ce))
    agg = jnp.zeros_like(nf).at[edge_dst].add(msg)
    agg = agg / jnp.sqrt(node_deg)
    node_output = _ref_fctp(agg, node_attr, params["w_lin_output"])
    c_s, c_x_const = math.sin(math.pi / 8.0), math.cos(math.pi / 8.0)
    m = params["output_mask"]
    c_x = 1.0 - m + c_x_const * m
    return c_s * node_mask + c_x * node_output


# ----------------------------- main -----------------------------

if __name__ == "__main__":
    # small synthetic sizes consistent with the module
    N_NODES = 64
    N_EDGES = 256
    C_IN = 32      # irreps_in        = "32x0e"
    C_ATTR = 8     # irreps_node_attr = "8x0e"
    C_EDGE = 8     # irreps_edge_attr = "8x0e"
    C_OUT = 16     # irreps_out       = "16x0e"
    N_BASIS = 10   # number_of_basis
    RADIAL_NEURONS = 16  # radial_layers = 1

    key = jax.random.PRNGKey(0)
    keys = jax.random.split(key, 10)

    node_input = jax.random.normal(keys[0], (N_NODES, C_IN), jnp.float32)
    node_attr = jax.random.normal(keys[1], (N_NODES, C_ATTR), jnp.float32)
    edge_attr = jax.random.normal(keys[2], (N_EDGES, C_EDGE), jnp.float32)
    edge_len_emb = jax.random.normal(keys[3], (N_EDGES, N_BASIS), jnp.float32)
    edge_src = jax.random.randint(keys[4], (N_EDGES,), 0, N_NODES, jnp.int32)
    edge_dst = jax.random.randint(keys[5], (N_EDGES,), 0, N_NODES, jnp.int32)
    deg_counts = jnp.zeros((N_NODES,), jnp.float32).at[edge_dst].add(1.0)
    node_deg = jnp.maximum(deg_counts, 1.0).reshape(N_NODES, 1)

    weight_numel = C_IN * C_EDGE  # tensor_edge.weight_numel for scalar 'uvu'
    params = {
        "w_lin_input": jax.random.normal(keys[6], (C_IN, C_ATTR, C_IN), jnp.float32),
        "w_lin_mask": jax.random.normal(keys[7], (C_IN, C_ATTR, C_OUT), jnp.float32),
        "w_lin_output": jax.random.normal(keys[8], (C_IN, C_ATTR, C_OUT), jnp.float32),
        "w_mlp1": jax.random.normal(keys[9], (N_BASIS, RADIAL_NEURONS), jnp.float32),
        "w_mlp2": jax.random.normal(jax.random.fold_in(key, 99),
                                    (RADIAL_NEURONS, weight_numel), jnp.float32),
        # all-scalar irreps, fully connected -> output_mask is all ones
        "output_mask": jnp.ones((1, C_OUT), jnp.float32),
    }

    prep = prepare_params(params, ci=C_IN, ca=C_ATTR, ce=C_EDGE, co=C_OUT,
                          nb=N_BASIS, nh=RADIAL_NEURONS)

    forward = jax.jit(graph_convolution_forward)
    out = forward(prep, node_input, node_attr, node_deg,
                  edge_src, edge_dst, edge_attr, edge_len_emb)
    out = jax.block_until_ready(out)

    ref = reference_forward(params, node_input, node_attr, node_deg,
                            edge_src, edge_dst, edge_attr, edge_len_emb)
    ref = jax.block_until_ready(ref)

    assert out.shape == (N_NODES, C_OUT)
    assert bool(jnp.allclose(out, ref, rtol=5e-2, atol=5e-2))
    print("KERNEL_OK")
</pallas_src>

<mosaic_0001>
module attributes {stable_mosaic.version = 11 : i64} {
  func.func @node_input_kernel(%arg0: i32, %arg1: memref<64x32xbf16, #tpu.memory_space<vmem>>, %arg2: memref<64x8xbf16, #tpu.memory_space<vmem>>, %arg3: memref<64x1xf32, #tpu.memory_space<vmem>>, %arg4: memref<32x256xbf16, #tpu.memory_space<vmem>>, %arg5: memref<8x256xbf16, #tpu.memory_space<vmem>>, %arg6: memref<256x48xbf16, #tpu.memory_space<vmem>>, %arg7: memref<64x48xbf16, #tpu.memory_space<vmem>>) attributes {dimension_semantics = [#tpu.dimension_semantics<parallel>], iteration_bounds = array<i64: 1>, scalar_prefetch = 0 : i64, scratch_operands = 0 : i64, tpu.core_type = #tpu.core_type<tc>, window_params = [{transform_indices = @transform_0, window_bounds = array<i64: 64, 32>}, {transform_indices = @transform_1, window_bounds = array<i64: 64, 8>}, {transform_indices = @transform_2, window_bounds = array<i64: 64, 1>}, {pipeline_mode = #tpu.pipeline_mode<synchronous>, transform_indices = @transform_3, window_bounds = array<i64: 32, 256>}, {pipeline_mode = #tpu.pipeline_mode<synchronous>, transform_indices = @transform_4, window_bounds = array<i64: 8, 256>}, {pipeline_mode = #tpu.pipeline_mode<synchronous>, transform_indices = @transform_5, window_bounds = array<i64: 256, 48>}, {transform_indices = @transform_6, window_bounds = array<i64: 64, 48>}]} {
    %c0 = arith.constant 0 : index
    %c0_0 = arith.constant 0 : index
    %0 = vector.load %arg1[%c0, %c0_0] : memref<64x32xbf16, #tpu.memory_space<vmem>>, vector<64x32xbf16>
    %c0_1 = arith.constant 0 : index
    %c0_2 = arith.constant 0 : index
    %1 = vector.load %arg4[%c0_1, %c0_2] : memref<32x256xbf16, #tpu.memory_space<vmem>>, vector<32x256xbf16>
    %cst = arith.constant dense<0.000000e+00> : vector<64x256xf32>
    %2 = tpu.matmul %0, %1, %cst {dimension_numbers = #tpu.dot_dimension_numbers<[1], [0], [0], [1], [0, 0, 1, 1], [], []>} : vector<64x32xbf16>, vector<32x256xbf16>, vector<64x256xf32> -> vector<64x256xf32>
    %c0_3 = arith.constant 0 : index
    %c0_4 = arith.constant 0 : index
    %3 = vector.load %arg2[%c0_3, %c0_4] : memref<64x8xbf16, #tpu.memory_space<vmem>>, vector<64x8xbf16>
    %c0_5 = arith.constant 0 : index
    %c0_6 = arith.constant 0 : index
    %4 = vector.load %arg5[%c0_5, %c0_6] : memref<8x256xbf16, #tpu.memory_space<vmem>>, vector<8x256xbf16>
    %cst_7 = arith.constant dense<0.000000e+00> : vector<64x256xf32>
    %5 = tpu.matmul %3, %4, %cst_7 {dimension_numbers = #tpu.dot_dimension_numbers<[1], [0], [0], [1], [0, 0, 1, 1], [], []>} : vector<64x8xbf16>, vector<8x256xbf16>, vector<64x256xf32> -> vector<64x256xf32>
    %6 = arith.mulf %2, %5 : vector<64x256xf32>
    %7 = arith.truncf %6 : vector<64x256xf32> to vector<64x256xbf16>
    %c0_8 = arith.constant 0 : index
    %c0_9 = arith.constant 0 : index
    %8 = vector.load %arg6[%c0_8, %c0_9] : memref<256x48xbf16, #tpu.memory_space<vmem>>, vector<256x48xbf16>
    %cst_10 = arith.constant dense<0.000000e+00> : vector<64x48xf32>
    %9 = tpu.matmul %7, %8, %cst_10 {dimension_numbers = #tpu.dot_dimension_numbers<[1], [0], [0], [1], [0, 0, 1, 1], [], []>} : vector<64x256xbf16>, vector<256x48xbf16>, vector<64x48xf32> -> vector<64x48xf32>
    %c0_11 = arith.constant 0 : index
    %c0_12 = arith.constant 0 : index
    %10 = vector.load %arg3[%c0_11, %c0_12] : memref<64x1xf32, #tpu.memory_space<vmem>>, vector<64x1xf32>
    %11 = math.rsqrt %10 : vector<64x1xf32>
    %12 = tpu.iota {dimensions = array<i32: 1>} : vector<64x48xi32>
    %c32_i32 = arith.constant 32 : i32
    %13 = vector.broadcast %c32_i32 : i32 to vector<64x48xi32>
    %14 = arith.cmpi slt, %12, %13 : vector<64x48xi32>
    %15 = vector.broadcast %11 : vector<64x1xf32> to vector<64x48xf32>
    %16 = arith.mulf %9, %15 : vector<64x48xf32>
    %17 = arith.select %14, %16, %9 : vector<64x48xi1>, vector<64x48xf32>
    %18 = arith.truncf %17 : vector<64x48xf32> to vector<64x48xbf16>
    %c0_13 = arith.constant 0 : index
    %c0_14 = arith.constant 0 : index
    %19 = vector.load %arg7[%c0_13, %c0_14] : memref<64x48xbf16, #tpu.memory_space<vmem>>, vector<64x48xbf16>
    tpu.vector_store %arg7[%c0_13, %c0_14], %18 {strides = array<i32>} : memref<64x48xbf16, #tpu.memory_space<vmem>>, vector<64x48xbf16>,
    return
  }
  func.func @transform_0(%arg0: i32) -> (i32, i32) {
    %c0_i32 = arith.constant 0 : i32
    %c0_i32_0 = arith.constant 0 : i32
    return %arg0, %c0_i32 : i32, i32
  }
  func.func @transform_1(%arg0: i32) -> (i32, i32) {
    %c0_i32 = arith.constant 0 : i32
    %c0_i32_0 = arith.constant 0 : i32
    return %arg0, %c0_i32 : i32, i32
  }
  func.func @transform_2(%arg0: i32) -> (i32, i32) {
    %c0_i32 = arith.constant 0 : i32
    %c0_i32_0 = arith.constant 0 : i32
    return %arg0, %c0_i32 : i32, i32
  }
  func.func @transform_3(%arg0: i32) -> (i32, i32) {
    %c0_i32 = arith.constant 0 : i32
    %c0_i32_0 = arith.constant 0 : i32
    %c0_i32_1 = arith.constant 0 : i32
    return %c0_i32, %c0_i32_0 : i32, i32
  }
  func.func @transform_4(%arg0: i32) -> (i32, i32) {
    %c0_i32 = arith.constant 0 : i32
    %c0_i32_0 = arith.constant 0 : i32
    %c0_i32_1 = arith.constant 0 : i32
    return %c0_i32, %c0_i32_0 : i32, i32
  }
  func.func @transform_5(%arg0: i32) -> (i32, i32) {
    %c0_i32 = arith.constant 0 : i32
    %c0_i32_0 = arith.constant 0 : i32
    %c0_i32_1 = arith.constant 0 : i32
    return %c0_i32, %c0_i32_0 : i32, i32
  }
  func.func @transform_6(%arg0: i32) -> (i32, i32) {
    %c0_i32 = arith.constant 0 : i32
    %c0_i32_0 = arith.constant 0 : i32
    return %arg0, %c0_i32 : i32, i32
  }
}

module attributes {stable_mosaic.version = 11 : i64} {
  func.func @edge_graph_kernel(%arg0: i32, %arg1: memref<256x10xbf16, #tpu.memory_space<vmem>>, %arg2: memref<10x16xbf16, #tpu.memory_space<vmem>>, %arg3: memref<16x128xbf16, #tpu.memory_space<vmem>>, %arg4: memref<8x128xbf16, #tpu.memory_space<vmem>>, %arg5: memref<128x32xbf16, #tpu.memory_space<vmem>>, %arg6: memref<64x48xbf16, #tpu.memory_space<vmem>>, %arg7: memref<256x1xi32, #tpu.memory_space<vmem>>, %arg8: memref<256x1xi32, #tpu.memory_space<vmem>>, %arg9: memref<256x8xbf16, #tpu.memory_space<vmem>>, %arg10: memref<64x8xbf16, #tpu.memory_space<vmem>>, %arg11: memref<64x1xf32, #tpu.memory_space<vmem>>, %arg12: memref<32x256xbf16, #tpu.memory_space<vmem>>, %arg13: memref<8x256xbf16, #tpu.memory_space<vmem>>, %arg14: memref<256x16xbf16, #tpu.memory_space<vmem>>, %arg15: memref<64x16xf32, #tpu.memory_space<vmem>>, %arg16: memref<64x32xf32, #tpu.memory_space<vmem>>) attributes {dimension_semantics = [#tpu.dimension_semantics<arbitrary>], iteration_bounds = array<i64: 1>, scalar_prefetch = 0 : i64, scratch_operands = 1 : i64, tpu.core_type = #tpu.core_type<tc>, window_params = [{transform_indices = @transform_0, window_bounds = array<i64: 256, 10>}, {pipeline_mode = #tpu.pipeline_mode<synchronous>, transform_indices = @transform_1, window_bounds = array<i64: 10, 16>}, {pipeline_mode = #tpu.pipeline_mode<synchronous>, transform_indices = @transform_2, window_bounds = array<i64: 16, 128>}, {pipeline_mode = #tpu.pipeline_mode<synchronous>, transform_indices = @transform_3, window_bounds = array<i64: 8, 128>}, {pipeline_mode = #tpu.pipeline_mode<synchronous>, transform_indices = @transform_4, window_bounds = array<i64: 128, 32>}, {pipeline_mode = #tpu.pipeline_mode<synchronous>, transform_indices = @transform_5, window_bounds = array<i64: 64, 48>}, {transform_indices = @transform_6, window_bounds = array<i64: 256, 1>}, {transform_indices = @transform_7, window_bounds = array<i64: 256, 1>}, {transform_indices = @transform_8, window_bounds = array<i64: 256, 8>}, {pipeline_mode = #tpu.pipeline_mode<synchronous>, transform_indices = @transform_9, window_bounds = array<i64: 64, 8>}, {pipeline_mode = #tpu.pipeline_mode<synchronous>, transform_indices = @transform_10, window_bounds = array<i64: 64, 1>}, {pipeline_mode = #tpu.pipeline_mode<synchronous>, transform_indices = @transform_11, window_bounds = array<i64: 32, 256>}, {pipeline_mode = #tpu.pipeline_mode<synchronous>, transform_indices = @transform_12, window_bounds = array<i64: 8, 256>}, {pipeline_mode = #tpu.pipeline_mode<synchronous>, transform_indices = @transform_13, window_bounds = array<i64: 256, 16>}, {pipeline_mode = #tpu.pipeline_mode<synchronous>, transform_indices = @transform_14, window_bounds = array<i64: 64, 16>}]} {
    %c0_i32 = arith.constant 0 : i32
    %0 = arith.cmpi eq, %arg0, %c0_i32 : i32
    %1 = arith.extui %0 : i1 to i32
    %c0_i32_0 = arith.constant 0 : i32
    %2 = arith.cmpi ne, %1, %c0_i32_0 : i32
    scf.if %2 {
      %cst_30 = arith.constant 0.000000e+00 : f32
      %47 = vector.broadcast %cst_30 : f32 to vector<64x32xf32>
      %c0_31 = arith.constant 0 : index
      %c0_32 = arith.constant 0 : index
      %48 = vector.load %arg16[%c0_31, %c0_32] : memref<64x32xf32, #tpu.memory_space<vmem>>, vector<64x32xf32>
      tpu.vector_store %arg16[%c0_31, %c0_32], %47 {strides = array<i32>} : memref<64x32xf32, #tpu.memory_space<vmem>>, vector<64x32xf32>,
    } else {
    }
    %c0 = arith.constant 0 : index
    %c0_1 = arith.constant 0 : index
    %3 = vector.load %arg1[%c0, %c0_1] : memref<256x10xbf16, #tpu.memory_space<vmem>>, vector<256x10xbf16>
    %c0_2 = arith.constant 0 : index
    %c0_3 = arith.constant 0 : index
    %4 = vector.load %arg2[%c0_2, %c0_3] : memref<10x16xbf16, #tpu.memory_space<vmem>>, vector<10x16xbf16>
    %cst = arith.constant dense<0.000000e+00> : vector<256x16xf32>
    %5 = tpu.matmul %3, %4, %cst {dimension_numbers = #tpu.dot_dimension_numbers<[1], [0], [0], [1], [0, 0, 1, 1], [], []>} : vector<256x10xbf16>, vector<10x16xbf16>, vector<256x16xf32> -> vector<256x16xf32>
    %6 = arith.negf %5 : vector<256x16xf32>
    %7 = math.exp %6 : vector<256x16xf32>
    %cst_4 = arith.constant 1.000000e+00 : f32
    %8 = vector.broadcast %cst_4 : f32 to vector<256x16xf32>
    %9 = arith.addf %8, %7 : vector<256x16xf32>
    %10 = arith.divf %8, %9 : vector<256x16xf32>
    %11 = arith.mulf %5, %10 : vector<256x16xf32>
    %12 = arith.truncf %11 : vector<256x16xf32> to vector<256x16xbf16>
    %c0_5 = arith.constant 0 : index
    %c0_6 = arith.constant 0 : index
    %13 = vector.load %arg3[%c0_5, %c0_6] : memref<16x128xbf16, #tpu.memory_space<vmem>>, vector<16x128xbf16>
    %cst_7 = arith.constant dense<0.000000e+00> : vector<256x128xf32>
    %14 = tpu.matmul %12, %13, %cst_7 {dimension_numbers = #tpu.dot_dimension_numbers<[1], [0], [0], [1], [0, 0, 1, 1], [], []>} : vector<256x16xbf16>, vector<16x128xbf16>, vector<256x128xf32> -> vector<256x128xf32>
    %c0_8 = arith.constant 0 : index
    %c0_9 = arith.constant 0 : index
    %15 = vector.load %arg9[%c0_8, %c0_9] : memref<256x8xbf16, #tpu.memory_space<vmem>>, vector<256x8xbf16>
    %c0_10 = arith.constant 0 : index
    %c0_11 = arith.constant 0 : index
    %16 = vector.load %arg4[%c0_10, %c0_11] : memref<8x128xbf16, #tpu.memory_space<vmem>>, vector<8x128xbf16>
    %cst_12 = arith.constant dense<0.000000e+00> : vector<256x128xf32>
    %17 = tpu.matmul %15, %16, %cst_12 {dimension_numbers = #tpu.dot_dimension_numbers<[1], [0], [0], [1], [0, 0, 1, 1], [], []>} : vector<256x8xbf16>, vector<8x128xbf16>, vector<256x128xf32> -> vector<256x128xf32>
    %18 = arith.mulf %14, %17 : vector<256x128xf32>
    %19 = arith.truncf %18 : vector<256x128xf32> to vector<256x128xbf16>
    %c0_13 = arith.constant 0 : index
    %c0_14 = arith.constant 0 : index
    %20 = vector.load %arg5[%c0_13, %c0_14] : memref<128x32xbf16, #tpu.memory_space<vmem>>, vector<128x32xbf16>
    %cst_15 = arith.constant dense<0.000000e+00> : vector<256x32xf32>
    %21 = tpu.matmul %19, %20, %cst_15 {dimension_numbers = #tpu.dot_dimension_numbers<[1], [0], [0], [1], [0, 0, 1, 1], [], []>} : vector<256x128xbf16>, vector<128x32xbf16>, vector<256x32xf32> -> vector<256x32xf32>
    %22 = tpu.iota {dimensions = array<i32: 1>} : vector<256x64xi32>
    %c0_16 = arith.constant 0 : index
    %c0_17 = arith.constant 0 : index
    %23 = vector.load %arg7[%c0_16, %c0_17] : memref<256x1xi32, #tpu.memory_space<vmem>>, vector<256x1xi32>
    %24 = vector.broadcast %23 : vector<256x1xi32> to vector<256x64xi32>
    %25 = arith.cmpi eq, %24, %22 : vector<256x64xi32>
    %26 = arith.extui %25 : vector<256x64xi1> to vector<256x64xi32>
    %27 = arith.sitofp %26 : vector<256x64xi32> to vector<256x64xf32>
    %28 = arith.truncf %27 : vector<256x64xf32> to vector<256x64xbf16>
    %c0_18 = arith.constant 0 : index
    %c0_19 = arith.constant 0 : index
    %29 = vector.load %arg8[%c0_18, %c0_19] : memref<256x1xi32, #tpu.memory_space<vmem>>, vector<256x1xi32>
    %30 = vector.broadcast %29 : vector<256x1xi32> to vector<256x64xi32>
    %31 = arith.cmpi eq, %30, %22 : vector<256x64xi32>
    %32 = arith.extui %31 : vector<256x64xi1> to vector<256x64xi32>
    %33 = arith.sitofp %32 : vector<256x64xi32> to vector<256x64xf32>
    %34 = arith.truncf %33 : vector<256x64xf32> to vector<256x64xbf16>
    %c0_20 = arith.constant 0 : index
    %c0_21 = arith.constant 0 : index
    %35 = vector.load %arg6[%c0_20, %c0_21] : memref<64x48xbf16, #tpu.memory_space<vmem>>, vector<64x48xbf16>
    %36 = vector.extract_strided_slice %35 {offsets = [0, 0], sizes = [64, 32], strides = [1, 1]} : vector<64x48xbf16> to vector<64x32xbf16>
    %cst_22 = arith.constant dense<0.000000e+00> : vector<256x32xf32>
    %37 = tpu.matmul %28, %36, %cst_22 {dimension_numbers = #tpu.dot_dimension_numbers<[1], [0], [0], [1], [0, 0, 1, 1], [], []>} : vector<256x64xbf16>, vector<64x32xbf16>, vector<256x32xf32> -> vector<256x32xf32>
    %38 = arith.mulf %37, %21 : vector<256x32xf32>
    %39 = arith.truncf %38 : vector<256x32xf32> to vector<256x32xbf16>
    %c0_23 = arith.constant 0 : index
    %c0_24 = arith.constant 0 : index
    %40 = vector.load %arg16[%c0_23, %c0_24] : memref<64x32xf32, #tpu.memory_space<vmem>>, vector<64x32xf32>
    %cst_25 = arith.constant dense<0.000000e+00> : vector<64x32xf32>
    %41 = tpu.matmul %34, %39, %cst_25 {dimension_numbers = #tpu.dot_dimension_numbers<[0], [0], [1], [1], [0, 1, 1, 1], [], []>} : vector<256x64xbf16>, vector<256x32xbf16>, vector<64x32xf32> -> vector<64x32xf32>
    %42 = arith.addf %40, %41 : vector<64x32xf32>
    %c0_26 = arith.constant 0 : index
    %c0_27 = arith.constant 0 : index
    %43 = vector.load %arg16[%c0_26, %c0_27] : memref<64x32xf32, #tpu.memory_space<vmem>>, vector<64x32xf32>
    tpu.vector_store %arg16[%c0_26, %c0_27], %42 {strides = array<i32>} : memref<64x32xf32, #tpu.memory_space<vmem>>, vector<64x32xf32>,
    %c0_i32_28 = arith.constant 0 : i32
    %44 = arith.cmpi eq, %arg0, %c0_i32_28 : i32
    %45 = arith.extui %44 : i1 to i32
    %c0_i32_29 = arith.constant 0 : i32
    %46 = arith.cmpi ne, %45, %c0_i32_29 : i32
    scf.if %46 {
      %c0_30 = arith.constant 0 : index
      %c0_31 = arith.constant 0 : index
      %47 = vector.load %arg16[%c0_30, %c0_31] : memref<64x32xf32, #tpu.memory_space<vmem>>, vector<64x32xf32>
      %c0_32 = arith.constant 0 : index
      %c0_33 = arith.constant 0 : index
      %48 = vector.load %arg11[%c0_32, %c0_33] : memref<64x1xf32, #tpu.memory_space<vmem>>, vector<64x1xf32>
      %49 = math.rsqrt %48 : vector<64x1xf32>
      %50 = vector.broadcast %49 : vector<64x1xf32> to vector<64x32xf32>
      %51 = arith.mulf %47, %50 : vector<64x32xf32>
      %52 = arith.truncf %51 : vector<64x32xf32> to vector<64x32xbf16>
      %c0_34 = arith.constant 0 : index
      %c0_35 = arith.constant 0 : index
      %53 = vector.load %arg12[%c0_34, %c0_35] : memref<32x256xbf16, #tpu.memory_space<vmem>>, vector<32x256xbf16>
      %cst_36 = arith.constant dense<0.000000e+00> : vector<64x256xf32>
      %54 = tpu.matmul %52, %53, %cst_36 {dimension_numbers = #tpu.dot_dimension_numbers<[1], [0], [0], [1], [0, 0, 1, 1], [], []>} : vector<64x32xbf16>, vector<32x256xbf16>, vector<64x256xf32> -> vector<64x256xf32>
      %c0_37 = arith.constant 0 : index
      %c0_38 = arith.constant 0 : index
      %55 = vector.load %arg10[%c0_37, %c0_38] : memref<64x8xbf16, #tpu.memory_space<vmem>>, vector<64x8xbf16>
      %c0_39 = arith.constant 0 : index
      %c0_40 = arith.constant 0 : index
      %56 = vector.load %arg13[%c0_39, %c0_40] : memref<8x256xbf16, #tpu.memory_space<vmem>>, vector<8x256xbf16>
      %cst_41 = arith.constant dense<0.000000e+00> : vector<64x256xf32>
      %57 = tpu.matmul %55, %56, %cst_41 {dimension_numbers = #tpu.dot_dimension_numbers<[1], [0], [0], [1], [0, 0, 1, 1], [], []>} : vector<64x8xbf16>, vector<8x256xbf16>, vector<64x256xf32> -> vector<64x256xf32>
      %58 = arith.mulf %54, %57 : vector<64x256xf32>
      %59 = arith.truncf %58 : vector<64x256xf32> to vector<64x256xbf16>
      %c0_42 = arith.constant 0 : index
      %c0_43 = arith.constant 0 : index
      %60 = vector.load %arg14[%c0_42, %c0_43] : memref<256x16xbf16, #tpu.memory_space<vmem>>, vector<256x16xbf16>
      %cst_44 = arith.constant dense<0.000000e+00> : vector<64x16xf32>
      %61 = tpu.matmul %59, %60, %cst_44 {dimension_numbers = #tpu.dot_dimension_numbers<[1], [0], [0], [1], [0, 0, 1, 1], [], []>} : vector<64x256xbf16>, vector<256x16xbf16>, vector<64x16xf32> -> vector<64x16xf32>
      %62 = vector.extract_strided_slice %35 {offsets = [0, 32], sizes = [64, 16], strides = [1, 1]} : vector<64x48xbf16> to vector<64x16xbf16>
      %63 = arith.extf %62 : vector<64x16xbf16> to vector<64x16xf32>
      %64 = arith.addf %63, %61 : vector<64x16xf32>
      %c0_45 = arith.constant 0 : index
      %c0_46 = arith.constant 0 : index
      %65 = vector.load %arg15[%c0_45, %c0_46] : memref<64x16xf32, #tpu.memory_space<vmem>>, vector<64x16xf32>
      tpu.vector_store %arg15[%c0_45, %c0_46], %64 {strides = array<i32>} : memref<64x16xf32, #tpu.memory_space<vmem>>, vector<64x16xf32>,
    } else {
    }
    return
  }
  func.func @transform_0(%arg0: i32) -> (i32, i32) {
    %c0_i32 = arith.constant 0 : i32
    %c0_i32_0 = arith.constant 0 : i32
    return %arg0, %c0_i32 : i32, i32
  }
  func.func @transform_1(%arg0: i32) -> (i32, i32) {
    %c0_i32 = arith.constant 0 : i32
    %c0_i32_0 = arith.constant 0 : i32
    %c0_i32_1 = arith.constant 0 : i32
    return %c0_i32, %c0_i32_0 : i32, i32
  }
  func.func @transform_2(%arg0: i32) -> (i32, i32) {
    %c0_i32 = arith.constant 0 : i32
    %c0_i32_0 = arith.constant 0 : i32
    %c0_i32_1 = arith.constant 0 : i32
    return %c0_i32, %c0_i32_0 : i32, i32
  }
  func.func @transform_3(%arg0: i32) -> (i32, i32) {
    %c0_i32 = arith.constant 0 : i32
    %c0_i32_0 = arith.constant 0 : i32
    %c0_i32_1 = arith.constant 0 : i32
    return %c0_i32, %c0_i32_0 : i32, i32
  }
  func.func @transform_4(%arg0: i32) -> (i32, i32) {
    %c0_i32 = arith.constant 0 : i32
    %c0_i32_0 = arith.constant 0 : i32
    %c0_i32_1 = arith.constant 0 : i32
    return %c0_i32, %c0_i32_0 : i32, i32
  }
  func.func @transform_5(%arg0: i32) -> (i32, i32) {
    %c0_i32 = arith.constant 0 : i32
    %c0_i32_0 = arith.constant 0 : i32
    %c0_i32_1 = arith.constant 0 : i32
    return %c0_i32, %c0_i32_0 : i32, i32
  }
  func.func @transform_6(%arg0: i32) -> (i32, i32) {
    %c0_i32 = arith.constant 0 : i32
    %c0_i32_0 = arith.constant 0 : i32
    return %arg0, %c0_i32 : i32, i32
  }
  func.func @transform_7(%arg0: i32) -> (i32, i32) {
    %c0_i32 = arith.constant 0 : i32
    %c0_i32_0 = arith.constant 0 : i32
    return %arg0, %c0_i32 : i32, i32
  }
  func.func @transform_8(%arg0: i32) -> (i32, i32) {
    %c0_i32 = arith.constant 0 : i32
    %c0_i32_0 = arith.constant 0 : i32
    return %arg0, %c0_i32 : i32, i32
  }
  func.func @transform_9(%arg0: i32) -> (i32, i32) {
    %c0_i32 = arith.constant 0 : i32
    %c0_i32_0 = arith.constant 0 : i32
    %c0_i32_1 = arith.constant 0 : i32
    return %c0_i32, %c0_i32_0 : i32, i32
  }
  func.func @transform_10(%arg0: i32) -> (i32, i32) {
    %c0_i32 = arith.constant 0 : i32
    %c0_i32_0 = arith.constant 0 : i32
    %c0_i32_1 = arith.constant 0 : i32
    return %c0_i32, %c0_i32_0 : i32, i32
  }
  func.func @transform_11(%arg0: i32) -> (i32, i32) {
    %c0_i32 = arith.constant 0 : i32
    %c0_i32_0 = arith.constant 0 : i32
    %c0_i32_1 = arith.constant 0 : i32
    return %c0_i32, %c0_i32_0 : i32, i32
  }
  func.func @transform_12(%arg0: i32) -> (i32, i32) {
    %c0_i32 = arith.constant 0 : i32
    %c0_i32_0 = arith.constant 0 : i32
    %c0_i32_1 = arith.constant 0 : i32
    return %c0_i32, %c0_i32_0 : i32, i32
  }
  func.func @transform_13(%arg0: i32) -> (i32, i32) {
    %c0_i32 = arith.constant 0 : i32
    %c0_i32_0 = arith.constant 0 : i32
    %c0_i32_1 = arith.constant 0 : i32
    return %c0_i32, %c0_i32_0 : i32, i32
  }
  func.func @transform_14(%arg0: i32) -> (i32, i32) {
    %c0_i32 = arith.constant 0 : i32
    %c0_i32_0 = arith.constant 0 : i32
    %c0_i32_1 = arith.constant 0 : i32
    return %c0_i32, %c0_i32_0 : i32, i32
  }
}

</mosaic_0001>

<llo_original>
// kernel: graph_convolution_forward.2
$region0: #{graph_convolution_forward.2}
  #allocation0 [shape = 'u32[]', space=smem, size = 0x4, offset = 0x4, fixed_abs, tag = 'smem constant byte address 0x4 - core index']
  #allocation1 [shape = 'u32[144,128]{1,0:T(1,128)}', space=vmem, size = 0x12000, scoped, tag = 'internal scratch']
  %s0 = inlined_call_operand.vmem [shape: bf16[64,32], index: 0, kind: input, shape index: {}]
  %s1 = inlined_call_operand.vmem [shape: bf16[64,8], index: 1, kind: input, shape index: {}]
  %s2 = inlined_call_operand.vmem [shape: f32[64,1], index: 2, kind: input, shape index: {}]
  %s3 = inlined_call_operand.vmem [shape: bf16[32,256], index: 3, kind: input, shape index: {}]
  %s4 = inlined_call_operand.vmem [shape: bf16[8,256], index: 4, kind: input, shape index: {}]
  %s5 = inlined_call_operand.vmem [shape: bf16[256,48], index: 5, kind: input, shape index: {}]
  %s6 = inlined_call_operand.vmem [shape: bf16[64,48], index: 6, kind: output, shape index: {}]
  %s7 = sld [smem:[#allocation0]]
  $region34: #{graph_convolution_forward.2} parent=0
    _
  %s9 = ssub.s32 1, %s7
  %s10 = scalar_select 0, %s9, %s7
  // Predicated region
  $region2: #{graph_convolution_forward.2} parent=0 // pred_check
    _
  $region3: #{graph_convolution_forward.2} parent=0 // pred_check_branch
    %12 = sbr.rel (0) target = $region5
  $region4: #{graph_convolution_forward.2} parent=0 // pred_region
    _
  $region5: #{graph_convolution_forward.2} parent=0 // pred_fallthru
    _
  // Predicated region
  $region6: #{graph_convolution_forward.2} parent=0 // pred_check
    _
  $region7: #{graph_convolution_forward.2} parent=0 // pred_check_branch
    %14 = sbr.rel (0) target = $region9
  $region8: #{graph_convolution_forward.2} parent=0 // pred_region
    _
  $region9: #{graph_convolution_forward.2} parent=0 // pred_fallthru
    _
  // Predicated region
  $region10: #{graph_convolution_forward.2} parent=0 // pred_check
    _
  $region11: #{graph_convolution_forward.2} parent=0 // pred_check_branch
    %16 = sbr.rel (0) target = $region13
  $region12: #{graph_convolution_forward.2} parent=0 // pred_region
    _
  $region13: #{graph_convolution_forward.2} parent=0 // pred_fallthru
    _
  // Predicated region
  $region14: #{graph_convolution_forward.2} parent=0 // pred_check
    _
  $region15: #{graph_convolution_forward.2} parent=0 // pred_check_branch
    %18 = sbr.rel (0) target = $region17
  $region16: #{graph_convolution_forward.2} parent=0 // pred_region
    _
  $region17: #{graph_convolution_forward.2} parent=0 // pred_fallthru
    _
  // Predicated region
  $region18: #{graph_convolution_forward.2} parent=0 // pred_check
    _
  $region19: #{graph_convolution_forward.2} parent=0 // pred_check_branch
    %20 = sbr.rel (0) target = $region21
  $region20: #{graph_convolution_forward.2} parent=0 // pred_region
    _
  $region21: #{graph_convolution_forward.2} parent=0 // pred_fallthru
    _
  // Predicated region
  $region22: #{graph_convolution_forward.2} parent=0 // pred_check
    _
  $region23: #{graph_convolution_forward.2} parent=0 // pred_check_branch
    %22 = sbr.rel (0) target = $region25
  $region24: #{graph_convolution_forward.2} parent=0 // pred_region
    _
  $region25: #{graph_convolution_forward.2} parent=0 // pred_fallthru
    _
  %v24 = vld [vmem:[%s0] sm:$0xf]
  %v25 = vld [vmem:[%s0 + $0x4] sm:$0xf]
  %v26 = vld [vmem:[%s0 + $0x8] sm:$0xf]
  %v27 = vld [vmem:[%s0 + $0xc] sm:$0xf]
  %v28 = vld [vmem:[%s0 + $0x10] sm:$0xf]
  %v29 = vld [vmem:[%s0 + $0x14] sm:$0xf]
  %v30 = vld [vmem:[%s0 + $0x18] sm:$0xf]
  %v31 = vld [vmem:[%s0 + $0x1c] sm:$0xf]
  %v32 = vld [vmem:[%s3] sm:$0xff]
  %v33 = vld [vmem:[%s3 + $0x8] sm:$0xff]
  %v34 = vld [vmem:[%s3 + $0x10] sm:$0xff]
  %v35 = vld [vmem:[%s3 + $0x18] sm:$0xff]
  %v44 = vunpack.c.l.b16 %v24
  %v45 = vunpack.c.l.b16 %v25
  %v46 = vunpack.c.l.b16 %v26
  %v47 = vunpack.c.l.b16 %v27
  %v48 = vunpack.c.l.b16 %v28
  %v49 = vunpack.c.l.b16 %v29
  %v50 = vunpack.c.l.b16 %v30
  %v51 = vunpack.c.l.b16 %v31
  %v52 = vpack.c.b16 %v45, %v44
  %v53 = vpack.c.b16 %v47, %v46
  %v54 = vpack.c.b16 %v49, %v48
  %v55 = vpack.c.b16 %v51, %v50
  %v60 = vunpack.c.l.b16 %v32
  %v61 = vunpack.c.h.b16 %v32
  %v62 = vunpack.c.l.b16 %v33
  %v63 = vunpack.c.h.b16 %v33
  %v64 = vunpack.c.l.b16 %v34
  %v65 = vunpack.c.h.b16 %v34
  %v66 = vunpack.c.l.b16 %v35
  %v67 = vunpack.c.h.b16 %v35
  %v68 = vpack.c.b16 %v62, %v60
  %v69 = vpack.c.b16 %v63, %v61
  %v70 = vpack.c.b16 %v66, %v64
  %v71 = vpack.c.b16 %v67, %v65
  %vm76 = vcmask 261120
  %v78 = vsel %vm76, %v52, 0
  %v81 = vsel %vm76, %v53, 0
  %v84 = vsel %vm76, %v54, 0
  %v87 = vsel %vm76, %v55, 0
  %89 = vmatprep.subr.bf16.mxu0 %v69
  %90 = vmatpush1.bf16.msra.mxu0 %v68
  %91 = vmatprep.subr.bf16.mxu0 %v71
  %92 = vmatpush1.bf16.msra.mxu0 %v70
  %93 = vmatprep.subr.bf16.mxu0 0
  %94 = vmatpush1.bf16.msra.mxu0 0
  %95 = vmatprep.subr.bf16.mxu0 0
  %96 = vmatpush1.bf16.msra.mxu0 0
  %97 = vmatprep.subr.bf16.mxu0 0
  %98 = vmatpush1.bf16.msra.mxu0 0
  %99 = vmatprep.subr.bf16.mxu0 0
  %100 = vmatpush1.bf16.msra.mxu0 0
  %101 = vmatprep.subr.bf16.mxu0 0
  %102 = vmatpush1.bf16.msra.mxu0 0
  %103 = vmatprep.subr.bf16.mxu0 0
  %104 = vmatpush1.bf16.msra.mxu0 0
  %105 = vmatprep.subr.bf16.mxu0 0
  %106 = vmatpush1.bf16.msra.mxu0 0
  %107 = vmatprep.subr.bf16.mxu0 0
  %108 = vmatpush1.bf16.msra.mxu0 0
  %109 = vmatprep.subr.bf16.mxu0 0
  %110 = vmatpush1.bf16.msra.mxu0 0
  %111 = vmatprep.subr.bf16.mxu0 0
  %112 = vmatpush1.bf16.msra.mxu0 0
  %113 = vmatprep.subr.bf16.mxu0 0
  %114 = vmatpush1.bf16.msra.mxu0 0
  %115 = vmatprep.subr.bf16.mxu0 0
  %116 = vmatpush1.bf16.msra.mxu0 0
  %117 = vmatprep.subr.bf16.mxu0 0
  %118 = vmatpush1.bf16.msra.mxu0 0
  %119 = vmatprep.subr.bf16.mxu0 0
  %120 = vmatpush1.bf16.msra.mxu0 0
  %121 = vmatprep.mubr.bf16.mxu0 0
  %122 = vmatmul.mubr.bf16.gmra.mrb[0].mxu0 %v78
  %v123 = vpop.f32.mrb[0].mxu0
  %v124 = vadd.f32 0.0, %v123
  %v125 = vpop.f32.mrb[0].mxu0
  %v126 = vadd.f32 0.0, %v125
  %v127 = vpop.f32.mrb[0].mxu0
  %v128 = vadd.f32 0.0, %v127
  %v129 = vpop.f32.mrb[0].mxu0
  %v130 = vadd.f32 0.0, %v129
  %131 = vmatprep.mubr.bf16.mxu0 0
  %132 = vmatmul.mubr.bf16.gmra.mrb[0].mxu0 %v81
  %v133 = vpop.f32.mrb[0].mxu0
  %v134 = vadd.f32 0.0, %v133
  %v135 = vpop.f32.mrb[0].mxu0
  %v136 = vadd.f32 0.0, %v135
  %v137 = vpop.f32.mrb[0].mxu0
  %v138 = vadd.f32 0.0, %v137
  %v139 = vpop.f32.mrb[0].mxu0
  %v140 = vadd.f32 0.0, %v139
  %141 = vmatprep.mubr.bf16.mxu0 0
  %142 = vmatmul.mubr.bf16.gmra.mrb[0].mxu0 %v84
  %v143 = vpop.f32.mrb[0].mxu0
  %v144 = vadd.f32 0.0, %v143
  %v145 = vpop.f32.mrb[0].mxu0
  %v146 = vadd.f32 0.0, %v145
  %v147 = vpop.f32.mrb[0].mxu0
  %v148 = vadd.f32 0.0, %v147
  %v149 = vpop.f32.mrb[0].mxu0
  %v150 = vadd.f32 0.0, %v149
  %151 = vmatprep.mubr.bf16.mxu0 0
  %152 = vmatmul.mubr.bf16.gmra.mrb[0].mxu0 %v87
  %v153 = vpop.f32.mrb[0].mxu0
  %v154 = vadd.f32 0.0, %v153
  %v155 = vpop.f32.mrb[0].mxu0
  %v156 = vadd.f32 0.0, %v155
  %v157 = vpop.f32.mrb[0].mxu0
  %v158 = vadd.f32 0.0, %v157
  %v159 = vpop.f32.mrb[0].mxu0
  %v160 = vadd.f32 0.0, %v159
  %161 = vdwg.mxu0
  %v162 = vld [vmem:[%s1] sm:$0xf]
  %v163 = vld [vmem:[%s1 + $0x4] sm:$0xf]
  %v164 = vld [vmem:[%s1 + $0x8] sm:$0xf]
  %v165 = vld [vmem:[%s1 + $0xc] sm:$0xf]
  %v166 = vld [vmem:[%s1 + $0x10] sm:$0xf]
  %v167 = vld [vmem:[%s1 + $0x14] sm:$0xf]
  %v168 = vld [vmem:[%s1 + $0x18] sm:$0xf]
  %v169 = vld [vmem:[%s1 + $0x1c] sm:$0xf]
  %v170 = vld [vmem:[%s4] sm:$0xff]
  %v179 = vunpack.c.l.b16 %v162
  %v180 = vunpack.c.l.b16 %v163
  %v181 = vunpack.c.l.b16 %v164
  %v182 = vunpack.c.l.b16 %v165
  %v183 = vunpack.c.l.b16 %v166
  %v184 = vunpack.c.l.b16 %v167
  %v185 = vunpack.c.l.b16 %v168
  %v186 = vunpack.c.l.b16 %v169
  %v187 = vpack.c.b16 %v180, %v179
  %v188 = vpack.c.b16 %v182, %v181
  %v189 = vpack.c.b16 %v184, %v183
  %v190 = vpack.c.b16 %v186, %v185
  %v192 = vunpack.c.l.b16 %v170
  %v193 = vunpack.c.h.b16 %v170
  %v194 = vpack.c.b16 %v192, %v192
  %v195 = vpack.c.b16 %v193, %v193
  %vm196 = vcmask 64512
  %v198 = vsel %vm196, %v187, 0
  %v201 = vsel %vm196, %v188, 0
  %v204 = vsel %vm196, %v189, 0
  %v207 = vsel %vm196, %v190, 0
  %vm209 = vcmask 1043456
  %v211 = vsel %vm209, %v194, 0
  %v214 = vsel %vm209, %v195, 0
  %216 = vmatprep.subr.bf16.mxu0 %v214
  %217 = vmatpush1.bf16.msra.mxu0 %v211
  %218 = vmatprep.subr.bf16.mxu0 0
  %219 = vmatpush1.bf16.msra.mxu0 0
  %220 = vmatprep.subr.bf16.mxu0 0
  %221 = vmatpush1.bf16.msra.mxu0 0
  %222 = vmatprep.subr.bf16.mxu0 0
  %223 = vmatpush1.bf16.msra.mxu0 0
  %224 = vmatprep.subr.bf16.mxu0 0
  %225 = vmatpush1.bf16.msra.mxu0 0
  %226 = vmatprep.subr.bf16.mxu0 0
  %227 = vmatpush1.bf16.msra.mxu0 0
  %228 = vmatprep.subr.bf16.mxu0 0
  %229 = vmatpush1.bf16.msra.mxu0 0
  %230 = vmatprep.subr.bf16.mxu0 0
  %231 = vmatpush1.bf16.msra.mxu0 0
  %232 = vmatprep.subr.bf16.mxu0 0
  %233 = vmatpush1.bf16.msra.mxu0 0
  %234 = vmatprep.subr.bf16.mxu0 0
  %235 = vmatpush1.bf16.msra.mxu0 0
  %236 = vmatprep.subr.bf16.mxu0 0
  %237 = vmatpush1.bf16.msra.mxu0 0
  %238 = vmatprep.subr.bf16.mxu0 0
  %239 = vmatpush1.bf16.msra.mxu0 0
  %240 = vmatprep.subr.bf16.mxu0 0
  %241 = vmatpush1.bf16.msra.mxu0 0
  %242 = vmatprep.subr.bf16.mxu0 0
  %243 = vmatpush1.bf16.msra.mxu0 0
  %244 = vmatprep.subr.bf16.mxu0 0
  %245 = vmatpush1.bf16.msra.mxu0 0
  %246 = vmatprep.subr.bf16.mxu0 0
  %247 = vmatpush1.bf16.msra.mxu0 0
  %248 = vmatprep.mubr.bf16.mxu0 0
  %249 = vmatmul.mubr.bf16.gmra.mrb[0].mxu0 %v198
  %v250 = vpop.f32.mrb[0].mxu0
  %v251 = vadd.f32 0.0, %v250
  %v252 = vpop.f32.mrb[0].mxu0
  %v253 = vadd.f32 0.0, %v252
  %v254 = vpop.f32.mrb[0].mxu0
  %v255 = vadd.f32 0.0, %v254
  %v256 = vpop.f32.mrb[0].mxu0
  %v257 = vadd.f32 0.0, %v256
  %258 = vmatprep.mubr.bf16.mxu0 0
  %259 = vmatmul.mubr.bf16.gmra.mrb[0].mxu0 %v201
  %v260 = vpop.f32.mrb[0].mxu0
  %v261 = vadd.f32 0.0, %v260
  %v262 = vpop.f32.mrb[0].mxu0
  %v263 = vadd.f32 0.0, %v262
  %v264 = vpop.f32.mrb[0].mxu0
  %v265 = vadd.f32 0.0, %v264
  %v266 = vpop.f32.mrb[0].mxu0
  %v267 = vadd.f32 0.0, %v266
  %268 = vmatprep.mubr.bf16.mxu0 0
  %269 = vmatmul.mubr.bf16.gmra.mrb[0].mxu0 %v204
  %v270 = vpop.f32.mrb[0].mxu0
  %v271 = vadd.f32 0.0, %v270
  %v272 = vpop.f32.mrb[0].mxu0
  %v273 = vadd.f32 0.0, %v272
  %v274 = vpop.f32.mrb[0].mxu0
  %v275 = vadd.f32 0.0, %v274
  %v276 = vpop.f32.mrb[0].mxu0
  %v277 = vadd.f32 0.0, %v276
  %278 = vmatprep.mubr.bf16.mxu0 0
  %279 = vmatmul.mubr.bf16.gmra.mrb[0].mxu0 %v207
  %v280 = vpop.f32.mrb[0].mxu0
  %v281 = vadd.f32 0.0, %v280
  %v282 = vpop.f32.mrb[0].mxu0
  %v283 = vadd.f32 0.0, %v282
  %v284 = vpop.f32.mrb[0].mxu0
  %v285 = vadd.f32 0.0, %v284
  %v286 = vpop.f32.mrb[0].mxu0
  %v287 = vadd.f32 0.0, %v286
  %288 = vdwg.mxu0
  %v289 = vmul.f32 %v124, %v251
  %v290 = vmul.f32 %v126, %v253
  %v291 = vmul.f32 %v128, %v255
  %v292 = vmul.f32 %v130, %v257
  %v293 = vmul.f32 %v134, %v261
  %v294 = vmul.f32 %v136, %v263
  %v295 = vmul.f32 %v138, %v265
  %v296 = vmul.f32 %v140, %v267
  %v297 = vmul.f32 %v144, %v271
  %v298 = vmul.f32 %v146, %v273
  %v299 = vmul.f32 %v148, %v275
  %v300 = vmul.f32 %v150, %v277
  %v301 = vmul.f32 %v154, %v281
  %v302 = vmul.f32 %v156, %v283
  %v303 = vmul.f32 %v158, %v285
  %v304 = vmul.f32 %v160, %v287
  %v305 = vpack.c.bf16 %v291, %v289
  %v306 = vpack.c.bf16 %v292, %v290
  %v307 = vpack.c.bf16 %v295, %v293
  %v308 = vpack.c.bf16 %v296, %v294
  %v309 = vpack.c.bf16 %v299, %v297
  %v310 = vpack.c.bf16 %v300, %v298
  %v311 = vpack.c.bf16 %v303, %v301
  %v312 = vpack.c.bf16 %v304, %v302
  %v313 = vld [vmem:[%s5] sm:$0xf]
  %v314 = vld [vmem:[%s5 + $0x4] sm:$0xf]
  %v315 = vld [vmem:[%s5 + $0x8] sm:$0xf]
  %v316 = vld [vmem:[%s5 + $0xc] sm:$0xf]
  %v317 = vld [vmem:[%s5 + $0x10] sm:$0xf]
  %v318 = vld [vmem:[%s5 + $0x14] sm:$0xf]
  %v319 = vld [vmem:[%s5 + $0x18] sm:$0xf]
  %v320 = vld [vmem:[%s5 + $0x1c] sm:$0xf]
  %v321 = vld [vmem:[%s5 + $0x20] sm:$0xf]
  %v322 = vld [vmem:[%s5 + $0x24] sm:$0xf]
  %v323 = vld [vmem:[%s5 + $0x28] sm:$0xf]
  %v324 = vld [vmem:[%s5 + $0x2c] sm:$0xf]
  %v325 = vld [vmem:[%s5 + $0x30] sm:$0xf]
  %v326 = vld [vmem:[%s5 + $0x34] sm:$0xf]
  %v327 = vld [vmem:[%s5 + $0x38] sm:$0xf]
  %v328 = vld [vmem:[%s5 + $0x3c] sm:$0xf]
  %v329 = vld [vmem:[%s5 + $0x40] sm:$0xf]
  %v330 = vld [vmem:[%s5 + $0x44] sm:$0xf]
  %v331 = vld [vmem:[%s5 + $0x48] sm:$0xf]
  %v332 = vld [vmem:[%s5 + $0x4c] sm:$0xf]
  %v333 = vld [vmem:[%s5 + $0x50] sm:$0xf]
  %v334 = vld [vmem:[%s5 + $0x54] sm:$0xf]
  %v335 = vld [vmem:[%s5 + $0x58] sm:$0xf]
  %v336 = vld [vmem:[%s5 + $0x5c] sm:$0xf]
  %v337 = vld [vmem:[%s5 + $0x60] sm:$0xf]
  %v338 = vld [vmem:[%s5 + $0x64] sm:$0xf]
  %v339 = vld [vmem:[%s5 + $0x68] sm:$0xf]
  %v340 = vld [vmem:[%s5 + $0x6c] sm:$0xf]
  %v341 = vld [vmem:[%s5 + $0x70] sm:$0xf]
  %v342 = vld [vmem:[%s5 + $0x74] sm:$0xf]
  %v343 = vld [vmem:[%s5 + $0x78] sm:$0xf]
  %v344 = vld [vmem:[%s5 + $0x7c] sm:$0xf]
  %v377 = vunpack.c.l.b16 %v313
  %v378 = vunpack.c.l.b16 %v314
  %v379 = vunpack.c.l.b16 %v315
  %v380 = vunpack.c.l.b16 %v316
  %v381 = vunpack.c.l.b16 %v317
  %v382 = vunpack.c.l.b16 %v318
  %v383 = vunpack.c.l.b16 %v319
  %v384 = vunpack.c.l.b16 %v320
  %v385 = vunpack.c.l.b16 %v321
  %v386 = vunpack.c.l.b16 %v322
  %v387 = vunpack.c.l.b16 %v323
  %v388 = vunpack.c.l.b16 %v324
  %v389 = vunpack.c.l.b16 %v325
  %v390 = vunpack.c.l.b16 %v326
  %v391 = vunpack.c.l.b16 %v327
  %v392 = vunpack.c.l.b16 %v328
  %v393 = vunpack.c.l.b16 %v329
  %v394 = vunpack.c.l.b16 %v330
  %v395 = vunpack.c.l.b16 %v331
  %v396 = vunpack.c.l.b16 %v332
  %v397 = vunpack.c.l.b16 %v333
  %v398 = vunpack.c.l.b16 %v334
  %v399 = vunpack.c.l.b16 %v335
  %v400 = vunpack.c.l.b16 %v336
  %v401 = vunpack.c.l.b16 %v337
  %v402 = vunpack.c.l.b16 %v338
  %v403 = vunpack.c.l.b16 %v339
  %v404 = vunpack.c.l.b16 %v340
  %v405 = vunpack.c.l.b16 %v341
  %v406 = vunpack.c.l.b16 %v342
  %v407 = vunpack.c.l.b16 %v343
  %v408 = vunpack.c.l.b16 %v344
  %v409 = vpack.c.b16 %v378, %v377
  %v410 = vpack.c.b16 %v380, %v379
  %v411 = vpack.c.b16 %v382, %v381
  %v412 = vpack.c.b16 %v384, %v383
  %v413 = vpack.c.b16 %v386, %v385
  %v414 = vpack.c.b16 %v388, %v387
  %v415 = vpack.c.b16 %v390, %v389
  %v416 = vpack.c.b16 %v392, %v391
  %v417 = vpack.c.b16 %v394, %v393
  %v418 = vpack.c.b16 %v396, %v395
  %v419 = vpack.c.b16 %v398, %v397
  %v420 = vpack.c.b16 %v400, %v399
  %v421 = vpack.c.b16 %v402, %v401
  %v422 = vpack.c.b16 %v404, %v403
  %v423 = vpack.c.b16 %v406, %v405
  %v424 = vpack.c.b16 %v408, %v407
  %441 = vmatprep.subr.bf16.mxu0 0
  %442 = vmatpush1.bf16.msra.mxu0 %v409
  %443 = vmatprep.subr.bf16.mxu0 0
  %444 = vmatpush1.bf16.msra.mxu0 %v410
  %445 = vmatprep.subr.bf16.mxu0 0
  %446 = vmatpush1.bf16.msra.mxu0 %v411
  %447 = vmatprep.subr.bf16.mxu0 0
  %448 = vmatpush1.bf16.msra.mxu0 %v412
  %449 = vmatprep.subr.bf16.mxu0 0
  %450 = vmatpush1.bf16.msra.mxu0 %v413
  %451 = vmatprep.subr.bf16.mxu0 0
  %452 = vmatpush1.bf16.msra.mxu0 %v414
  %453 = vmatprep.subr.bf16.mxu0 0
  %454 = vmatpush1.bf16.msra.mxu0 %v415
  %455 = vmatprep.subr.bf16.mxu0 0
  %456 = vmatpush1.bf16.msra.mxu0 %v416
  %457 = vmatprep.subr.bf16.mxu0 0
  %458 = vmatpush1.bf16.msra.mxu0 %v417
  %459 = vmatprep.subr.bf16.mxu0 0
  %460 = vmatpush1.bf16.msra.mxu0 %v418
  %461 = vmatprep.subr.bf16.mxu0 0
  %462 = vmatpush1.bf16.msra.mxu0 %v419
  %463 = vmatprep.subr.bf16.mxu0 0
  %464 = vmatpush1.bf16.msra.mxu0 %v420
  %465 = vmatprep.subr.bf16.mxu0 0
  %466 = vmatpush1.bf16.msra.mxu0 %v421
  %467 = vmatprep.subr.bf16.mxu0 0
  %468 = vmatpush1.bf16.msra.mxu0 %v422
  %469 = vmatprep.subr.bf16.mxu0 0
  %470 = vmatpush1.bf16.msra.mxu0 %v423
  %471 = vmatprep.subr.bf16.mxu0 0
  %472 = vmatpush1.bf16.msra.mxu0 %v424
  %473 = vmatprep.mubr.bf16.mxu0 %v306
  %474 = vmatmul.mubr.bf16.gmra.mrb[0].mxu0 %v305
  %v475 = vpop.f32.mrb[0].mxu0
  %v476 = vadd.f32 0.0, %v475
  %v477 = vpop.f32.mrb[0].mxu0
  %v478 = vpop.f32.mrb[0].mxu0
  %v479 = vadd.f32 0.0, %v478
  %v480 = vpop.f32.mrb[0].mxu0
  %481 = vmatprep.mubr.bf16.mxu0 %v308
  %482 = vmatmul.mubr.bf16.gmra.mrb[0].mxu0 %v307
  %v483 = vpop.f32.mrb[0].mxu0
  %v484 = vadd.f32 0.0, %v483
  %v485 = vpop.f32.mrb[0].mxu0
  %v486 = vpop.f32.mrb[0].mxu0
  %v487 = vadd.f32 0.0, %v486
  %v488 = vpop.f32.mrb[0].mxu0
  %489 = vmatprep.mubr.bf16.mxu0 %v310
  %490 = vmatmul.mubr.bf16.gmra.mrb[0].mxu0 %v309
  %v491 = vpop.f32.mrb[0].mxu0
  %v492 = vadd.f32 0.0, %v491
  %v493 = vpop.f32.mrb[0].mxu0
  %v494 = vpop.f32.mrb[0].mxu0
  %v495 = vadd.f32 0.0, %v494
  %v496 = vpop.f32.mrb[0].mxu0
  %497 = vmatprep.mubr.bf16.mxu0 %v312
  %498 = vmatmul.mubr.bf16.gmra.mrb[0].mxu0 %v311
  %v499 = vpop.f32.mrb[0].mxu0
  %v500 = vadd.f32 0.0, %v499
  %v501 = vpop.f32.mrb[0].mxu0
  %v502 = vpop.f32.mrb[0].mxu0
  %v503 = vadd.f32 0.0, %v502
  %v504 = vpop.f32.mrb[0].mxu0
  %505 = vdwg.mxu0
  %v506 = vld [vmem:[%s2] sm:$0xff]
  %v507 = vld [vmem:[%s2 + $0x8] sm:$0xff]
  %v508 = vld [vmem:[%s2 + $0x10] sm:$0xff]
  %v509 = vld [vmem:[%s2 + $0x18] sm:$0xff]
  %v510 = vld [vmem:[%s2 + $0x20] sm:$0xff]
  %v511 = vld [vmem:[%s2 + $0x28] sm:$0xff]
  %v512 = vld [vmem:[%s2 + $0x30] sm:$0xff]
  %v513 = vld [vmem:[%s2 + $0x38] sm:$0xff]
  %v514 = vrsqrt.pop %v506
  %v515 = vrsqrt.pop %v507
  %v516 = vrsqrt.pop %v508
  %v517 = vrsqrt.pop %v509
  %v518 = vrsqrt.pop %v510
  %v519 = vrsqrt.pop %v511
  %v520 = vrsqrt.pop %v512
  %v521 = vrsqrt.pop %v513
  %v522 = vlaneseq
  %v523 = vand.u32 %v522, 127
  %vm524 = vcmp.lt.s32.totalorder %v523, 32
  %526 = vset.pattern.permute.xlu0 0
  %527 = vperm.xlu0 %526, %v514
  %v528 = vpop.permute.xlu0 %527
  %531 = vset.pattern.permute.xlu0 0
  %532 = vperm.xlu0 %531, %v515
  %v533 = vpop.permute.xlu0 %532
  %536 = vset.pattern.permute.xlu0 0
  %537 = vperm.xlu0 %536, %v516
  %v538 = vpop.permute.xlu0 %537
  %541 = vset.pattern.permute.xlu0 0
  %542 = vperm.xlu0 %541, %v517
  %v543 = vpop.permute.xlu0 %542
  %546 = vset.pattern.permute.xlu0 0
  %547 = vperm.xlu0 %546, %v518
  %v548 = vpop.permute.xlu0 %547
  %551 = vset.pattern.permute.xlu0 0
  %552 = vperm.xlu0 %551, %v519
  %v553 = vpop.permute.xlu0 %552
  %556 = vset.pattern.permute.xlu0 0
  %557 = vperm.xlu0 %556, %v520
  %v558 = vpop.permute.xlu0 %557
  %561 = vset.pattern.permute.xlu0 0
  %562 = vperm.xlu0 %561, %v521
  %v563 = vpop.permute.xlu0 %562
  %v565 = vmul.f32 %v476, %v528
  %v566 = vmul.f32 %v479, %v533
  %v567 = vmul.f32 %v484, %v538
  %v568 = vmul.f32 %v487, %v543
  %v569 = vmul.f32 %v492, %v548
  %v570 = vmul.f32 %v495, %v553
  %v571 = vmul.f32 %v500, %v558
  %v572 = vmul.f32 %v503, %v563
  %v573 = vsel %vm524, %v565, %v476
  %v574 = vsel %vm524, %v566, %v479
  %v575 = vsel %vm524, %v567, %v484
  %v576 = vsel %vm524, %v568, %v487
  %v577 = vsel %vm524, %v569, %v492
  %v578 = vsel %vm524, %v570, %v495
  %v579 = vsel %vm524, %v571, %v500
  %v580 = vsel %vm524, %v572, %v503
  %v581 = vpack.c.bf16 %v574, %v573
  %v582 = vpack.c.bf16 %v576, %v575
  %v583 = vpack.c.bf16 %v578, %v577
  %v584 = vpack.c.bf16 %v580, %v579
  %v589 = vunpack.c.l.b16 %v581
  %v590 = vunpack.c.h.b16 %v581
  %v591 = vunpack.c.l.b16 %v582
  %v592 = vunpack.c.h.b16 %v582
  %v593 = vunpack.c.l.b16 %v583
  %v594 = vunpack.c.h.b16 %v583
  %v595 = vunpack.c.l.b16 %v584
  %v596 = vunpack.c.h.b16 %v584
  %v597 = vpack.c.b16 %v589, %v589
  %v598 = vpack.c.b16 %v590, %v590
  %v599 = vpack.c.b16 %v591, %v591
  %v600 = vpack.c.b16 %v592, %v592
  %v601 = vpack.c.b16 %v593, %v593
  %v602 = vpack.c.b16 %v594, %v594
  %v603 = vpack.c.b16 %v595, %v595
  %v604 = vpack.c.b16 %v596, %v596
  %vm613 = vcmask 388096
  %614 = vst.msk [vmem:[%s6] sm:$0xf] %vm613, %v597
  %615 = vst.msk [vmem:[%s6 + $0x4] sm:$0xf] %vm613, %v598
  %616 = vst.msk [vmem:[%s6 + $0x8] sm:$0xf] %vm613, %v599
  %617 = vst.msk [vmem:[%s6 + $0xc] sm:$0xf] %vm613, %v600
  %618 = vst.msk [vmem:[%s6 + $0x10] sm:$0xf] %vm613, %v601
  %619 = vst.msk [vmem:[%s6 + $0x14] sm:$0xf] %vm613, %v602
  %620 = vst.msk [vmem:[%s6 + $0x18] sm:$0xf] %vm613, %v603
  %621 = vst.msk [vmem:[%s6 + $0x1c] sm:$0xf] %vm613, %v604
  // Predicated region
  $region26: #{graph_convolution_forward.2} parent=0 // pred_check
    _
  $region27: #{graph_convolution_forward.2} parent=0 // pred_check_branch
    %623 = sbr.rel (0) target = $region29
  $region28: #{graph_convolution_forward.2} parent=0 // pred_region
    _
  $region29: #{graph_convolution_forward.2} parent=0 // pred_fallthru
    _
  // Predicated region
  $region30: #{graph_convolution_forward.2} parent=0 // pred_check
    _
  $region31: #{graph_convolution_forward.2} parent=0 // pred_check_branch
    %625 = sbr.rel (0) target = $region33
  $region32: #{graph_convolution_forward.2} parent=0 // pred_region
    _
  $region33: #{graph_convolution_forward.2} parent=0 // pred_fallthru
    _

// kernel: graph_convolution_forward.3
$region0: #{graph_convolution_forward.3}
  #allocation0 [shape = 'u32[]', space=smem, size = 0x4, offset = 0x4, fixed_abs, tag = 'smem constant byte address 0x4 - core index']
  #allocation1 [shape = 'u32[144,128]{1,0:T(1,128)}', space=vmem, size = 0x12000, scoped, tag = 'internal scratch']
  #allocation2 [shape = 'f32[64,32]{1,0:T(8,128)}', space=vmem, size = 0x8000, scoped, tag = 'scratch operand']
  %s0 = inlined_call_operand.vmem [shape: bf16[256,10], index: 0, kind: input, shape index: {}]
  %s1 = inlined_call_operand.vmem [shape: bf16[10,16], index: 1, kind: input, shape index: {}]
  %s2 = inlined_call_operand.vmem [shape: bf16[16,128], index: 2, kind: input, shape index: {}]
  %s3 = inlined_call_operand.vmem [shape: bf16[8,128], index: 3, kind: input, shape index: {}]
  %s4 = inlined_call_operand.vmem [shape: bf16[128,32], index: 4, kind: input, shape index: {}]
  %s5 = inlined_call_operand.vmem [shape: bf16[64,48], index: 5, kind: input, shape index: {}]
  %s6 = inlined_call_operand.vmem [shape: s32[256,1], index: 6, kind: input, shape index: {}]
  %s7 = inlined_call_operand.vmem [shape: s32[256,1], index: 7, kind: input, shape index: {}]
  %s8 = inlined_call_operand.vmem [shape: bf16[256,8], index: 8, kind: input, shape index: {}]
  %s9 = inlined_call_operand.vmem [shape: bf16[64,8], index: 9, kind: input, shape index: {}]
  %s10 = inlined_call_operand.vmem [shape: f32[64,1], index: 10, kind: input, shape index: {}]
  %s11 = inlined_call_operand.vmem [shape: bf16[32,256], index: 11, kind: input, shape index: {}]
  %s12 = inlined_call_operand.vmem [shape: bf16[8,256], index: 12, kind: input, shape index: {}]
  %s13 = inlined_call_operand.vmem [shape: bf16[256,16], index: 13, kind: input, shape index: {}]
  %s14 = inlined_call_operand.vmem [shape: f32[64,16], index: 14, kind: output, shape index: {}]
  %s15 = sld [smem:[#allocation0]]
  $region74: #{graph_convolution_forward.3} parent=0
    _
  %s17 = ssub.s32 1, %s15
  %s18 = scalar_select 0, %s17, %s15
  // Predicated region
  $region2: #{graph_convolution_forward.3} parent=0 // pred_check
    _
  $region3: #{graph_convolution_forward.3} parent=0 // pred_check_branch
    %20 = sbr.rel (0) target = $region5
  $region4: #{graph_convolution_forward.3} parent=0 // pred_region
    _
  $region5: #{graph_convolution_forward.3} parent=0 // pred_fallthru
    _
  // Predicated region
  $region6: #{graph_convolution_forward.3} parent=0 // pred_check
    _
  $region7: #{graph_convolution_forward.3} parent=0 // pred_check_branch
    %22 = sbr.rel (0) target = $region9
  $region8: #{graph_convolution_forward.3} parent=0 // pred_region
    _
  $region9: #{graph_convolution_forward.3} parent=0 // pred_fallthru
    _
  // Predicated region
  $region10: #{graph_convolution_forward.3} parent=0 // pred_check
    _
  $region11: #{graph_convolution_forward.3} parent=0 // pred_check_branch
    %24 = sbr.rel (0) target = $region13
  $region12: #{graph_convolution_forward.3} parent=0 // pred_region
    _
  $region13: #{graph_convolution_forward.3} parent=0 // pred_fallthru
    _
  // Predicated region
  $region14: #{graph_convolution_forward.3} parent=0 // pred_check
    _
  $region15: #{graph_convolution_forward.3} parent=0 // pred_check_branch
    %26 = sbr.rel (0) target = $region17
  $region16: #{graph_convolution_forward.3} parent=0 // pred_region
    _
  $region17: #{graph_convolution_forward.3} parent=0 // pred_fallthru
    _
  // Predicated region
  $region18: #{graph_convolution_forward.3} parent=0 // pred_check
    _
  $region19: #{graph_convolution_forward.3} parent=0 // pred_check_branch
    %28 = sbr.rel (0) target = $region21
  $region20: #{graph_convolution_forward.3} parent=0 // pred_region
    _
  $region21: #{graph_convolution_forward.3} parent=0 // pred_fallthru
    _
  // Predicated region
  $region22: #{graph_convolution_forward.3} parent=0 // pred_check
    _
  $region23: #{graph_convolution_forward.3} parent=0 // pred_check_branch
    %30 = sbr.rel (0) target = $region25
  $region24: #{graph_convolution_forward.3} parent=0 // pred_region
    _
  $region25: #{graph_convolution_forward.3} parent=0 // pred_fallthru
    _
  // Predicated region
  $region26: #{graph_convolution_forward.3} parent=0 // pred_check
    _
  $region27: #{graph_convolution_forward.3} parent=0 // pred_check_branch
    %32 = sbr.rel (0) target = $region29
  $region28: #{graph_convolution_forward.3} parent=0 // pred_region
    _
  $region29: #{graph_convolution_forward.3} parent=0 // pred_fallthru
    _
  // Predicated region
  $region30: #{graph_convolution_forward.3} parent=0 // pred_check
    _
  $region31: #{graph_convolution_forward.3} parent=0 // pred_check_branch
    %34 = sbr.rel (0) target = $region33
  $region32: #{graph_convolution_forward.3} parent=0 // pred_region
    _
  $region33: #{graph_convolution_forward.3} parent=0 // pred_fallthru
    _
  // Predicated region
  $region34: #{graph_convolution_forward.3} parent=0 // pred_check
    _
  $region35: #{graph_convolution_forward.3} parent=0 // pred_check_branch
    %36 = sbr.rel (0) target = $region37
  $region36: #{graph_convolution_forward.3} parent=0 // pred_region
    _
  $region37: #{graph_convolution_forward.3} parent=0 // pred_fallthru
    _
  // Predicated region
  $region38: #{graph_convolution_forward.3} parent=0 // pred_check
    _
  $region39: #{graph_convolution_forward.3} parent=0 // pred_check_branch
    %38 = sbr.rel (0) target = $region41
  $region40: #{graph_convolution_forward.3} parent=0 // pred_region
    _
  $region41: #{graph_convolution_forward.3} parent=0 // pred_fallthru
    _
  // Predicated region
  $region42: #{graph_convolution_forward.3} parent=0 // pred_check
    _
  $region43: #{graph_convolution_forward.3} parent=0 // pred_check_branch
    %40 = sbr.rel (0) target = $region45
  $region44: #{graph_convolution_forward.3} parent=0 // pred_region
    _
  $region45: #{graph_convolution_forward.3} parent=0 // pred_fallthru
    _
  // Predicated region
  $region46: #{graph_convolution_forward.3} parent=0 // pred_check
    _
  $region47: #{graph_convolution_forward.3} parent=0 // pred_check_branch
    %42 = sbr.rel (0) target = $region49
  $region48: #{graph_convolution_forward.3} parent=0 // pred_region
    _
  $region49: #{graph_convolution_forward.3} parent=0 // pred_fallthru
    _
  // Predicated region
  $region50: #{graph_convolution_forward.3} parent=0 // pred_check
    _
  $region51: #{graph_convolution_forward.3} parent=0 // pred_check_branch
    %44 = sbr.rel (0) target = $region53
  $region52: #{graph_convolution_forward.3} parent=0 // pred_region
    _
  $region53: #{graph_convolution_forward.3} parent=0 // pred_fallthru
    _
  // Predicated region
  $region54: #{graph_convolution_forward.3} parent=0 // pred_check
    _
  $region55: #{graph_convolution_forward.3} parent=0 // pred_check_branch
    %46 = sbr.rel (0) target = $region57
  $region56: #{graph_convolution_forward.3} parent=0 // pred_region
    _
  $region57: #{graph_convolution_forward.3} parent=0 // pred_fallthru
    _
  %p48 = scmp.eq.s32.totalorder 0, 0
  // Predicated region
  $region58: #{graph_convolution_forward.3} parent=0 // pred_check
    %p49 = pneg %p48
  $region59: #{graph_convolution_forward.3} parent=0 // pred_check_branch
    %51 = sbr.rel (%p49) target = $region61
  $region60: #{graph_convolution_forward.3} parent=0 // pred_region
    %vm52 = vcmask 261120
    %53 = vst.msk [vmem:[#allocation2] sm:$0xff] %vm52, 0.0
    %54 = vst.msk [vmem:[#allocation2 + $0x8] sm:$0xff] %vm52, 0.0
    %55 = vst.msk [vmem:[#allocation2 + $0x10] sm:$0xff] %vm52, 0.0
    %56 = vst.msk [vmem:[#allocation2 + $0x18] sm:$0xff] %vm52, 0.0
    %57 = vst.msk [vmem:[#allocation2 + $0x20] sm:$0xff] %vm52, 0.0
    %58 = vst.msk [vmem:[#allocation2 + $0x28] sm:$0xff] %vm52, 0.0
    %59 = vst.msk [vmem:[#allocation2 + $0x30] sm:$0xff] %vm52, 0.0
    %60 = vst.msk [vmem:[#allocation2 + $0x38] sm:$0xff] %vm52, 0.0
  $region61: #{graph_convolution_forward.3} parent=0 // pred_fallthru
    _
  %v61 = vld [vmem:[%s0] sm:$0xf]
  %v62 = vld [vmem:[%s0 + $0x4] sm:$0xf]
  %v63 = vld [vmem:[%s0 + $0x8] sm:$0xf]
  %v64 = vld [vmem:[%s0 + $0xc] sm:$0xf]
  %v65 = vld [vmem:[%s0 + $0x10] sm:$0xf]
  %v66 = vld [vmem:[%s0 + $0x14] sm:$0xf]
  %v67 = vld [vmem:[%s0 + $0x18] sm:$0xf]
  %v68 = vld [vmem:[%s0 + $0x1c] sm:$0xf]
  %v69 = vld [vmem:[%s0 + $0x20] sm:$0xf]
  %v70 = vld [vmem:[%s0 + $0x24] sm:$0xf]
  %v71 = vld [vmem:[%s0 + $0x28] sm:$0xf]
  %v72 = vld [vmem:[%s0 + $0x2c] sm:$0xf]
  %v73 = vld [vmem:[%s0 + $0x30] sm:$0xf]
  %v74 = vld [vmem:[%s0 + $0x34] sm:$0xf]
  %v75 = vld [vmem:[%s0 + $0x38] sm:$0xf]
  %v76 = vld [vmem:[%s0 + $0x3c] sm:$0xf]
  %v77 = vld [vmem:[%s0 + $0x40] sm:$0xf]
  %v78 = vld [vmem:[%s0 + $0x44] sm:$0xf]
  %v79 = vld [vmem:[%s0 + $0x48] sm:$0xf]
  %v80 = vld [vmem:[%s0 + $0x4c] sm:$0xf]
  %v81 = vld [vmem:[%s0 + $0x50] sm:$0xf]
  %v82 = vld [vmem:[%s0 + $0x54] sm:$0xf]
  %v83 = vld [vmem:[%s0 + $0x58] sm:$0xf]
  %v84 = vld [vmem:[%s0 + $0x5c] sm:$0xf]
  %v85 = vld [vmem:[%s0 + $0x60] sm:$0xf]
  %v86 = vld [vmem:[%s0 + $0x64] sm:$0xf]
  %v87 = vld [vmem:[%s0 + $0x68] sm:$0xf]
  %v88 = vld [vmem:[%s0 + $0x6c] sm:$0xf]
  %v89 = vld [vmem:[%s0 + $0x70] sm:$0xf]
  %v90 = vld [vmem:[%s0 + $0x74] sm:$0xf]
  %v91 = vld [vmem:[%s0 + $0x78] sm:$0xf]
  %v92 = vld [vmem:[%s0 + $0x7c] sm:$0xf]
  %v93 = vld [vmem:[%s1] sm:$0xf]
  %v94 = vld [vmem:[%s1 + $0x4] sm:$0x1]
  %v127 = vunpack.c.l.b16 %v61
  %v128 = vunpack.c.l.b16 %v62
  %v129 = vunpack.c.l.b16 %v63
  %v130 = vunpack.c.l.b16 %v64
  %v131 = vunpack.c.l.b16 %v65
  %v132 = vunpack.c.l.b16 %v66
  %v133 = vunpack.c.l.b16 %v67
  %v134 = vunpack.c.l.b16 %v68
  %v135 = vunpack.c.l.b16 %v69
  %v136 = vunpack.c.l.b16 %v70
  %v137 = vunpack.c.l.b16 %v71
  %v138 = vunpack.c.l.b16 %v72
  %v139 = vunpack.c.l.b16 %v73
  %v140 = vunpack.c.l.b16 %v74
  %v141 = vunpack.c.l.b16 %v75
  %v142 = vunpack.c.l.b16 %v76
  %v143 = vunpack.c.l.b16 %v77
  %v144 = vunpack.c.l.b16 %v78
  %v145 = vunpack.c.l.b16 %v79
  %v146 = vunpack.c.l.b16 %v80
  %v147 = vunpack.c.l.b16 %v81
  %v148 = vunpack.c.l.b16 %v82
  %v149 = vunpack.c.l.b16 %v83
  %v150 = vunpack.c.l.b16 %v84
  %v151 = vunpack.c.l.b16 %v85
  %v152 = vunpack.c.l.b16 %v86
  %v153 = vunpack.c.l.b16 %v87
  %v154 = vunpack.c.l.b16 %v88
  %v155 = vunpack.c.l.b16 %v89
  %v156 = vunpack.c.l.b16 %v90
  %v157 = vunpack.c.l.b16 %v91
  %v158 = vunpack.c.l.b16 %v92
  %v159 = vpack.c.b16 %v128, %v127
  %v160 = vpack.c.b16 %v130, %v129
  %v161 = vpack.c.b16 %v132, %v131
  %v162 = vpack.c.b16 %v134, %v133
  %v163 = vpack.c.b16 %v136, %v135
  %v164 = vpack.c.b16 %v138, %v137
  %v165 = vpack.c.b16 %v140, %v139
  %v166 = vpack.c.b16 %v142, %v141
  %v167 = vpack.c.b16 %v144, %v143
  %v168 = vpack.c.b16 %v146, %v145
  %v169 = vpack.c.b16 %v148, %v147
  %v170 = vpack.c.b16 %v150, %v149
  %v171 = vpack.c.b16 %v152, %v151
  %v172 = vpack.c.b16 %v154, %v153
  %v173 = vpack.c.b16 %v156, %v155
  %v174 = vpack.c.b16 %v158, %v157
  %v177 = vunpack.c.l.b16 %v93
  %v178 = vunpack.c.l.b16 %v94
  %v179 = vpack.c.b16 %v178, %v177
  %vm180 = vcmask 80896
  %v182 = vsel %vm180, %v159, 0
  %v185 = vsel %vm180, %v160, 0
  %v188 = vsel %vm180, %v161, 0
  %v191 = vsel %vm180, %v162, 0
  %v194 = vsel %vm180, %v163, 0
  %v197 = vsel %vm180, %v164, 0
  %v200 = vsel %vm180, %v165, 0
  %v203 = vsel %vm180, %v166, 0
  %v206 = vsel %vm180, %v167, 0
  %v209 = vsel %vm180, %v168, 0
  %v212 = vsel %vm180, %v169, 0
  %v215 = vsel %vm180, %v170, 0
  %v218 = vsel %vm180, %v171, 0
  %v221 = vsel %vm180, %v172, 0
  %v224 = vsel %vm180, %v173, 0
  %v227 = vsel %vm180, %v174, 0
  %vm229 = vcmask 1044480
  %v231 = vsel %vm229, %v179, 0
  %233 = vmatprep.subr.bf16.mxu0 0
  %234 = vmatpush1.bf16.msra.mxu0 %v231
  %235 = vmatprep.subr.bf16.mxu0 0
  %236 = vmatpush1.bf16.msra.mxu0 0
  %237 = vmatprep.subr.bf16.mxu0 0
  %238 = vmatpush1.bf16.msra.mxu0 0
  %239 = vmatprep.subr.bf16.mxu0 0
  %240 = vmatpush1.bf16.msra.mxu0 0
  %241 = vmatprep.subr.bf16.mxu0 0
  %242 = vmatpush1.bf16.msra.mxu0 0
  %243 = vmatprep.subr.bf16.mxu0 0
  %244 = vmatpush1.bf16.msra.mxu0 0
  %245 = vmatprep.subr.bf16.mxu0 0
  %246 = vmatpush1.bf16.msra.mxu0 0
  %247 = vmatprep.subr.bf16.mxu0 0
  %248 = vmatpush1.bf16.msra.mxu0 0
  %249 = vmatprep.subr.bf16.mxu0 0
  %250 = vmatpush1.bf16.msra.mxu0 0
  %251 = vmatprep.subr.bf16.mxu0 0
  %252 = vmatpush1.bf16.msra.mxu0 0
  %253 = vmatprep.subr.bf16.mxu0 0
  %254 = vmatpush1.bf16.msra.mxu0 0
  %255 = vmatprep.subr.bf16.mxu0 0
  %256 = vmatpush1.bf16.msra.mxu0 0
  %257 = vmatprep.subr.bf16.mxu0 0
  %258 = vmatpush1.bf16.msra.mxu0 0
  %259 = vmatprep.subr.bf16.mxu0 0
  %260 = vmatpush1.bf16.msra.mxu0 0
  %261 = vmatprep.subr.bf16.mxu0 0
  %262 = vmatpush1.bf16.msra.mxu0 0
  %263 = vmatprep.subr.bf16.mxu0 0
  %264 = vmatpush1.bf16.msra.mxu0 0
  %265 = vmatprep.mubr.bf16.mxu0 0
  %266 = vmatmul.mubr.bf16.gmra.mrb[0].mxu0 %v182
  %v267 = vpop.f32.mrb[0].mxu0
  %v268 = vadd.f32 0.0, %v267
  %v269 = vpop.f32.mrb[0].mxu0
  %v270 = vpop.f32.mrb[0].mxu0
  %v271 = vadd.f32 0.0, %v270
  %v272 = vpop.f32.mrb[0].mxu0
  %273 = vmatprep.mubr.bf16.mxu0 0
  %274 = vmatmul.mubr.bf16.gmra.mrb[0].mxu0 %v185
  %v275 = vpop.f32.mrb[0].mxu0
  %v276 = vadd.f32 0.0, %v275
  %v277 = vpop.f32.mrb[0].mxu0
  %v278 = vpop.f32.mrb[0].mxu0
  %v279 = vadd.f32 0.0, %v278
  %v280 = vpop.f32.mrb[0].mxu0
  %281 = vmatprep.mubr.bf16.mxu0 0
  %282 = vmatmul.mubr.bf16.gmra.mrb[0].mxu0 %v188
  %v283 = vpop.f32.mrb[0].mxu0
  %v284 = vadd.f32 0.0, %v283
  %v285 = vpop.f32.mrb[0].mxu0
  %v286 = vpop.f32.mrb[0].mxu0
  %v287 = vadd.f32 0.0, %v286
  %v288 = vpop.f32.mrb[0].mxu0
  %289 = vmatprep.mubr.bf16.mxu0 0
  %290 = vmatmul.mubr.bf16.gmra.mrb[0].mxu0 %v191
  %v291 = vpop.f32.mrb[0].mxu0
  %v292 = vadd.f32 0.0, %v291
  %v293 = vpop.f32.mrb[0].mxu0
  %v294 = vpop.f32.mrb[0].mxu0
  %v295 = vadd.f32 0.0, %v294
  %v296 = vpop.f32.mrb[0].mxu0
  %297 = vmatprep.mubr.bf16.mxu0 0
  %298 = vmatmul.mubr.bf16.gmra.mrb[0].mxu0 %v194
  %v299 = vpop.f32.mrb[0].mxu0
  %v300 = vadd.f32 0.0, %v299
  %v301 = vpop.f32.mrb[0].mxu0
  %v302 = vpop.f32.mrb[0].mxu0
  %v303 = vadd.f32 0.0, %v302
  %v304 = vpop.f32.mrb[0].mxu0
  %305 = vmatprep.mubr.bf16.mxu0 0
  %306 = vmatmul.mubr.bf16.gmra.mrb[0].mxu0 %v197
  %v307 = vpop.f32.mrb[0].mxu0
  %v308 = vadd.f32 0.0, %v307
  %v309 = vpop.f32.mrb[0].mxu0
  %v310 = vpop.f32.mrb[0].mxu0
  %v311 = vadd.f32 0.0, %v310
  %v312 = vpop.f32.mrb[0].mxu0
  %313 = vmatprep.mubr.bf16.mxu0 0
  %314 = vmatmul.mubr.bf16.gmra.mrb[0].mxu0 %v200
  %v315 = vpop.f32.mrb[0].mxu0
  %v316 = vadd.f32 0.0, %v315
  %v317 = vpop.f32.mrb[0].mxu0
  %v318 = vpop.f32.mrb[0].mxu0
  %v319 = vadd.f32 0.0, %v318
  %v320 = vpop.f32.mrb[0].mxu0
  %321 = vmatprep.mubr.bf16.mxu0 0
  %322 = vmatmul.mubr.bf16.gmra.mrb[0].mxu0 %v203
  %v323 = vpop.f32.mrb[0].mxu0
  %v324 = vadd.f32 0.0, %v323
  %v325 = vpop.f32.mrb[0].mxu0
  %v326 = vpop.f32.mrb[0].mxu0
  %v327 = vadd.f32 0.0, %v326
  %v328 = vpop.f32.mrb[0].mxu0
  %329 = vmatprep.mubr.bf16.mxu0 0
  %330 = vmatmul.mubr.bf16.gmra.mrb[0].mxu0 %v206
  %v331 = vpop.f32.mrb[0].mxu0
  %v332 = vadd.f32 0.0, %v331
  %v333 = vpop.f32.mrb[0].mxu0
  %v334 = vpop.f32.mrb[0].mxu0
  %v335 = vadd.f32 0.0, %v334
  %v336 = vpop.f32.mrb[0].mxu0
  %337 = vmatprep.mubr.bf16.mxu0 0
  %338 = vmatmul.mubr.bf16.gmra.mrb[0].mxu0 %v209
  %v339 = vpop.f32.mrb[0].mxu0
  %v340 = vadd.f32 0.0, %v339
  %v341 = vpop.f32.mrb[0].mxu0
  %v342 = vpop.f32.mrb[0].mxu0
  %v343 = vadd.f32 0.0, %v342
  %v344 = vpop.f32.mrb[0].mxu0
  %345 = vmatprep.mubr.bf16.mxu0 0
  %346 = vmatmul.mubr.bf16.gmra.mrb[0].mxu0 %v212
  %v347 = vpop.f32.mrb[0].mxu0
  %v348 = vadd.f32 0.0, %v347
  %v349 = vpop.f32.mrb[0].mxu0
  %v350 = vpop.f32.mrb[0].mxu0
  %v351 = vadd.f32 0.0, %v350
  %v352 = vpop.f32.mrb[0].mxu0
  %353 = vmatprep.mubr.bf16.mxu0 0
  %354 = vmatmul.mubr.bf16.gmra.mrb[0].mxu0 %v215
  %v355 = vpop.f32.mrb[0].mxu0
  %v356 = vadd.f32 0.0, %v355
  %v357 = vpop.f32.mrb[0].mxu0
  %v358 = vpop.f32.mrb[0].mxu0
  %v359 = vadd.f32 0.0, %v358
  %v360 = vpop.f32.mrb[0].mxu0
  %361 = vmatprep.mubr.bf16.mxu0 0
  %362 = vmatmul.mubr.bf16.gmra.mrb[0].mxu0 %v218
  %v363 = vpop.f32.mrb[0].mxu0
  %v364 = vadd.f32 0.0, %v363
  %v365 = vpop.f32.mrb[0].mxu0
  %v366 = vpop.f32.mrb[0].mxu0
  %v367 = vadd.f32 0.0, %v366
  %v368 = vpop.f32.mrb[0].mxu0
  %369 = vmatprep.mubr.bf16.mxu0 0
  %370 = vmatmul.mubr.bf16.gmra.mrb[0].mxu0 %v221
  %v371 = vpop.f32.mrb[0].mxu0
  %v372 = vadd.f32 0.0, %v371
  %v373 = vpop.f32.mrb[0].mxu0
  %v374 = vpop.f32.mrb[0].mxu0
  %v375 = vadd.f32 0.0, %v374
  %v376 = vpop.f32.mrb[0].mxu0
  %377 = vmatprep.mubr.bf16.mxu0 0
  %378 = vmatmul.mubr.bf16.gmra.mrb[0].mxu0 %v224
  %v379 = vpop.f32.mrb[0].mxu0
  %v380 = vadd.f32 0.0, %v379
  %v381 = vpop.f32.mrb[0].mxu0
  %v382 = vpop.f32.mrb[0].mxu0
  %v383 = vadd.f32 0.0, %v382
  %v384 = vpop.f32.mrb[0].mxu0
  %385 = vmatprep.mubr.bf16.mxu0 0
  %386 = vmatmul.mubr.bf16.gmra.mrb[0].mxu0 %v227
  %v387 = vpop.f32.mrb[0].mxu0
  %v388 = vadd.f32 0.0, %v387
  %v389 = vpop.f32.mrb[0].mxu0
  %v390 = vpop.f32.mrb[0].mxu0
  %v391 = vadd.f32 0.0, %v390
  %v392 = vpop.f32.mrb[0].mxu0
  %393 = vdwg.mxu0
  %v394 = vxor.u32 %v268, 2147483648
  %v395 = vxor.u32 %v271, 2147483648
  %v396 = vxor.u32 %v276, 2147483648
  %v397 = vxor.u32 %v279, 2147483648
  %v398 = vxor.u32 %v284, 2147483648
  %v399 = vxor.u32 %v287, 2147483648
  %v400 = vxor.u32 %v292, 2147483648
  %v401 = vxor.u32 %v295, 2147483648
  %v402 = vxor.u32 %v300, 2147483648
  %v403 = vxor.u32 %v303, 2147483648
  %v404 = vxor.u32 %v308, 2147483648
  %v405 = vxor.u32 %v311, 2147483648
  %v406 = vxor.u32 %v316, 2147483648
  %v407 = vxor.u32 %v319, 2147483648
  %v408 = vxor.u32 %v324, 2147483648
  %v409 = vxor.u32 %v327, 2147483648
  %v410 = vxor.u32 %v332, 2147483648
  %v411 = vxor.u32 %v335, 2147483648
  %v412 = vxor.u32 %v340, 2147483648
  %v413 = vxor.u32 %v343, 2147483648
  %v414 = vxor.u32 %v348, 2147483648
  %v415 = vxor.u32 %v351, 2147483648
  %v416 = vxor.u32 %v356, 2147483648
  %v417 = vxor.u32 %v359, 2147483648
  %v418 = vxor.u32 %v364, 2147483648
  %v419 = vxor.u32 %v367, 2147483648
  %v420 = vxor.u32 %v372, 2147483648
  %v421 = vxor.u32 %v375, 2147483648
  %v422 = vxor.u32 %v380, 2147483648
  %v423 = vxor.u32 %v383, 2147483648
  %v424 = vxor.u32 %v388, 2147483648
  %v425 = vxor.u32 %v391, 2147483648
  %v426 = vmul.f32 %v394, 1.442695
  %v427 = vpow.pop %v426
  %v428 = vmul.f32 %v395, 1.442695
  %v429 = vpow.pop %v428
  %v430 = vmul.f32 %v396, 1.442695
  %v431 = vpow.pop %v430
  %v432 = vmul.f32 %v397, 1.442695
  %v433 = vpow.pop %v432
  %v434 = vmul.f32 %v398, 1.442695
  %v435 = vpow.pop %v434
  %v436 = vmul.f32 %v399, 1.442695
  %v437 = vpow.pop %v436
  %v438 = vmul.f32 %v400, 1.442695
  %v439 = vpow.pop %v438
  %v440 = vmul.f32 %v401, 1.442695
  %v441 = vpow.pop %v440
  %v442 = vmul.f32 %v402, 1.442695
  %v443 = vpow.pop %v442
  %v444 = vmul.f32 %v403, 1.442695
  %v445 = vpow.pop %v444
  %v446 = vmul.f32 %v404, 1.442695
  %v447 = vpow.pop %v446
  %v448 = vmul.f32 %v405, 1.442695
  %v449 = vpow.pop %v448
  %v450 = vmul.f32 %v406, 1.442695
  %v451 = vpow.pop %v450
  %v452 = vmul.f32 %v407, 1.442695
  %v453 = vpow.pop %v452
  %v454 = vmul.f32 %v408, 1.442695
  %v455 = vpow.pop %v454
  %v456 = vmul.f32 %v409, 1.442695
  %v457 = vpow.pop %v456
  %v458 = vmul.f32 %v410, 1.442695
  %v459 = vpow.pop %v458
  %v460 = vmul.f32 %v411, 1.442695
  %v461 = vpow.pop %v460
  %v462 = vmul.f32 %v412, 1.442695
  %v463 = vpow.pop %v462
  %v464 = vmul.f32 %v413, 1.442695
  %v465 = vpow.pop %v464
  %v466 = vmul.f32 %v414, 1.442695
  %v467 = vpow.pop %v466
  %v468 = vmul.f32 %v415, 1.442695
  %v469 = vpow.pop %v468
  %v470 = vmul.f32 %v416, 1.442695
  %v471 = vpow.pop %v470
  %v472 = vmul.f32 %v417, 1.442695
  %v473 = vpow.pop %v472
  %v474 = vmul.f32 %v418, 1.442695
  %v475 = vpow.pop %v474
  %v476 = vmul.f32 %v419, 1.442695
  %v477 = vpow.pop %v476
  %v478 = vmul.f32 %v420, 1.442695
  %v479 = vpow.pop %v478
  %v480 = vmul.f32 %v421, 1.442695
  %v481 = vpow.pop %v480
  %v482 = vmul.f32 %v422, 1.442695
  %v483 = vpow.pop %v482
  %v484 = vmul.f32 %v423, 1.442695
  %v485 = vpow.pop %v484
  %v486 = vmul.f32 %v424, 1.442695
  %v487 = vpow.pop %v486
  %v488 = vmul.f32 %v425, 1.442695
  %v489 = vpow.pop %v488
  %v490 = vadd.f32 %v427, 1.0
  %v491 = vadd.f32 %v429, 1.0
  %v492 = vadd.f32 %v431, 1.0
  %v493 = vadd.f32 %v433, 1.0
  %v494 = vadd.f32 %v435, 1.0
  %v495 = vadd.f32 %v437, 1.0
  %v496 = vadd.f32 %v439, 1.0
  %v497 = vadd.f32 %v441, 1.0
  %v498 = vadd.f32 %v443, 1.0
  %v499 = vadd.f32 %v445, 1.0
  %v500 = vadd.f32 %v447, 1.0
  %v501 = vadd.f32 %v449, 1.0
  %v502 = vadd.f32 %v451, 1.0
  %v503 = vadd.f32 %v453, 1.0
  %v504 = vadd.f32 %v455, 1.0
  %v505 = vadd.f32 %v457, 1.0
  %v506 = vadd.f32 %v459, 1.0
  %v507 = vadd.f32 %v461, 1.0
  %v508 = vadd.f32 %v463, 1.0
  %v509 = vadd.f32 %v465, 1.0
  %v510 = vadd.f32 %v467, 1.0
  %v511 = vadd.f32 %v469, 1.0
  %v512 = vadd.f32 %v471, 1.0
  %v513 = vadd.f32 %v473, 1.0
  %v514 = vadd.f32 %v475, 1.0
  %v515 = vadd.f32 %v477, 1.0
  %v516 = vadd.f32 %v479, 1.0
  %v517 = vadd.f32 %v481, 1.0
  %v518 = vadd.f32 %v483, 1.0
  %v519 = vadd.f32 %v485, 1.0
  %v520 = vadd.f32 %v487, 1.0
  %v521 = vadd.f32 %v489, 1.0
  %v522 = vrcp.pop %v490
  %v523 = vmul.f32 1.0, %v522
  %v524 = vrcp.pop %v491
  %v525 = vmul.f32 1.0, %v524
  %v526 = vrcp.pop %v492
  %v527 = vmul.f32 1.0, %v526
  %v528 = vrcp.pop %v493
  %v529 = vmul.f32 1.0, %v528
  %v530 = vrcp.pop %v494
  %v531 = vmul.f32 1.0, %v530
  %v532 = vrcp.pop %v495
  %v533 = vmul.f32 1.0, %v532
  %v534 = vrcp.pop %v496
  %v535 = vmul.f32 1.0, %v534
  %v536 = vrcp.pop %v497
  %v537 = vmul.f32 1.0, %v536
  %v538 = vrcp.pop %v498
  %v539 = vmul.f32 1.0, %v538
  %v540 = vrcp.pop %v499
  %v541 = vmul.f32 1.0, %v540
  %v542 = vrcp.pop %v500
  %v543 = vmul.f32 1.0, %v542
  %v544 = vrcp.pop %v501
  %v545 = vmul.f32 1.0, %v544
  %v546 = vrcp.pop %v502
  %v547 = vmul.f32 1.0, %v546
  %v548 = vrcp.pop %v503
  %v549 = vmul.f32 1.0, %v548
  %v550 = vrcp.pop %v504
  %v551 = vmul.f32 1.0, %v550
  %v552 = vrcp.pop %v505
  %v553 = vmul.f32 1.0, %v552
  %v554 = vrcp.pop %v506
  %v555 = vmul.f32 1.0, %v554
  %v556 = vrcp.pop %v507
  %v557 = vmul.f32 1.0, %v556
  %v558 = vrcp.pop %v508
  %v559 = vmul.f32 1.0, %v558
  %v560 = vrcp.pop %v509
  %v561 = vmul.f32 1.0, %v560
  %v562 = vrcp.pop %v510
  %v563 = vmul.f32 1.0, %v562
  %v564 = vrcp.pop %v511
  %v565 = vmul.f32 1.0, %v564
  %v566 = vrcp.pop %v512
  %v567 = vmul.f32 1.0, %v566
  %v568 = vrcp.pop %v513
  %v569 = vmul.f32 1.0, %v568
  %v570 = vrcp.pop %v514
  %v571 = vmul.f32 1.0, %v570
  %v572 = vrcp.pop %v515
  %v573 = vmul.f32 1.0, %v572
  %v574 = vrcp.pop %v516
  %v575 = vmul.f32 1.0, %v574
  %v576 = vrcp.pop %v517
  %v577 = vmul.f32 1.0, %v576
  %v578 = vrcp.pop %v518
  %v579 = vmul.f32 1.0, %v578
  %v580 = vrcp.pop %v519
  %v581 = vmul.f32 1.0, %v580
  %v582 = vrcp.pop %v520
  %v583 = vmul.f32 1.0, %v582
  %v584 = vrcp.pop %v521
  %v585 = vmul.f32 1.0, %v584
  %v586 = vmul.f32 %v268, %v523
  %v587 = vmul.f32 %v271, %v525
  %v588 = vmul.f32 %v276, %v527
  %v589 = vmul.f32 %v279, %v529
  %v590 = vmul.f32 %v284, %v531
  %v591 = vmul.f32 %v287, %v533
  %v592 = vmul.f32 %v292, %v535
  %v593 = vmul.f32 %v295, %v537
  %v594 = vmul.f32 %v300, %v539
  %v595 = vmul.f32 %v303, %v541
  %v596 = vmul.f32 %v308, %v543
  %v597 = vmul.f32 %v311, %v545
  %v598 = vmul.f32 %v316, %v547
  %v599 = vmul.f32 %v319, %v549
  %v600 = vmul.f32 %v324, %v551
  %v601 = vmul.f32 %v327, %v553
  %v602 = vmul.f32 %v332, %v555
  %v603 = vmul.f32 %v335, %v557
  %v604 = vmul.f32 %v340, %v559
  %v605 = vmul.f32 %v343, %v561
  %v606 = vmul.f32 %v348, %v563
  %v607 = vmul.f32 %v351, %v565
  %v608 = vmul.f32 %v356, %v567
  %v609 = vmul.f32 %v359, %v569
  %v610 = vmul.f32 %v364, %v571
  %v611 = vmul.f32 %v367, %v573
  %v612 = vmul.f32 %v372, %v575
  %v613 = vmul.f32 %v375, %v577
  %v614 = vmul.f32 %v380, %v579
  %v615 = vmul.f32 %v383, %v581
  %v616 = vmul.f32 %v388, %v583
  %v617 = vmul.f32 %v391, %v585
  %v618 = vpack.c.bf16 %v587, %v586
  %v619 = vpack.c.bf16 %v589, %v588
  %v620 = vpack.c.bf16 %v591, %v590
  %v621 = vpack.c.bf16 %v593, %v592
  %v622 = vpack.c.bf16 %v595, %v594
  %v623 = vpack.c.bf16 %v597, %v596
  %v624 = vpack.c.bf16 %v599, %v598
  %v625 = vpack.c.bf16 %v601, %v600
  %v626 = vpack.c.bf16 %v603, %v602
  %v627 = vpack.c.bf16 %v605, %v604
  %v628 = vpack.c.bf16 %v607, %v606
  %v629 = vpack.c.bf16 %v609, %v608
  %v630 = vpack.c.bf16 %v611, %v610
  %v631 = vpack.c.bf16 %v613, %v612
  %v632 = vpack.c.bf16 %v615, %v614
  %v633 = vpack.c.bf16 %v617, %v616
  %v634 = vld [vmem:[%s2] sm:$0xf]
  %v635 = vld [vmem:[%s2 + $0x4] sm:$0xf]
  %v638 = vunpack.c.l.b16 %v634
  %v639 = vunpack.c.l.b16 %v635
  %v640 = vpack.c.b16 %v639, %v638
  %vm642 = vcmask 130048
  %v644 = vsel %vm642, %v618, 0
  %v647 = vsel %vm642, %v619, 0
  %v650 = vsel %vm642, %v620, 0
  %v653 = vsel %vm642, %v621, 0
  %v656 = vsel %vm642, %v622, 0
  %v659 = vsel %vm642, %v623, 0
  %v662 = vsel %vm642, %v624, 0
  %v665 = vsel %vm642, %v625, 0
  %v668 = vsel %vm642, %v626, 0
  %v671 = vsel %vm642, %v627, 0
  %v674 = vsel %vm642, %v628, 0
  %v677 = vsel %vm642, %v629, 0
  %v680 = vsel %vm642, %v630, 0
  %v683 = vsel %vm642, %v631, 0
  %v686 = vsel %vm642, %v632, 0
  %v689 = vsel %vm642, %v633, 0
  %691 = vmatprep.subr.bf16.mxu0 0
  %692 = vmatpush1.bf16.msra.mxu0 %v640
  %693 = vmatprep.subr.bf16.mxu0 0
  %694 = vmatpush1.bf16.msra.mxu0 0
  %695 = vmatprep.subr.bf16.mxu0 0
  %696 = vmatpush1.bf16.msra.mxu0 0
  %697 = vmatprep.subr.bf16.mxu0 0
  %698 = vmatpush1.bf16.msra.mxu0 0
  %699 = vmatprep.subr.bf16.mxu0 0
  %700 = vmatpush1.bf16.msra.mxu0 0
  %701 = vmatprep.subr.bf16.mxu0 0
  %702 = vmatpush1.bf16.msra.mxu0 0
  %703 = vmatprep.subr.bf16.mxu0 0
  %704 = vmatpush1.bf16.msra.mxu0 0
  %705 = vmatprep.subr.bf16.mxu0 0
  %706 = vmatpush1.bf16.msra.mxu0 0
  %707 = vmatprep.subr.bf16.mxu0 0
  %708 = vmatpush1.bf16.msra.mxu0 0
  %709 = vmatprep.subr.bf16.mxu0 0
  %710 = vmatpush1.bf16.msra.mxu0 0
  %711 = vmatprep.subr.bf16.mxu0 0
  %712 = vmatpush1.bf16.msra.mxu0 0
  %713 = vmatprep.subr.bf16.mxu0 0
  %714 = vmatpush1.bf16.msra.mxu0 0
  %715 = vmatprep.subr.bf16.mxu0 0
  %716 = vmatpush1.bf16.msra.mxu0 0
  %717 = vmatprep.subr.bf16.mxu0 0
  %718 = vmatpush1.bf16.msra.mxu0 0
  %719 = vmatprep.subr.bf16.mxu0 0
  %720 = vmatpush1.bf16.msra.mxu0 0
  %721 = vmatprep.subr.bf16.mxu0 0
  %722 = vmatpush1.bf16.msra.mxu0 0
  %723 = vmatprep.mubr.bf16.mxu0 0
  %724 = vmatmul.mubr.bf16.gmra.mrb[0].mxu0 %v644
  %v725 = vpop.f32.mrb[0].mxu0
  %v726 = vadd.f32 0.0, %v725
  %v727 = vpop.f32.mrb[0].mxu0
  %v728 = vpop.f32.mrb[0].mxu0
  %v729 = vadd.f32 0.0, %v728
  %v730 = vpop.f32.mrb[0].mxu0
  %731 = vmatprep.mubr.bf16.mxu0 0
  %732 = vmatmul.mubr.bf16.gmra.mrb[0].mxu0 %v647
  %v733 = vpop.f32.mrb[0].mxu0
  %v734 = vadd.f32 0.0, %v733
  %v735 = vpop.f32.mrb[0].mxu0
  %v736 = vpop.f32.mrb[0].mxu0
  %v737 = vadd.f32 0.0, %v736
  %v738 = vpop.f32.mrb[0].mxu0
  %739 = vmatprep.mubr.bf16.mxu0 0
  %740 = vmatmul.mubr.bf16.gmra.mrb[0].mxu0 %v650
  %v741 = vpop.f32.mrb[0].mxu0
  %v742 = vadd.f32 0.0, %v741
  %v743 = vpop.f32.mrb[0].mxu0
  %v744 = vpop.f32.mrb[0].mxu0
  %v745 = vadd.f32 0.0, %v744
  %v746 = vpop.f32.mrb[0].mxu0
  %747 = vmatprep.mubr.bf16.mxu0 0
  %748 = vmatmul.mubr.bf16.gmra.mrb[0].mxu0 %v653
  %v749 = vpop.f32.mrb[0].mxu0
  %v750 = vadd.f32 0.0, %v749
  %v751 = vpop.f32.mrb[0].mxu0
  %v752 = vpop.f32.mrb[0].mxu0
  %v753 = vadd.f32 0.0, %v752
  %v754 = vpop.f32.mrb[0].mxu0
  %755 = vmatprep.mubr.bf16.mxu0 0
  %756 = vmatmul.mubr.bf16.gmra.mrb[0].mxu0 %v656
  %v757 = vpop.f32.mrb[0].mxu0
  %v758 = vadd.f32 0.0, %v757
  %v759 = vpop.f32.mrb[0].mxu0
  %v760 = vpop.f32.mrb[0].mxu0
  %v761 = vadd.f32 0.0, %v760
  %v762 = vpop.f32.mrb[0].mxu0
  %763 = vmatprep.mubr.bf16.mxu0 0
  %764 = vmatmul.mubr.bf16.gmra.mrb[0].mxu0 %v659
  %v765 = vpop.f32.mrb[0].mxu0
  %v766 = vadd.f32 0.0, %v765
  %v767 = vpop.f32.mrb[0].mxu0
  %v768 = vpop.f32.mrb[0].mxu0
  %v769 = vadd.f32 0.0, %v768
  %v770 = vpop.f32.mrb[0].mxu0
  %771 = vmatprep.mubr.bf16.mxu0 0
  %772 = vmatmul.mubr.bf16.gmra.mrb[0].mxu0 %v662
  %v773 = vpop.f32.mrb[0].mxu0
  %v774 = vadd.f32 0.0, %v773
  %v775 = vpop.f32.mrb[0].mxu0
  %v776 = vpop.f32.mrb[0].mxu0
  %v777 = vadd.f32 0.0, %v776
  %v778 = vpop.f32.mrb[0].mxu0
  %779 = vmatprep.mubr.bf16.mxu0 0
  %780 = vmatmul.mubr.bf16.gmra.mrb[0].mxu0 %v665
  %v781 = vpop.f32.mrb[0].mxu0
  %v782 = vadd.f32 0.0, %v781
  %v783 = vpop.f32.mrb[0].mxu0
  %v784 = vpop.f32.mrb[0].mxu0
  %v785 = vadd.f32 0.0, %v784
  %v786 = vpop.f32.mrb[0].mxu0
  %787 = vmatprep.mubr.bf16.mxu0 0
  %788 = vmatmul.mubr.bf16.gmra.mrb[0].mxu0 %v668
  %v789 = vpop.f32.mrb[0].mxu0
  %v790 = vadd.f32 0.0, %v789
  %v791 = vpop.f32.mrb[0].mxu0
  %v792 = vpop.f32.mrb[0].mxu0
  %v793 = vadd.f32 0.0, %v792
  %v794 = vpop.f32.mrb[0].mxu0
  %795 = vmatprep.mubr.bf16.mxu0 0
  %796 = vmatmul.mubr.bf16.gmra.mrb[0].mxu0 %v671
  %v797 = vpop.f32.mrb[0].mxu0
  %v798 = vadd.f32 0.0, %v797
  %v799 = vpop.f32.mrb[0].mxu0
  %v800 = vpop.f32.mrb[0].mxu0
  %v801 = vadd.f32 0.0, %v800
  %v802 = vpop.f32.mrb[0].mxu0
  %803 = vmatprep.mubr.bf16.mxu0 0
  %804 = vmatmul.mubr.bf16.gmra.mrb[0].mxu0 %v674
  %v805 = vpop.f32.mrb[0].mxu0
  %v806 = vadd.f32 0.0, %v805
  %v807 = vpop.f32.mrb[0].mxu0
  %v808 = vpop.f32.mrb[0].mxu0
  %v809 = vadd.f32 0.0, %v808
  %v810 = vpop.f32.mrb[0].mxu0
  %811 = vmatprep.mubr.bf16.mxu0 0
  %812 = vmatmul.mubr.bf16.gmra.mrb[0].mxu0 %v677
  %v813 = vpop.f32.mrb[0].mxu0
  %v814 = vadd.f32 0.0, %v813
  %v815 = vpop.f32.mrb[0].mxu0
  %v816 = vpop.f32.mrb[0].mxu0
  %v817 = vadd.f32 0.0, %v816
  %v818 = vpop.f32.mrb[0].mxu0
  %819 = vmatprep.mubr.bf16.mxu0 0
  %820 = vmatmul.mubr.bf16.gmra.mrb[0].mxu0 %v680
  %v821 = vpop.f32.mrb[0].mxu0
  %v822 = vadd.f32 0.0, %v821
  %v823 = vpop.f32.mrb[0].mxu0
  %v824 = vpop.f32.mrb[0].mxu0
  %v825 = vadd.f32 0.0, %v824
  %v826 = vpop.f32.mrb[0].mxu0
  %827 = vmatprep.mubr.bf16.mxu0 0
  %828 = vmatmul.mubr.bf16.gmra.mrb[0].mxu0 %v683
  %v829 = vpop.f32.mrb[0].mxu0
  %v830 = vadd.f32 0.0, %v829
  %v831 = vpop.f32.mrb[0].mxu0
  %v832 = vpop.f32.mrb[0].mxu0
  %v833 = vadd.f32 0.0, %v832
  %v834 = vpop.f32.mrb[0].mxu0
  %835 = vmatprep.mubr.bf16.mxu0 0
  %836 = vmatmul.mubr.bf16.gmra.mrb[0].mxu0 %v686
  %v837 = vpop.f32.mrb[0].mxu0
  %v838 = vadd.f32 0.0, %v837
  %v839 = vpop.f32.mrb[0].mxu0
  %v840 = vpop.f32.mrb[0].mxu0
  %v841 = vadd.f32 0.0, %v840
  %v842 = vpop.f32.mrb[0].mxu0
  %843 = vmatprep.mubr.bf16.mxu0 0
  %844 = vmatmul.mubr.bf16.gmra.mrb[0].mxu0 %v689
  %v845 = vpop.f32.mrb[0].mxu0
  %v846 = vadd.f32 0.0, %v845
  %v847 = vpop.f32.mrb[0].mxu0
  %v848 = vpop.f32.mrb[0].mxu0
  %v849 = vadd.f32 0.0, %v848
  %v850 = vpop.f32.mrb[0].mxu0
  %851 = vdwg.mxu0
  %v852 = vld [vmem:[%s8] sm:$0xf]
  %v853 = vld [vmem:[%s8 + $0x4] sm:$0xf]
  %v854 = vld [vmem:[%s8 + $0x8] sm:$0xf]
  %v855 = vld [vmem:[%s8 + $0xc] sm:$0xf]
  %v856 = vld [vmem:[%s8 + $0x10] sm:$0xf]
  %v857 = vld [vmem:[%s8 + $0x14] sm:$0xf]
  %v858 = vld [vmem:[%s8 + $0x18] sm:$0xf]
  %v859 = vld [vmem:[%s8 + $0x1c] sm:$0xf]
  %v860 = vld [vmem:[%s8 + $0x20] sm:$0xf]
  %v861 = vld [vmem:[%s8 + $0x24] sm:$0xf]
  %v862 = vld [vmem:[%s8 + $0x28] sm:$0xf]
  %v863 = vld [vmem:[%s8 + $0x2c] sm:$0xf]
  %v864 = vld [vmem:[%s8 + $0x30] sm:$0xf]
  %v865 = vld [vmem:[%s8 + $0x34] sm:$0xf]
  %v866 = vld [vmem:[%s8 + $0x38] sm:$0xf]
  %v867 = vld [vmem:[%s8 + $0x3c] sm:$0xf]
  %v868 = vld [vmem:[%s8 + $0x40] sm:$0xf]
  %v869 = vld [vmem:[%s8 + $0x44] sm:$0xf]
  %v870 = vld [vmem:[%s8 + $0x48] sm:$0xf]
  %v871 = vld [vmem:[%s8 + $0x4c] sm:$0xf]
  %v872 = vld [vmem:[%s8 + $0x50] sm:$0xf]
  %v873 = vld [vmem:[%s8 + $0x54] sm:$0xf]
  %v874 = vld [vmem:[%s8 + $0x58] sm:$0xf]
  %v875 = vld [vmem:[%s8 + $0x5c] sm:$0xf]
  %v876 = vld [vmem:[%s8 + $0x60] sm:$0xf]
  %v877 = vld [vmem:[%s8 + $0x64] sm:$0xf]
  %v878 = vld [vmem:[%s8 + $0x68] sm:$0xf]
  %v879 = vld [vmem:[%s8 + $0x6c] sm:$0xf]
  %v880 = vld [vmem:[%s8 + $0x70] sm:$0xf]
  %v881 = vld [vmem:[%s8 + $0x74] sm:$0xf]
  %v882 = vld [vmem:[%s8 + $0x78] sm:$0xf]
  %v883 = vld [vmem:[%s8 + $0x7c] sm:$0xf]
  %v884 = vld [vmem:[%s3] sm:$0xf]
  %v917 = vunpack.c.l.b16 %v852
  %v918 = vunpack.c.l.b16 %v853
  %v919 = vunpack.c.l.b16 %v854
  %v920 = vunpack.c.l.b16 %v855
  %v921 = vunpack.c.l.b16 %v856
  %v922 = vunpack.c.l.b16 %v857
  %v923 = vunpack.c.l.b16 %v858
  %v924 = vunpack.c.l.b16 %v859
  %v925 = vunpack.c.l.b16 %v860
  %v926 = vunpack.c.l.b16 %v861
  %v927 = vunpack.c.l.b16 %v862
  %v928 = vunpack.c.l.b16 %v863
  %v929 = vunpack.c.l.b16 %v864
  %v930 = vunpack.c.l.b16 %v865
  %v931 = vunpack.c.l.b16 %v866
  %v932 = vunpack.c.l.b16 %v867
  %v933 = vunpack.c.l.b16 %v868
  %v934 = vunpack.c.l.b16 %v869
  %v935 = vunpack.c.l.b16 %v870
  %v936 = vunpack.c.l.b16 %v871
  %v937 = vunpack.c.l.b16 %v872
  %v938 = vunpack.c.l.b16 %v873
  %v939 = vunpack.c.l.b16 %v874
  %v940 = vunpack.c.l.b16 %v875
  %v941 = vunpack.c.l.b16 %v876
  %v942 = vunpack.c.l.b16 %v877
  %v943 = vunpack.c.l.b16 %v878
  %v944 = vunpack.c.l.b16 %v879
  %v945 = vunpack.c.l.b16 %v880
  %v946 = vunpack.c.l.b16 %v881
  %v947 = vunpack.c.l.b16 %v882
  %v948 = vunpack.c.l.b16 %v883
  %v949 = vpack.c.b16 %v918, %v917
  %v950 = vpack.c.b16 %v920, %v919
  %v951 = vpack.c.b16 %v922, %v921
  %v952 = vpack.c.b16 %v924, %v923
  %v953 = vpack.c.b16 %v926, %v925
  %v954 = vpack.c.b16 %v928, %v927
  %v955 = vpack.c.b16 %v930, %v929
  %v956 = vpack.c.b16 %v932, %v931
  %v957 = vpack.c.b16 %v934, %v933
  %v958 = vpack.c.b16 %v936, %v935
  %v959 = vpack.c.b16 %v938, %v937
  %v960 = vpack.c.b16 %v940, %v939
  %v961 = vpack.c.b16 %v942, %v941
  %v962 = vpack.c.b16 %v944, %v943
  %v963 = vpack.c.b16 %v946, %v945
  %v964 = vpack.c.b16 %v948, %v947
  %vm965 = vcmask 64512
  %v967 = vsel %vm965, %v949, 0
  %v970 = vsel %vm965, %v950, 0
  %v973 = vsel %vm965, %v951, 0
  %v976 = vsel %vm965, %v952, 0
  %v979 = vsel %vm965, %v953, 0
  %v982 = vsel %vm965, %v954, 0
  %v985 = vsel %vm965, %v955, 0
  %v988 = vsel %vm965, %v956, 0
  %v991 = vsel %vm965, %v957, 0
  %v994 = vsel %vm965, %v958, 0
  %v997 = vsel %vm965, %v959, 0
  %v1000 = vsel %vm965, %v960, 0
  %v1003 = vsel %vm965, %v961, 0
  %v1006 = vsel %vm965, %v962, 0
  %v1009 = vsel %vm965, %v963, 0
  %v1012 = vsel %vm965, %v964, 0
  %vm1014 = vcmask 1043456
  %v1016 = vsel %vm1014, %v884, 0
  %1018 = vmatprep.subr.bf16.mxu0 0
  %1019 = vmatpush1.bf16.msra.mxu0 %v1016
  %1020 = vmatprep.subr.bf16.mxu0 0
  %1021 = vmatpush1.bf16.msra.mxu0 0
  %1022 = vmatprep.subr.bf16.mxu0 0
  %1023 = vmatpush1.bf16.msra.mxu0 0
  %1024 = vmatprep.subr.bf16.mxu0 0
  %1025 = vmatpush1.bf16.msra.mxu0 0
  %1026 = vmatprep.subr.bf16.mxu0 0
  %1027 = vmatpush1.bf16.msra.mxu0 0
  %1028 = vmatprep.subr.bf16.mxu0 0
  %1029 = vmatpush1.bf16.msra.mxu0 0
  %1030 = vmatprep.subr.bf16.mxu0 0
  %1031 = vmatpush1.bf16.msra.mxu0 0
  %1032 = vmatprep.subr.bf16.mxu0 0
  %1033 = vmatpush1.bf16.msra.mxu0 0
  %1034 = vmatprep.subr.bf16.mxu0 0
  %1035 = vmatpush1.bf16.msra.mxu0 0
  %1036 = vmatprep.subr.bf16.mxu0 0
  %1037 = vmatpush1.bf16.msra.mxu0 0
  %1038 = vmatprep.subr.bf16.mxu0 0
  %1039 = vmatpush1.bf16.msra.mxu0 0
  %1040 = vmatprep.subr.bf16.mxu0 0
  %1041 = vmatpush1.bf16.msra.mxu0 0
  %1042 = vmatprep.subr.bf16.mxu0 0
  %1043 = vmatpush1.bf16.msra.mxu0 0
  %1044 = vmatprep.subr.bf16.mxu0 0
  %1045 = vmatpush1.bf16.msra.mxu0 0
  %1046 = vmatprep.subr.bf16.mxu0 0
  %1047 = vmatpush1.bf16.msra.mxu0 0
  %1048 = vmatprep.subr.bf16.mxu0 0
  %1049 = vmatpush1.bf16.msra.mxu0 0
  %1050 = vmatprep.mubr.bf16.mxu0 0
  %1051 = vmatmul.mubr.bf16.gmra.mrb[0].mxu0 %v967
  %v1052 = vpop.f32.mrb[0].mxu0
  %v1053 = vadd.f32 0.0, %v1052
  %v1054 = vpop.f32.mrb[0].mxu0
  %v1055 = vpop.f32.mrb[0].mxu0
  %v1056 = vadd.f32 0.0, %v1055
  %v1057 = vpop.f32.mrb[0].mxu0
  %1058 = vmatprep.mubr.bf16.mxu0 0
  %1059 = vmatmul.mubr.bf16.gmra.mrb[0].mxu0 %v970
  %v1060 = vpop.f32.mrb[0].mxu0
  %v1061 = vadd.f32 0.0, %v1060
  %v1062 = vpop.f32.mrb[0].mxu0
  %v1063 = vpop.f32.mrb[0].mxu0
  %v1064 = vadd.f32 0.0, %v1063
  %v1065 = vpop.f32.mrb[0].mxu0
  %1066 = vmatprep.mubr.bf16.mxu0 0
  %1067 = vmatmul.mubr.bf16.gmra.mrb[0].mxu0 %v973
  %v1068 = vpop.f32.mrb[0].mxu0
  %v1069 = vadd.f32 0.0, %v1068
  %v1070 = vpop.f32.mrb[0].mxu0
  %v1071 = vpop.f32.mrb[0].mxu0
  %v1072 = vadd.f32 0.0, %v1071
  %v1073 = vpop.f32.mrb[0].mxu0
  %1074 = vmatprep.mubr.bf16.mxu0 0
  %1075 = vmatmul.mubr.bf16.gmra.mrb[0].mxu0 %v976
  %v1076 = vpop.f32.mrb[0].mxu0
  %v1077 = vadd.f32 0.0, %v1076
  %v1078 = vpop.f32.mrb[0].mxu0
  %v1079 = vpop.f32.mrb[0].mxu0
  %v1080 = vadd.f32 0.0, %v1079
  %v1081 = vpop.f32.mrb[0].mxu0
  %1082 = vmatprep.mubr.bf16.mxu0 0
  %1083 = vmatmul.mubr.bf16.gmra.mrb[0].mxu0 %v979
  %v1084 = vpop.f32.mrb[0].mxu0
  %v1085 = vadd.f32 0.0, %v1084
  %v1086 = vpop.f32.mrb[0].mxu0
  %v1087 = vpop.f32.mrb[0].mxu0
  %v1088 = vadd.f32 0.0, %v1087
  %v1089 = vpop.f32.mrb[0].mxu0
  %1090 = vmatprep.mubr.bf16.mxu0 0
  %1091 = vmatmul.mubr.bf16.gmra.mrb[0].mxu0 %v982
  %v1092 = vpop.f32.mrb[0].mxu0
  %v1093 = vadd.f32 0.0, %v1092
  %v1094 = vpop.f32.mrb[0].mxu0
  %v1095 = vpop.f32.mrb[0].mxu0
  %v1096 = vadd.f32 0.0, %v1095
  %v1097 = vpop.f32.mrb[0].mxu0
  %1098 = vmatprep.mubr.bf16.mxu0 0
  %1099 = vmatmul.mubr.bf16.gmra.mrb[0].mxu0 %v985
  %v1100 = vpop.f32.mrb[0].mxu0
  %v1101 = vadd.f32 0.0, %v1100
  %v1102 = vpop.f32.mrb[0].mxu0
  %v1103 = vpop.f32.mrb[0].mxu0
  %v1104 = vadd.f32 0.0, %v1103
  %v1105 = vpop.f32.mrb[0].mxu0
  %1106 = vmatprep.mubr.bf16.mxu0 0
  %1107 = vmatmul.mubr.bf16.gmra.mrb[0].mxu0 %v988
  %v1108 = vpop.f32.mrb[0].mxu0
  %v1109 = vadd.f32 0.0, %v1108
  %v1110 = vpop.f32.mrb[0].mxu0
  %v1111 = vpop.f32.mrb[0].mxu0
  %v1112 = vadd.f32 0.0, %v1111
  %v1113 = vpop.f32.mrb[0].mxu0
  %1114 = vmatprep.mubr.bf16.mxu0 0
  %1115 = vmatmul.mubr.bf16.gmra.mrb[0].mxu0 %v991
  %v1116 = vpop.f32.mrb[0].mxu0
  %v1117 = vadd.f32 0.0, %v1116
  %v1118 = vpop.f32.mrb[0].mxu0
  %v1119 = vpop.f32.mrb[0].mxu0
  %v1120 = vadd.f32 0.0, %v1119
  %v1121 = vpop.f32.mrb[0].mxu0
  %1122 = vmatprep.mubr.bf16.mxu0 0
  %1123 = vmatmul.mubr.bf16.gmra.mrb[0].mxu0 %v994
  %v1124 = vpop.f32.mrb[0].mxu0
  %v1125 = vadd.f32 0.0, %v1124
  %v1126 = vpop.f32.mrb[0].mxu0
  %v1127 = vpop.f32.mrb[0].mxu0
  %v1128 = vadd.f32 0.0, %v1127
  %v1129 = vpop.f32.mrb[0].mxu0
  %1130 = vmatprep.mubr.bf16.mxu0 0
  %1131 = vmatmul.mubr.bf16.gmra.mrb[0].mxu0 %v997
  %v1132 = vpop.f32.mrb[0].mxu0
  %v1133 = vadd.f32 0.0, %v1132
  %v1134 = vpop.f32.mrb[0].mxu0
  %v1135 = vpop.f32.mrb[0].mxu0
  %v1136 = vadd.f32 0.0, %v1135
  %v1137 = vpop.f32.mrb[0].mxu0
  %1138 = vmatprep.mubr.bf16.mxu0 0
  %1139 = vmatmul.mubr.bf16.gmra.mrb[0].mxu0 %v1000
  %v1140 = vpop.f32.mrb[0].mxu0
  %v1141 = vadd.f32 0.0, %v1140
  %v1142 = vpop.f32.mrb[0].mxu0
  %v1143 = vpop.f32.mrb[0].mxu0
  %v1144 = vadd.f32 0.0, %v1143
  %v1145 = vpop.f32.mrb[0].mxu0
  %1146 = vmatprep.mubr.bf16.mxu0 0
  %1147 = vmatmul.mubr.bf16.gmra.mrb[0].mxu0 %v1003
  %v1148 = vpop.f32.mrb[0].mxu0
  %v1149 = vadd.f32 0.0, %v1148
  %v1150 = vpop.f32.mrb[0].mxu0
  %v1151 = vpop.f32.mrb[0].mxu0
  %v1152 = vadd.f32 0.0, %v1151
  %v1153 = vpop.f32.mrb[0].mxu0
  %1154 = vmatprep.mubr.bf16.mxu0 0
  %1155 = vmatmul.mubr.bf16.gmra.mrb[0].mxu0 %v1006
  %v1156 = vpop.f32.mrb[0].mxu0
  %v1157 = vadd.f32 0.0, %v1156
  %v1158 = vpop.f32.mrb[0].mxu0
  %v1159 = vpop.f32.mrb[0].mxu0
  %v1160 = vadd.f32 0.0, %v1159
  %v1161 = vpop.f32.mrb[0].mxu0
  %1162 = vmatprep.mubr.bf16.mxu0 0
  %1163 = vmatmul.mubr.bf16.gmra.mrb[0].mxu0 %v1009
  %v1164 = vpop.f32.mrb[0].mxu0
  %v1165 = vadd.f32 0.0, %v1164
  %v1166 = vpop.f32.mrb[0].mxu0
  %v1167 = vpop.f32.mrb[0].mxu0
  %v1168 = vadd.f32 0.0, %v1167
  %v1169 = vpop.f32.mrb[0].mxu0
  %1170 = vmatprep.mubr.bf16.mxu0 0
  %1171 = vmatmul.mubr.bf16.gmra.mrb[0].mxu0 %v1012
  %v1172 = vpop.f32.mrb[0].mxu0
  %v1173 = vadd.f32 0.0, %v1172
  %v1174 = vpop.f32.mrb[0].mxu0
  %v1175 = vpop.f32.mrb[0].mxu0
  %v1176 = vadd.f32 0.0, %v1175
  %v1177 = vpop.f32.mrb[0].mxu0
  %1178 = vdwg.mxu0
  %v1179 = vmul.f32 %v726, %v1053
  %v1180 = vmul.f32 %v729, %v1056
  %v1181 = vmul.f32 %v734, %v1061
  %v1182 = vmul.f32 %v737, %v1064
  %v1183 = vmul.f32 %v742, %v1069
  %v1184 = vmul.f32 %v745, %v1072
  %v1185 = vmul.f32 %v750, %v1077
  %v1186 = vmul.f32 %v753, %v1080
  %v1187 = vmul.f32 %v758, %v1085
  %v1188 = vmul.f32 %v761, %v1088
  %v1189 = vmul.f32 %v766, %v1093
  %v1190 = vmul.f32 %v769, %v1096
  %v1191 = vmul.f32 %v774, %v1101
  %v1192 = vmul.f32 %v777, %v1104
  %v1193 = vmul.f32 %v782, %v1109
  %v1194 = vmul.f32 %v785, %v1112
  %v1195 = vmul.f32 %v790, %v1117
  %v1196 = vmul.f32 %v793, %v1120
  %v1197 = vmul.f32 %v798, %v1125
  %v1198 = vmul.f32 %v801, %v1128
  %v1199 = vmul.f32 %v806, %v1133
  %v1200 = vmul.f32 %v809, %v1136
  %v1201 = vmul.f32 %v814, %v1141
  %v1202 = vmul.f32 %v817, %v1144
  %v1203 = vmul.f32 %v822, %v1149
  %v1204 = vmul.f32 %v825, %v1152
  %v1205 = vmul.f32 %v830, %v1157
  %v1206 = vmul.f32 %v833, %v1160
  %v1207 = vmul.f32 %v838, %v1165
  %v1208 = vmul.f32 %v841, %v1168
  %v1209 = vmul.f32 %v846, %v1173
  %v1210 = vmul.f32 %v849, %v1176
  %v1211 = vpack.c.bf16 %v1180, %v1179
  %v1212 = vpack.c.bf16 %v1182, %v1181
  %v1213 = vpack.c.bf16 %v1184, %v1183
  %v1214 = vpack.c.bf16 %v1186, %v1185
  %v1215 = vpack.c.bf16 %v1188, %v1187
  %v1216 = vpack.c.bf16 %v1190, %v1189
  %v1217 = vpack.c.bf16 %v1192, %v1191
  %v1218 = vpack.c.bf16 %v1194, %v1193
  %v1219 = vpack.c.bf16 %v1196, %v1195
  %v1220 = vpack.c.bf16 %v1198, %v1197
  %v1221 = vpack.c.bf16 %v1200, %v1199
  %v1222 = vpack.c.bf16 %v1202, %v1201
  %v1223 = vpack.c.bf16 %v1204, %v1203
  %v1224 = vpack.c.bf16 %v1206, %v1205
  %v1225 = vpack.c.bf16 %v1208, %v1207
  %v1226 = vpack.c.bf16 %v1210, %v1209
  %v1227 = vld [vmem:[%s4] sm:$0xf]
  %v1228 = vld [vmem:[%s4 + $0x4] sm:$0xf]
  %v1229 = vld [vmem:[%s4 + $0x8] sm:$0xf]
  %v1230 = vld [vmem:[%s4 + $0xc] sm:$0xf]
  %v1231 = vld [vmem:[%s4 + $0x10] sm:$0xf]
  %v1232 = vld [vmem:[%s4 + $0x14] sm:$0xf]
  %v1233 = vld [vmem:[%s4 + $0x18] sm:$0xf]
  %v1234 = vld [vmem:[%s4 + $0x1c] sm:$0xf]
  %v1235 = vld [vmem:[%s4 + $0x20] sm:$0xf]
  %v1236 = vld [vmem:[%s4 + $0x24] sm:$0xf]
  %v1237 = vld [vmem:[%s4 + $0x28] sm:$0xf]
  %v1238 = vld [vmem:[%s4 + $0x2c] sm:$0xf]
  %v1239 = vld [vmem:[%s4 + $0x30] sm:$0xf]
  %v1240 = vld [vmem:[%s4 + $0x34] sm:$0xf]
  %v1241 = vld [vmem:[%s4 + $0x38] sm:$0xf]
  %v1242 = vld [vmem:[%s4 + $0x3c] sm:$0xf]
  %v1259 = vunpack.c.l.b16 %v1227
  %v1260 = vunpack.c.l.b16 %v1228
  %v1261 = vunpack.c.l.b16 %v1229
  %v1262 = vunpack.c.l.b16 %v1230
  %v1263 = vunpack.c.l.b16 %v1231
  %v1264 = vunpack.c.l.b16 %v1232
  %v1265 = vunpack.c.l.b16 %v1233
  %v1266 = vunpack.c.l.b16 %v1234
  %v1267 = vunpack.c.l.b16 %v1235
  %v1268 = vunpack.c.l.b16 %v1236
  %v1269 = vunpack.c.l.b16 %v1237
  %v1270 = vunpack.c.l.b16 %v1238
  %v1271 = vunpack.c.l.b16 %v1239
  %v1272 = vunpack.c.l.b16 %v1240
  %v1273 = vunpack.c.l.b16 %v1241
  %v1274 = vunpack.c.l.b16 %v1242
  %v1275 = vpack.c.b16 %v1260, %v1259
  %v1276 = vpack.c.b16 %v1262, %v1261
  %v1277 = vpack.c.b16 %v1264, %v1263
  %v1278 = vpack.c.b16 %v1266, %v1265
  %v1279 = vpack.c.b16 %v1268, %v1267
  %v1280 = vpack.c.b16 %v1270, %v1269
  %v1281 = vpack.c.b16 %v1272, %v1271
  %v1282 = vpack.c.b16 %v1274, %v1273
  %1291 = vmatprep.subr.bf16.mxu0 0
  %1292 = vmatpush1.bf16.msra.mxu0 %v1275
  %1293 = vmatprep.subr.bf16.mxu0 0
  %1294 = vmatpush1.bf16.msra.mxu0 %v1276
  %1295 = vmatprep.subr.bf16.mxu0 0
  %1296 = vmatpush1.bf16.msra.mxu0 %v1277
  %1297 = vmatprep.subr.bf16.mxu0 0
  %1298 = vmatpush1.bf16.msra.mxu0 %v1278
  %1299 = vmatprep.subr.bf16.mxu0 0
  %1300 = vmatpush1.bf16.msra.mxu0 %v1279
  %1301 = vmatprep.subr.bf16.mxu0 0
  %1302 = vmatpush1.bf16.msra.mxu0 %v1280
  %1303 = vmatprep.subr.bf16.mxu0 0
  %1304 = vmatpush1.bf16.msra.mxu0 %v1281
  %1305 = vmatprep.subr.bf16.mxu0 0
  %1306 = vmatpush1.bf16.msra.mxu0 %v1282
  %1307 = vmatprep.subr.bf16.mxu0 0
  %1308 = vmatpush1.bf16.msra.mxu0 0
  %1309 = vmatprep.subr.bf16.mxu0 0
  %1310 = vmatpush1.bf16.msra.mxu0 0
  %1311 = vmatprep.subr.bf16.mxu0 0
  %1312 = vmatpush1.bf16.msra.mxu0 0
  %1313 = vmatprep.subr.bf16.mxu0 0
  %1314 = vmatpush1.bf16.msra.mxu0 0
  %1315 = vmatprep.subr.bf16.mxu0 0
  %1316 = vmatpush1.bf16.msra.mxu0 0
  %1317 = vmatprep.subr.bf16.mxu0 0
  %1318 = vmatpush1.bf16.msra.mxu0 0
  %1319 = vmatprep.subr.bf16.mxu0 0
  %1320 = vmatpush1.bf16.msra.mxu0 0
  %1321 = vmatprep.subr.bf16.mxu0 0
  %1322 = vmatpush1.bf16.msra.mxu0 0
  %1323 = vmatprep.mubr.bf16.mxu0 0
  %1324 = vmatmul.mubr.bf16.gmra.mrb[0].mxu0 %v1211
  %v1325 = vpop.f32.mrb[0].mxu0
  %v1326 = vadd.f32 0.0, %v1325
  %v1327 = vpop.f32.mrb[0].mxu0
  %v1328 = vpop.f32.mrb[0].mxu0
  %v1329 = vadd.f32 0.0, %v1328
  %v1330 = vpop.f32.mrb[0].mxu0
  %1331 = vmatprep.mubr.bf16.mxu0 0
  %1332 = vmatmul.mubr.bf16.gmra.mrb[0].mxu0 %v1212
  %v1333 = vpop.f32.mrb[0].mxu0
  %v1334 = vadd.f32 0.0, %v1333
  %v1335 = vpop.f32.mrb[0].mxu0
  %v1336 = vpop.f32.mrb[0].mxu0
  %v1337 = vadd.f32 0.0, %v1336
  %v1338 = vpop.f32.mrb[0].mxu0
  %1339 = vmatprep.mubr.bf16.mxu0 0
  %1340 = vmatmul.mubr.bf16.gmra.mrb[0].mxu0 %v1213
  %v1341 = vpop.f32.mrb[0].mxu0
  %v1342 = vadd.f32 0.0, %v1341
  %v1343 = vpop.f32.mrb[0].mxu0
  %v1344 = vpop.f32.mrb[0].mxu0
  %v1345 = vadd.f32 0.0, %v1344
  %v1346 = vpop.f32.mrb[0].mxu0
  %1347 = vmatprep.mubr.bf16.mxu0 0
  %1348 = vmatmul.mubr.bf16.gmra.mrb[0].mxu0 %v1214
  %v1349 = vpop.f32.mrb[0].mxu0
  %v1350 = vadd.f32 0.0, %v1349
  %v1351 = vpop.f32.mrb[0].mxu0
  %v1352 = vpop.f32.mrb[0].mxu0
  %v1353 = vadd.f32 0.0, %v1352
  %v1354 = vpop.f32.mrb[0].mxu0
  %1355 = vmatprep.mubr.bf16.mxu0 0
  %1356 = vmatmul.mubr.bf16.gmra.mrb[0].mxu0 %v1215
  %v1357 = vpop.f32.mrb[0].mxu0
  %v1358 = vadd.f32 0.0, %v1357
  %v1359 = vpop.f32.mrb[0].mxu0
  %v1360 = vpop.f32.mrb[0].mxu0
  %v1361 = vadd.f32 0.0, %v1360
  %v1362 = vpop.f32.mrb[0].mxu0
  %1363 = vmatprep.mubr.bf16.mxu0 0
  %1364 = vmatmul.mubr.bf16.gmra.mrb[0].mxu0 %v1216
  %v1365 = vpop.f32.mrb[0].mxu0
  %v1366 = vadd.f32 0.0, %v1365
  %v1367 = vpop.f32.mrb[0].mxu0
  %v1368 = vpop.f32.mrb[0].mxu0
  %v1369 = vadd.f32 0.0, %v1368
  %v1370 = vpop.f32.mrb[0].mxu0
  %1371 = vmatprep.mubr.bf16.mxu0 0
  %1372 = vmatmul.mubr.bf16.gmra.mrb[0].mxu0 %v1217
  %v1373 = vpop.f32.mrb[0].mxu0
  %v1374 = vadd.f32 0.0, %v1373
  %v1375 = vpop.f32.mrb[0].mxu0
  %v1376 = vpop.f32.mrb[0].mxu0
  %v1377 = vadd.f32 0.0, %v1376
  %v1378 = vpop.f32.mrb[0].mxu0
  %1379 = vmatprep.mubr.bf16.mxu0 0
  %1380 = vmatmul.mubr.bf16.gmra.mrb[0].mxu0 %v1218
  %v1381 = vpop.f32.mrb[0].mxu0
  %v1382 = vadd.f32 0.0, %v1381
  %v1383 = vpop.f32.mrb[0].mxu0
  %v1384 = vpop.f32.mrb[0].mxu0
  %v1385 = vadd.f32 0.0, %v1384
  %v1386 = vpop.f32.mrb[0].mxu0
  %1387 = vmatprep.mubr.bf16.mxu0 0
  %1388 = vmatmul.mubr.bf16.gmra.mrb[0].mxu0 %v1219
  %v1389 = vpop.f32.mrb[0].mxu0
  %v1390 = vadd.f32 0.0, %v1389
  %v1391 = vpop.f32.mrb[0].mxu0
  %v1392 = vpop.f32.mrb[0].mxu0
  %v1393 = vadd.f32 0.0, %v1392
  %v1394 = vpop.f32.mrb[0].mxu0
  %1395 = vmatprep.mubr.bf16.mxu0 0
  %1396 = vmatmul.mubr.bf16.gmra.mrb[0].mxu0 %v1220
  %v1397 = vpop.f32.mrb[0].mxu0
  %v1398 = vadd.f32 0.0, %v1397
  %v1399 = vpop.f32.mrb[0].mxu0
  %v1400 = vpop.f32.mrb[0].mxu0
  %v1401 = vadd.f32 0.0, %v1400
  %v1402 = vpop.f32.mrb[0].mxu0
  %1403 = vmatprep.mubr.bf16.mxu0 0
  %1404 = vmatmul.mubr.bf16.gmra.mrb[0].mxu0 %v1221
  %v1405 = vpop.f32.mrb[0].mxu0
  %v1406 = vadd.f32 0.0, %v1405
  %v1407 = vpop.f32.mrb[0].mxu0
  %v1408 = vpop.f32.mrb[0].mxu0
  %v1409 = vadd.f32 0.0, %v1408
  %v1410 = vpop.f32.mrb[0].mxu0
  %1411 = vmatprep.mubr.bf16.mxu0 0
  %1412 = vmatmul.mubr.bf16.gmra.mrb[0].mxu0 %v1222
  %v1413 = vpop.f32.mrb[0].mxu0
  %v1414 = vadd.f32 0.0, %v1413
  %v1415 = vpop.f32.mrb[0].mxu0
  %v1416 = vpop.f32.mrb[0].mxu0
  %v1417 = vadd.f32 0.0, %v1416
  %v1418 = vpop.f32.mrb[0].mxu0
  %1419 = vmatprep.mubr.bf16.mxu0 0
  %1420 = vmatmul.mubr.bf16.gmra.mrb[0].mxu0 %v1223
  %v1421 = vpop.f32.mrb[0].mxu0
  %v1422 = vadd.f32 0.0, %v1421
  %v1423 = vpop.f32.mrb[0].mxu0
  %v1424 = vpop.f32.mrb[0].mxu0
  %v1425 = vadd.f32 0.0, %v1424
  %v1426 = vpop.f32.mrb[0].mxu0
  %1427 = vmatprep.mubr.bf16.mxu0 0
  %1428 = vmatmul.mubr.bf16.gmra.mrb[0].mxu0 %v1224
  %v1429 = vpop.f32.mrb[0].mxu0
  %v1430 = vadd.f32 0.0, %v1429
  %v1431 = vpop.f32.mrb[0].mxu0
  %v1432 = vpop.f32.mrb[0].mxu0
  %v1433 = vadd.f32 0.0, %v1432
  %v1434 = vpop.f32.mrb[0].mxu0
  %1435 = vmatprep.mubr.bf16.mxu0 0
  %1436 = vmatmul.mubr.bf16.gmra.mrb[0].mxu0 %v1225
  %v1437 = vpop.f32.mrb[0].mxu0
  %v1438 = vadd.f32 0.0, %v1437
  %v1439 = vpop.f32.mrb[0].mxu0
  %v1440 = vpop.f32.mrb[0].mxu0
  %v1441 = vadd.f32 0.0, %v1440
  %v1442 = vpop.f32.mrb[0].mxu0
  %1443 = vmatprep.mubr.bf16.mxu0 0
  %1444 = vmatmul.mubr.bf16.gmra.mrb[0].mxu0 %v1226
  %v1445 = vpop.f32.mrb[0].mxu0
  %v1446 = vadd.f32 0.0, %v1445
  %v1447 = vpop.f32.mrb[0].mxu0
  %v1448 = vpop.f32.mrb[0].mxu0
  %v1449 = vadd.f32 0.0, %v1448
  %v1450 = vpop.f32.mrb[0].mxu0
  %1451 = vdwg.mxu0
  %v1452 = vlaneseq
  %v1453 = vand.u32 %v1452, 127
  %v1454 = vld [vmem:[%s6] sm:$0xff]
  %v1455 = vld [vmem:[%s6 + $0x8] sm:$0xff]
  %v1456 = vld [vmem:[%s6 + $0x10] sm:$0xff]
  %v1457 = vld [vmem:[%s6 + $0x18] sm:$0xff]
  %v1458 = vld [vmem:[%s6 + $0x20] sm:$0xff]
  %v1459 = vld [vmem:[%s6 + $0x28] sm:$0xff]
  %v1460 = vld [vmem:[%s6 + $0x30] sm:$0xff]
  %v1461 = vld [vmem:[%s6 + $0x38] sm:$0xff]
  %v1462 = vld [vmem:[%s6 + $0x40] sm:$0xff]
  %v1463 = vld [vmem:[%s6 + $0x48] sm:$0xff]
  %v1464 = vld [vmem:[%s6 + $0x50] sm:$0xff]
  %v1465 = vld [vmem:[%s6 + $0x58] sm:$0xff]
  %v1466 = vld [vmem:[%s6 + $0x60] sm:$0xff]
  %v1467 = vld [vmem:[%s6 + $0x68] sm:$0xff]
  %v1468 = vld [vmem:[%s6 + $0x70] sm:$0xff]
  %v1469 = vld [vmem:[%s6 + $0x78] sm:$0xff]
  %v1470 = vld [vmem:[%s6 + $0x80] sm:$0xff]
  %v1471 = vld [vmem:[%s6 + $0x88] sm:$0xff]
  %v1472 = vld [vmem:[%s6 + $0x90] sm:$0xff]
  %v1473 = vld [vmem:[%s6 + $0x98] sm:$0xff]
  %v1474 = vld [vmem:[%s6 + $0xa0] sm:$0xff]
  %v1475 = vld [vmem:[%s6 + $0xa8] sm:$0xff]
  %v1476 = vld [vmem:[%s6 + $0xb0] sm:$0xff]
  %v1477 = vld [vmem:[%s6 + $0xb8] sm:$0xff]
  %v1478 = vld [vmem:[%s6 + $0xc0] sm:$0xff]
  %v1479 = vld [vmem:[%s6 + $0xc8] sm:$0xff]
  %v1480 = vld [vmem:[%s6 + $0xd0] sm:$0xff]
  %v1481 = vld [vmem:[%s6 + $0xd8] sm:$0xff]
  %v1482 = vld [vmem:[%s6 + $0xe0] sm:$0xff]
  %v1483 = vld [vmem:[%s6 + $0xe8] sm:$0xff]
  %v1484 = vld [vmem:[%s6 + $0xf0] sm:$0xff]
  %v1485 = vld [vmem:[%s6 + $0xf8] sm:$0xff]
  %1486 = vset.pattern.permute.xlu0 0
  %1487 = vperm.xlu0 %1486, %v1454
  %v1488 = vpop.permute.xlu0 %1487
  %1489 = vset.pattern.permute.xlu0 0
  %1490 = vperm.xlu0 %1489, %v1455
  %v1491 = vpop.permute.xlu0 %1490
  %1492 = vset.pattern.permute.xlu0 0
  %1493 = vperm.xlu0 %1492, %v1456
  %v1494 = vpop.permute.xlu0 %1493
  %1495 = vset.pattern.permute.xlu0 0
  %1496 = vperm.xlu0 %1495, %v1457
  %v1497 = vpop.permute.xlu0 %1496
  %1498 = vset.pattern.permute.xlu0 0
  %1499 = vperm.xlu0 %1498, %v1458
  %v1500 = vpop.permute.xlu0 %1499
  %1501 = vset.pattern.permute.xlu0 0
  %1502 = vperm.xlu0 %1501, %v1459
  %v1503 = vpop.permute.xlu0 %1502
  %1504 = vset.pattern.permute.xlu0 0
  %1505 = vperm.xlu0 %1504, %v1460
  %v1506 = vpop.permute.xlu0 %1505
  %1507 = vset.pattern.permute.xlu0 0
  %1508 = vperm.xlu0 %1507, %v1461
  %v1509 = vpop.permute.xlu0 %1508
  %1510 = vset.pattern.permute.xlu0 0
  %1511 = vperm.xlu0 %1510, %v1462
  %v1512 = vpop.permute.xlu0 %1511
  %1513 = vset.pattern.permute.xlu0 0
  %1514 = vperm.xlu0 %1513, %v1463
  %v1515 = vpop.permute.xlu0 %1514
  %1516 = vset.pattern.permute.xlu0 0
  %1517 = vperm.xlu0 %1516, %v1464
  %v1518 = vpop.permute.xlu0 %1517
  %1519 = vset.pattern.permute.xlu0 0
  %1520 = vperm.xlu0 %1519, %v1465
  %v1521 = vpop.permute.xlu0 %1520
  %1522 = vset.pattern.permute.xlu0 0
  %1523 = vperm.xlu0 %1522, %v1466
  %v1524 = vpop.permute.xlu0 %1523
  %1525 = vset.pattern.permute.xlu0 0
  %1526 = vperm.xlu0 %1525, %v1467
  %v1527 = vpop.permute.xlu0 %1526
  %1528 = vset.pattern.permute.xlu0 0
  %1529 = vperm.xlu0 %1528, %v1468
  %v1530 = vpop.permute.xlu0 %1529
  %1531 = vset.pattern.permute.xlu0 0
  %1532 = vperm.xlu0 %1531, %v1469
  %v1533 = vpop.permute.xlu0 %1532
  %1534 = vset.pattern.permute.xlu0 0
  %1535 = vperm.xlu0 %1534, %v1470
  %v1536 = vpop.permute.xlu0 %1535
  %1537 = vset.pattern.permute.xlu0 0
  %1538 = vperm.xlu0 %1537, %v1471
  %v1539 = vpop.permute.xlu0 %1538
  %1540 = vset.pattern.permute.xlu0 0
  %1541 = vperm.xlu0 %1540, %v1472
  %v1542 = vpop.permute.xlu0 %1541
  %1543 = vset.pattern.permute.xlu0 0
  %1544 = vperm.xlu0 %1543, %v1473
  %v1545 = vpop.permute.xlu0 %1544
  %1546 = vset.pattern.permute.xlu0 0
  %1547 = vperm.xlu0 %1546, %v1474
  %v1548 = vpop.permute.xlu0 %1547
  %1549 = vset.pattern.permute.xlu0 0
  %1550 = vperm.xlu0 %1549, %v1475
  %v1551 = vpop.permute.xlu0 %1550
  %1552 = vset.pattern.permute.xlu0 0
  %1553 = vperm.xlu0 %1552, %v1476
  %v1554 = vpop.permute.xlu0 %1553
  %1555 = vset.pattern.permute.xlu0 0
  %1556 = vperm.xlu0 %1555, %v1477
  %v1557 = vpop.permute.xlu0 %1556
  %1558 = vset.pattern.permute.xlu0 0
  %1559 = vperm.xlu0 %1558, %v1478
  %v1560 = vpop.permute.xlu0 %1559
  %1561 = vset.pattern.permute.xlu0 0
  %1562 = vperm.xlu0 %1561, %v1479
  %v1563 = vpop.permute.xlu0 %1562
  %1564 = vset.pattern.permute.xlu0 0
  %1565 = vperm.xlu0 %1564, %v1480
  %v1566 = vpop.permute.xlu0 %1565
  %1567 = vset.pattern.permute.xlu0 0
  %1568 = vperm.xlu0 %1567, %v1481
  %v1569 = vpop.permute.xlu0 %1568
  %1570 = vset.pattern.permute.xlu0 0
  %1571 = vperm.xlu0 %1570, %v1482
  %v1572 = vpop.permute.xlu0 %1571
  %1573 = vset.pattern.permute.xlu0 0
  %1574 = vperm.xlu0 %1573, %v1483
  %v1575 = vpop.permute.xlu0 %1574
  %1576 = vset.pattern.permute.xlu0 0
  %1577 = vperm.xlu0 %1576, %v1484
  %v1578 = vpop.permute.xlu0 %1577
  %1579 = vset.pattern.permute.xlu0 0
  %1580 = vperm.xlu0 %1579, %v1485
  %v1581 = vpop.permute.xlu0 %1580
  %vm1582 = vcmp.eq.s32.totalorder %v1488, %v1453
  %vm1583 = vcmp.eq.s32.totalorder %v1491, %v1453
  %vm1584 = vcmp.eq.s32.totalorder %v1494, %v1453
  %vm1585 = vcmp.eq.s32.totalorder %v1497, %v1453
  %vm1586 = vcmp.eq.s32.totalorder %v1500, %v1453
  %vm1587 = vcmp.eq.s32.totalorder %v1503, %v1453
  %vm1588 = vcmp.eq.s32.totalorder %v1506, %v1453
  %vm1589 = vcmp.eq.s32.totalorder %v1509, %v1453
  %vm1590 = vcmp.eq.s32.totalorder %v1512, %v1453
  %vm1591 = vcmp.eq.s32.totalorder %v1515, %v1453
  %vm1592 = vcmp.eq.s32.totalorder %v1518, %v1453
  %vm1593 = vcmp.eq.s32.totalorder %v1521, %v1453
  %vm1594 = vcmp.eq.s32.totalorder %v1524, %v1453
  %vm1595 = vcmp.eq.s32.totalorder %v1527, %v1453
  %vm1596 = vcmp.eq.s32.totalorder %v1530, %v1453
  %vm1597 = vcmp.eq.s32.totalorder %v1533, %v1453
  %vm1598 = vcmp.eq.s32.totalorder %v1536, %v1453
  %vm1599 = vcmp.eq.s32.totalorder %v1539, %v1453
  %vm1600 = vcmp.eq.s32.totalorder %v1542, %v1453
  %vm1601 = vcmp.eq.s32.totalorder %v1545, %v1453
  %vm1602 = vcmp.eq.s32.totalorder %v1548, %v1453
  %vm1603 = vcmp.eq.s32.totalorder %v1551, %v1453
  %vm1604 = vcmp.eq.s32.totalorder %v1554, %v1453
  %vm1605 = vcmp.eq.s32.totalorder %v1557, %v1453
  %vm1606 = vcmp.eq.s32.totalorder %v1560, %v1453
  %vm1607 = vcmp.eq.s32.totalorder %v1563, %v1453
  %vm1608 = vcmp.eq.s32.totalorder %v1566, %v1453
  %vm1609 = vcmp.eq.s32.totalorder %v1569, %v1453
  %vm1610 = vcmp.eq.s32.totalorder %v1572, %v1453
  %vm1611 = vcmp.eq.s32.totalorder %v1575, %v1453
  %vm1612 = vcmp.eq.s32.totalorder %v1578, %v1453
  %vm1613 = vcmp.eq.s32.totalorder %v1581, %v1453
  %v1614 = vsel %vm1582, 1, 0
  %v1615 = vsel %vm1583, 1, 0
  %v1616 = vsel %vm1584, 1, 0
  %v1617 = vsel %vm1585, 1, 0
  %v1618 = vsel %vm1586, 1, 0
  %v1619 = vsel %vm1587, 1, 0
  %v1620 = vsel %vm1588, 1, 0
  %v1621 = vsel %vm1589, 1, 0
  %v1622 = vsel %vm1590, 1, 0
  %v1623 = vsel %vm1591, 1, 0
  %v1624 = vsel %vm1592, 1, 0
  %v1625 = vsel %vm1593, 1, 0
  %v1626 = vsel %vm1594, 1, 0
  %v1627 = vsel %vm1595, 1, 0
  %v1628 = vsel %vm1596, 1, 0
  %v1629 = vsel %vm1597, 1, 0
  %v1630 = vsel %vm1598, 1, 0
  %v1631 = vsel %vm1599, 1, 0
  %v1632 = vsel %vm1600, 1, 0
  %v1633 = vsel %vm1601, 1, 0
  %v1634 = vsel %vm1602, 1, 0
  %v1635 = vsel %vm1603, 1, 0
  %v1636 = vsel %vm1604, 1, 0
  %v1637 = vsel %vm1605, 1, 0
  %v1638 = vsel %vm1606, 1, 0
  %v1639 = vsel %vm1607, 1, 0
  %v1640 = vsel %vm1608, 1, 0
  %v1641 = vsel %vm1609, 1, 0
  %v1642 = vsel %vm1610, 1, 0
  %v1643 = vsel %vm1611, 1, 0
  %v1644 = vsel %vm1612, 1, 0
  %v1645 = vsel %vm1613, 1, 0
  %v1646 = vcvt.s32.f32 %v1614
  %v1647 = vcvt.s32.f32 %v1615
  %v1648 = vcvt.s32.f32 %v1616
  %v1649 = vcvt.s32.f32 %v1617
  %v1650 = vcvt.s32.f32 %v1618
  %v1651 = vcvt.s32.f32 %v1619
  %v1652 = vcvt.s32.f32 %v1620
  %v1653 = vcvt.s32.f32 %v1621
  %v1654 = vcvt.s32.f32 %v1622
  %v1655 = vcvt.s32.f32 %v1623
  %v1656 = vcvt.s32.f32 %v1624
  %v1657 = vcvt.s32.f32 %v1625
  %v1658 = vcvt.s32.f32 %v1626
  %v1659 = vcvt.s32.f32 %v1627
  %v1660 = vcvt.s32.f32 %v1628
  %v1661 = vcvt.s32.f32 %v1629
  %v1662 = vcvt.s32.f32 %v1630
  %v1663 = vcvt.s32.f32 %v1631
  %v1664 = vcvt.s32.f32 %v1632
  %v1665 = vcvt.s32.f32 %v1633
  %v1666 = vcvt.s32.f32 %v1634
  %v1667 = vcvt.s32.f32 %v1635
  %v1668 = vcvt.s32.f32 %v1636
  %v1669 = vcvt.s32.f32 %v1637
  %v1670 = vcvt.s32.f32 %v1638
  %v1671 = vcvt.s32.f32 %v1639
  %v1672 = vcvt.s32.f32 %v1640
  %v1673 = vcvt.s32.f32 %v1641
  %v1674 = vcvt.s32.f32 %v1642
  %v1675 = vcvt.s32.f32 %v1643
  %v1676 = vcvt.s32.f32 %v1644
  %v1677 = vcvt.s32.f32 %v1645
  %v1678 = vpack.c.bf16 %v1647, %v1646
  %v1679 = vpack.c.bf16 %v1649, %v1648
  %v1680 = vpack.c.bf16 %v1651, %v1650
  %v1681 = vpack.c.bf16 %v1653, %v1652
  %v1682 = vpack.c.bf16 %v1655, %v1654
  %v1683 = vpack.c.bf16 %v1657, %v1656
  %v1684 = vpack.c.bf16 %v1659, %v1658
  %v1685 = vpack.c.bf16 %v1661, %v1660
  %v1686 = vpack.c.bf16 %v1663, %v1662
  %v1687 = vpack.c.bf16 %v1665, %v1664
  %v1688 = vpack.c.bf16 %v1667, %v1666
  %v1689 = vpack.c.bf16 %v1669, %v1668
  %v1690 = vpack.c.bf16 %v1671, %v1670
  %v1691 = vpack.c.bf16 %v1673, %v1672
  %v1692 = vpack.c.bf16 %v1675, %v1674
  %v1693 = vpack.c.bf16 %v1677, %v1676
  %v1694 = vld [vmem:[%s7] sm:$0xff]
  %v1695 = vld [vmem:[%s7 + $0x8] sm:$0xff]
  %v1696 = vld [vmem:[%s7 + $0x10] sm:$0xff]
  %v1697 = vld [vmem:[%s7 + $0x18] sm:$0xff]
  %v1698 = vld [vmem:[%s7 + $0x20] sm:$0xff]
  %v1699 = vld [vmem:[%s7 + $0x28] sm:$0xff]
  %v1700 = vld [vmem:[%s7 + $0x30] sm:$0xff]
  %v1701 = vld [vmem:[%s7 + $0x38] sm:$0xff]
  %v1702 = vld [vmem:[%s7 + $0x40] sm:$0xff]
  %v1703 = vld [vmem:[%s7 + $0x48] sm:$0xff]
  %v1704 = vld [vmem:[%s7 + $0x50] sm:$0xff]
  %v1705 = vld [vmem:[%s7 + $0x58] sm:$0xff]
  %v1706 = vld [vmem:[%s7 + $0x60] sm:$0xff]
  %v1707 = vld [vmem:[%s7 + $0x68] sm:$0xff]
  %v1708 = vld [vmem:[%s7 + $0x70] sm:$0xff]
  %v1709 = vld [vmem:[%s7 + $0x78] sm:$0xff]
  %v1710 = vld [vmem:[%s7 + $0x80] sm:$0xff]
  %v1711 = vld [vmem:[%s7 + $0x88] sm:$0xff]
  %v1712 = vld [vmem:[%s7 + $0x90] sm:$0xff]
  %v1713 = vld [vmem:[%s7 + $0x98] sm:$0xff]
  %v1714 = vld [vmem:[%s7 + $0xa0] sm:$0xff]
  %v1715 = vld [vmem:[%s7 + $0xa8] sm:$0xff]
  %v1716 = vld [vmem:[%s7 + $0xb0] sm:$0xff]
  %v1717 = vld [vmem:[%s7 + $0xb8] sm:$0xff]
  %v1718 = vld [vmem:[%s7 + $0xc0] sm:$0xff]
  %v1719 = vld [vmem:[%s7 + $0xc8] sm:$0xff]
  %v1720 = vld [vmem:[%s7 + $0xd0] sm:$0xff]
  %v1721 = vld [vmem:[%s7 + $0xd8] sm:$0xff]
  %v1722 = vld [vmem:[%s7 + $0xe0] sm:$0xff]
  %v1723 = vld [vmem:[%s7 + $0xe8] sm:$0xff]
  %v1724 = vld [vmem:[%s7 + $0xf0] sm:$0xff]
  %v1725 = vld [vmem:[%s7 + $0xf8] sm:$0xff]
  %1726 = vset.pattern.permute.xlu0 0
  %1727 = vperm.xlu0 %1726, %v1694
  %v1728 = vpop.permute.xlu0 %1727
  %1729 = vset.pattern.permute.xlu0 0
  %1730 = vperm.xlu0 %1729, %v1695
  %v1731 = vpop.permute.xlu0 %1730
  %1732 = vset.pattern.permute.xlu0 0
  %1733 = vperm.xlu0 %1732, %v1696
  %v1734 = vpop.permute.xlu0 %1733
  %1735 = vset.pattern.permute.xlu0 0
  %1736 = vperm.xlu0 %1735, %v1697
  %v1737 = vpop.permute.xlu0 %1736
  %1738 = vset.pattern.permute.xlu0 0
  %1739 = vperm.xlu0 %1738, %v1698
  %v1740 = vpop.permute.xlu0 %1739
  %1741 = vset.pattern.permute.xlu0 0
  %1742 = vperm.xlu0 %1741, %v1699
  %v1743 = vpop.permute.xlu0 %1742
  %1744 = vset.pattern.permute.xlu0 0
  %1745 = vperm.xlu0 %1744, %v1700
  %v1746 = vpop.permute.xlu0 %1745
  %1747 = vset.pattern.permute.xlu0 0
  %1748 = vperm.xlu0 %1747, %v1701
  %v1749 = vpop.permute.xlu0 %1748
  %1750 = vset.pattern.permute.xlu0 0
  %1751 = vperm.xlu0 %1750, %v1702
  %v1752 = vpop.permute.xlu0 %1751
  %1753 = vset.pattern.permute.xlu0 0
  %1754 = vperm.xlu0 %1753, %v1703
  %v1755 = vpop.permute.xlu0 %1754
  %1756 = vset.pattern.permute.xlu0 0
  %1757 = vperm.xlu0 %1756, %v1704
  %v1758 = vpop.permute.xlu0 %1757
  %1759 = vset.pattern.permute.xlu0 0
  %1760 = vperm.xlu0 %1759, %v1705
  %v1761 = vpop.permute.xlu0 %1760
  %1762 = vset.pattern.permute.xlu0 0
  %1763 = vperm.xlu0 %1762, %v1706
  %v1764 = vpop.permute.xlu0 %1763
  %1765 = vset.pattern.permute.xlu0 0
  %1766 = vperm.xlu0 %1765, %v1707
  %v1767 = vpop.permute.xlu0 %1766
  %1768 = vset.pattern.permute.xlu0 0
  %1769 = vperm.xlu0 %1768, %v1708
  %v1770 = vpop.permute.xlu0 %1769
  %1771 = vset.pattern.permute.xlu0 0
  %1772 = vperm.xlu0 %1771, %v1709
  %v1773 = vpop.permute.xlu0 %1772
  %1774 = vset.pattern.permute.xlu0 0
  %1775 = vperm.xlu0 %1774, %v1710
  %v1776 = vpop.permute.xlu0 %1775
  %1777 = vset.pattern.permute.xlu0 0
  %1778 = vperm.xlu0 %1777, %v1711
  %v1779 = vpop.permute.xlu0 %1778
  %1780 = vset.pattern.permute.xlu0 0
  %1781 = vperm.xlu0 %1780, %v1712
  %v1782 = vpop.permute.xlu0 %1781
  %1783 = vset.pattern.permute.xlu0 0
  %1784 = vperm.xlu0 %1783, %v1713
  %v1785 = vpop.permute.xlu0 %1784
  %1786 = vset.pattern.permute.xlu0 0
  %1787 = vperm.xlu0 %1786, %v1714
  %v1788 = vpop.permute.xlu0 %1787
  %1789 = vset.pattern.permute.xlu0 0
  %1790 = vperm.xlu0 %1789, %v1715
  %v1791 = vpop.permute.xlu0 %1790
  %1792 = vset.pattern.permute.xlu0 0
  %1793 = vperm.xlu0 %1792, %v1716
  %v1794 = vpop.permute.xlu0 %1793
  %1795 = vset.pattern.permute.xlu0 0
  %1796 = vperm.xlu0 %1795, %v1717
  %v1797 = vpop.permute.xlu0 %1796
  %1798 = vset.pattern.permute.xlu0 0
  %1799 = vperm.xlu0 %1798, %v1718
  %v1800 = vpop.permute.xlu0 %1799
  %1801 = vset.pattern.permute.xlu0 0
  %1802 = vperm.xlu0 %1801, %v1719
  %v1803 = vpop.permute.xlu0 %1802
  %1804 = vset.pattern.permute.xlu0 0
  %1805 = vperm.xlu0 %1804, %v1720
  %v1806 = vpop.permute.xlu0 %1805
  %1807 = vset.pattern.permute.xlu0 0
  %1808 = vperm.xlu0 %1807, %v1721
  %v1809 = vpop.permute.xlu0 %1808
  %1810 = vset.pattern.permute.xlu0 0
  %1811 = vperm.xlu0 %1810, %v1722
  %v1812 = vpop.permute.xlu0 %1811
  %1813 = vset.pattern.permute.xlu0 0
  %1814 = vperm.xlu0 %1813, %v1723
  %v1815 = vpop.permute.xlu0 %1814
  %1816 = vset.pattern.permute.xlu0 0
  %1817 = vperm.xlu0 %1816, %v1724
  %v1818 = vpop.permute.xlu0 %1817
  %1819 = vset.pattern.permute.xlu0 0
  %1820 = vperm.xlu0 %1819, %v1725
  %v1821 = vpop.permute.xlu0 %1820
  %vm1822 = vcmp.eq.s32.totalorder %v1728, %v1453
  %vm1823 = vcmp.eq.s32.totalorder %v1731, %v1453
  %vm1824 = vcmp.eq.s32.totalorder %v1734, %v1453
  %vm1825 = vcmp.eq.s32.totalorder %v1737, %v1453
  %vm1826 = vcmp.eq.s32.totalorder %v1740, %v1453
  %vm1827 = vcmp.eq.s32.totalorder %v1743, %v1453
  %vm1828 = vcmp.eq.s32.totalorder %v1746, %v1453
  %vm1829 = vcmp.eq.s32.totalorder %v1749, %v1453
  %vm1830 = vcmp.eq.s32.totalorder %v1752, %v1453
  %vm1831 = vcmp.eq.s32.totalorder %v1755, %v1453
  %vm1832 = vcmp.eq.s32.totalorder %v1758, %v1453
  %vm1833 = vcmp.eq.s32.totalorder %v1761, %v1453
  %vm1834 = vcmp.eq.s32.totalorder %v1764, %v1453
  %vm1835 = vcmp.eq.s32.totalorder %v1767, %v1453
  %vm1836 = vcmp.eq.s32.totalorder %v1770, %v1453
  %vm1837 = vcmp.eq.s32.totalorder %v1773, %v1453
  %vm1838 = vcmp.eq.s32.totalorder %v1776, %v1453
  %vm1839 = vcmp.eq.s32.totalorder %v1779, %v1453
  %vm1840 = vcmp.eq.s32.totalorder %v1782, %v1453
  %vm1841 = vcmp.eq.s32.totalorder %v1785, %v1453
  %vm1842 = vcmp.eq.s32.totalorder %v1788, %v1453
  %vm1843 = vcmp.eq.s32.totalorder %v1791, %v1453
  %vm1844 = vcmp.eq.s32.totalorder %v1794, %v1453
  %vm1845 = vcmp.eq.s32.totalorder %v1797, %v1453
  %vm1846 = vcmp.eq.s32.totalorder %v1800, %v1453
  %vm1847 = vcmp.eq.s32.totalorder %v1803, %v1453
  %vm1848 = vcmp.eq.s32.totalorder %v1806, %v1453
  %vm1849 = vcmp.eq.s32.totalorder %v1809, %v1453
  %vm1850 = vcmp.eq.s32.totalorder %v1812, %v1453
  %vm1851 = vcmp.eq.s32.totalorder %v1815, %v1453
  %vm1852 = vcmp.eq.s32.totalorder %v1818, %v1453
  %vm1853 = vcmp.eq.s32.totalorder %v1821, %v1453
  %v1854 = vsel %vm1822, 1, 0
  %v1855 = vsel %vm1823, 1, 0
  %v1856 = vsel %vm1824, 1, 0
  %v1857 = vsel %vm1825, 1, 0
  %v1858 = vsel %vm1826, 1, 0
  %v1859 = vsel %vm1827, 1, 0
  %v1860 = vsel %vm1828, 1, 0
  %v1861 = vsel %vm1829, 1, 0
  %v1862 = vsel %vm1830, 1, 0
  %v1863 = vsel %vm1831, 1, 0
  %v1864 = vsel %vm1832, 1, 0
  %v1865 = vsel %vm1833, 1, 0
  %v1866 = vsel %vm1834, 1, 0
  %v1867 = vsel %vm1835, 1, 0
  %v1868 = vsel %vm1836, 1, 0
  %v1869 = vsel %vm1837, 1, 0
  %v1870 = vsel %vm1838, 1, 0
  %v1871 = vsel %vm1839, 1, 0
  %v1872 = vsel %vm1840, 1, 0
  %v1873 = vsel %vm1841, 1, 0
  %v1874 = vsel %vm1842, 1, 0
  %v1875 = vsel %vm1843, 1, 0
  %v1876 = vsel %vm1844, 1, 0
  %v1877 = vsel %vm1845, 1, 0
  %v1878 = vsel %vm1846, 1, 0
  %v1879 = vsel %vm1847, 1, 0
  %v1880 = vsel %vm1848, 1, 0
  %v1881 = vsel %vm1849, 1, 0
  %v1882 = vsel %vm1850, 1, 0
  %v1883 = vsel %vm1851, 1, 0
  %v1884 = vsel %vm1852, 1, 0
  %v1885 = vsel %vm1853, 1, 0
  %v1886 = vcvt.s32.f32 %v1854
  %v1887 = vcvt.s32.f32 %v1855
  %v1888 = vcvt.s32.f32 %v1856
  %v1889 = vcvt.s32.f32 %v1857
  %v1890 = vcvt.s32.f32 %v1858
  %v1891 = vcvt.s32.f32 %v1859
  %v1892 = vcvt.s32.f32 %v1860
  %v1893 = vcvt.s32.f32 %v1861
  %v1894 = vcvt.s32.f32 %v1862
  %v1895 = vcvt.s32.f32 %v1863
  %v1896 = vcvt.s32.f32 %v1864
  %v1897 = vcvt.s32.f32 %v1865
  %v1898 = vcvt.s32.f32 %v1866
  %v1899 = vcvt.s32.f32 %v1867
  %v1900 = vcvt.s32.f32 %v1868
  %v1901 = vcvt.s32.f32 %v1869
  %v1902 = vcvt.s32.f32 %v1870
  %v1903 = vcvt.s32.f32 %v1871
  %v1904 = vcvt.s32.f32 %v1872
  %v1905 = vcvt.s32.f32 %v1873
  %v1906 = vcvt.s32.f32 %v1874
  %v1907 = vcvt.s32.f32 %v1875
  %v1908 = vcvt.s32.f32 %v1876
  %v1909 = vcvt.s32.f32 %v1877
  %v1910 = vcvt.s32.f32 %v1878
  %v1911 = vcvt.s32.f32 %v1879
  %v1912 = vcvt.s32.f32 %v1880
  %v1913 = vcvt.s32.f32 %v1881
  %v1914 = vcvt.s32.f32 %v1882
  %v1915 = vcvt.s32.f32 %v1883
  %v1916 = vcvt.s32.f32 %v1884
  %v1917 = vcvt.s32.f32 %v1885
  %v1918 = vpack.c.bf16 %v1887, %v1886
  %v1919 = vpack.c.bf16 %v1889, %v1888
  %v1920 = vpack.c.bf16 %v1891, %v1890
  %v1921 = vpack.c.bf16 %v1893, %v1892
  %v1922 = vpack.c.bf16 %v1895, %v1894
  %v1923 = vpack.c.bf16 %v1897, %v1896
  %v1924 = vpack.c.bf16 %v1899, %v1898
  %v1925 = vpack.c.bf16 %v1901, %v1900
  %v1926 = vpack.c.bf16 %v1903, %v1902
  %v1927 = vpack.c.bf16 %v1905, %v1904
  %v1928 = vpack.c.bf16 %v1907, %v1906
  %v1929 = vpack.c.bf16 %v1909, %v1908
  %v1930 = vpack.c.bf16 %v1911, %v1910
  %v1931 = vpack.c.bf16 %v1913, %v1912
  %v1932 = vpack.c.bf16 %v1915, %v1914
  %v1933 = vpack.c.bf16 %v1917, %v1916
  %v1934 = vld [vmem:[%s5] sm:$0xf]
  %v1935 = vld [vmem:[%s5 + $0x4] sm:$0xf]
  %v1936 = vld [vmem:[%s5 + $0x8] sm:$0xf]
  %v1937 = vld [vmem:[%s5 + $0xc] sm:$0xf]
  %v1938 = vld [vmem:[%s5 + $0x10] sm:$0xf]
  %v1939 = vld [vmem:[%s5 + $0x14] sm:$0xf]
  %v1940 = vld [vmem:[%s5 + $0x18] sm:$0xf]
  %v1941 = vld [vmem:[%s5 + $0x1c] sm:$0xf]
  %v1950 = vunpack.c.l.b16 %v1934
  %v1951 = vunpack.c.l.b16 %v1935
  %v1952 = vunpack.c.l.b16 %v1936
  %v1953 = vunpack.c.l.b16 %v1937
  %v1954 = vunpack.c.l.b16 %v1938
  %v1955 = vunpack.c.l.b16 %v1939
  %v1956 = vunpack.c.l.b16 %v1940
  %v1957 = vunpack.c.l.b16 %v1941
  %v1958 = vpack.c.b16 %v1951, %v1950
  %v1959 = vpack.c.b16 %v1953, %v1952
  %v1960 = vpack.c.b16 %v1955, %v1954
  %v1961 = vpack.c.b16 %v1957, %v1956
  %vm1966 = vcmask 523264
  %v1968 = vsel %vm1966, %v1678, 0
  %v1971 = vsel %vm1966, %v1679, 0
  %v1974 = vsel %vm1966, %v1680, 0
  %v1977 = vsel %vm1966, %v1681, 0
  %v1980 = vsel %vm1966, %v1682, 0
  %v1983 = vsel %vm1966, %v1683, 0
  %v1986 = vsel %vm1966, %v1684, 0
  %v1989 = vsel %vm1966, %v1685, 0
  %v1992 = vsel %vm1966, %v1686, 0
  %v1995 = vsel %vm1966, %v1687, 0
  %v1998 = vsel %vm1966, %v1688, 0
  %v2001 = vsel %vm1966, %v1689, 0
  %v2004 = vsel %vm1966, %v1690, 0
  %v2007 = vsel %vm1966, %v1691, 0
  %v2010 = vsel %vm1966, %v1692, 0
  %v2013 = vsel %vm1966, %v1693, 0
  %2015 = vmatprep.subr.bf16.mxu0 0
  %2016 = vmatpush1.bf16.msra.mxu0 %v1958
  %2017 = vmatprep.subr.bf16.mxu0 0
  %2018 = vmatpush1.bf16.msra.mxu0 %v1959
  %2019 = vmatprep.subr.bf16.mxu0 0
  %2020 = vmatpush1.bf16.msra.mxu0 %v1960
  %2021 = vmatprep.subr.bf16.mxu0 0
  %2022 = vmatpush1.bf16.msra.mxu0 %v1961
  %2023 = vmatprep.subr.bf16.mxu0 0
  %2024 = vmatpush1.bf16.msra.mxu0 0
  %2025 = vmatprep.subr.bf16.mxu0 0
  %2026 = vmatpush1.bf16.msra.mxu0 0
  %2027 = vmatprep.subr.bf16.mxu0 0
  %2028 = vmatpush1.bf16.msra.mxu0 0
  %2029 = vmatprep.subr.bf16.mxu0 0
  %2030 = vmatpush1.bf16.msra.mxu0 0
  %2031 = vmatprep.subr.bf16.mxu0 0
  %2032 = vmatpush1.bf16.msra.mxu0 0
  %2033 = vmatprep.subr.bf16.mxu0 0
  %2034 = vmatpush1.bf16.msra.mxu0 0
  %2035 = vmatprep.subr.bf16.mxu0 0
  %2036 = vmatpush1.bf16.msra.mxu0 0
  %2037 = vmatprep.subr.bf16.mxu0 0
  %2038 = vmatpush1.bf16.msra.mxu0 0
  %2039 = vmatprep.subr.bf16.mxu0 0
  %2040 = vmatpush1.bf16.msra.mxu0 0
  %2041 = vmatprep.subr.bf16.mxu0 0
  %2042 = vmatpush1.bf16.msra.mxu0 0
  %2043 = vmatprep.subr.bf16.mxu0 0
  %2044 = vmatpush1.bf16.msra.mxu0 0
  %2045 = vmatprep.subr.bf16.mxu0 0
  %2046 = vmatpush1.bf16.msra.mxu0 0
  %2047 = vmatprep.mubr.bf16.mxu0 0
  %2048 = vmatmul.mubr.bf16.gmra.mrb[0].mxu0 %v1968
  %v2049 = vpop.f32.mrb[0].mxu0
  %v2050 = vadd.f32 0.0, %v2049
  %v2051 = vpop.f32.mrb[0].mxu0
  %v2052 = vpop.f32.mrb[0].mxu0
  %v2053 = vadd.f32 0.0, %v2052
  %v2054 = vpop.f32.mrb[0].mxu0
  %2055 = vmatprep.mubr.bf16.mxu0 0
  %2056 = vmatmul.mubr.bf16.gmra.mrb[0].mxu0 %v1971
  %v2057 = vpop.f32.mrb[0].mxu0
  %v2058 = vadd.f32 0.0, %v2057
  %v2059 = vpop.f32.mrb[0].mxu0
  %v2060 = vpop.f32.mrb[0].mxu0
  %v2061 = vadd.f32 0.0, %v2060
  %v2062 = vpop.f32.mrb[0].mxu0
  %2063 = vmatprep.mubr.bf16.mxu0 0
  %2064 = vmatmul.mubr.bf16.gmra.mrb[0].mxu0 %v1974
  %v2065 = vpop.f32.mrb[0].mxu0
  %v2066 = vadd.f32 0.0, %v2065
  %v2067 = vpop.f32.mrb[0].mxu0
  %v2068 = vpop.f32.mrb[0].mxu0
  %v2069 = vadd.f32 0.0, %v2068
  %v2070 = vpop.f32.mrb[0].mxu0
  %2071 = vmatprep.mubr.bf16.mxu0 0
  %2072 = vmatmul.mubr.bf16.gmra.mrb[0].mxu0 %v1977
  %v2073 = vpop.f32.mrb[0].mxu0
  %v2074 = vadd.f32 0.0, %v2073
  %v2075 = vpop.f32.mrb[0].mxu0
  %v2076 = vpop.f32.mrb[0].mxu0
  %v2077 = vadd.f32 0.0, %v2076
  %v2078 = vpop.f32.mrb[0].mxu0
  %2079 = vmatprep.mubr.bf16.mxu0 0
  %2080 = vmatmul.mubr.bf16.gmra.mrb[0].mxu0 %v1980
  %v2081 = vpop.f32.mrb[0].mxu0
  %v2082 = vadd.f32 0.0, %v2081
  %v2083 = vpop.f32.mrb[0].mxu0
  %v2084 = vpop.f32.mrb[0].mxu0
  %v2085 = vadd.f32 0.0, %v2084
  %v2086 = vpop.f32.mrb[0].mxu0
  %2087 = vmatprep.mubr.bf16.mxu0 0
  %2088 = vmatmul.mubr.bf16.gmra.mrb[0].mxu0 %v1983
  %v2089 = vpop.f32.mrb[0].mxu0
  %v2090 = vadd.f32 0.0, %v2089
  %v2091 = vpop.f32.mrb[0].mxu0
  %v2092 = vpop.f32.mrb[0].mxu0
  %v2093 = vadd.f32 0.0, %v2092
  %v2094 = vpop.f32.mrb[0].mxu0
  %2095 = vmatprep.mubr.bf16.mxu0 0
  %2096 = vmatmul.mubr.bf16.gmra.mrb[0].mxu0 %v1986
  %v2097 = vpop.f32.mrb[0].mxu0
  %v2098 = vadd.f32 0.0, %v2097
  %v2099 = vpop.f32.mrb[0].mxu0
  %v2100 = vpop.f32.mrb[0].mxu0
  %v2101 = vadd.f32 0.0, %v2100
  %v2102 = vpop.f32.mrb[0].mxu0
  %2103 = vmatprep.mubr.bf16.mxu0 0
  %2104 = vmatmul.mubr.bf16.gmra.mrb[0].mxu0 %v1989
  %v2105 = vpop.f32.mrb[0].mxu0
  %v2106 = vadd.f32 0.0, %v2105
  %v2107 = vpop.f32.mrb[0].mxu0
  %v2108 = vpop.f32.mrb[0].mxu0
  %v2109 = vadd.f32 0.0, %v2108
  %v2110 = vpop.f32.mrb[0].mxu0
  %2111 = vmatprep.mubr.bf16.mxu0 0
  %2112 = vmatmul.mubr.bf16.gmra.mrb[0].mxu0 %v1992
  %v2113 = vpop.f32.mrb[0].mxu0
  %v2114 = vadd.f32 0.0, %v2113
  %v2115 = vpop.f32.mrb[0].mxu0
  %v2116 = vpop.f32.mrb[0].mxu0
  %v2117 = vadd.f32 0.0, %v2116
  %v2118 = vpop.f32.mrb[0].mxu0
  %2119 = vmatprep.mubr.bf16.mxu0 0
  %2120 = vmatmul.mubr.bf16.gmra.mrb[0].mxu0 %v1995
  %v2121 = vpop.f32.mrb[0].mxu0
  %v2122 = vadd.f32 0.0, %v2121
  %v2123 = vpop.f32.mrb[0].mxu0
  %v2124 = vpop.f32.mrb[0].mxu0
  %v2125 = vadd.f32 0.0, %v2124
  %v2126 = vpop.f32.mrb[0].mxu0
  %2127 = vmatprep.mubr.bf16.mxu0 0
  %2128 = vmatmul.mubr.bf16.gmra.mrb[0].mxu0 %v1998
  %v2129 = vpop.f32.mrb[0].mxu0
  %v2130 = vadd.f32 0.0, %v2129
  %v2131 = vpop.f32.mrb[0].mxu0
  %v2132 = vpop.f32.mrb[0].mxu0
  %v2133 = vadd.f32 0.0, %v2132
  %v2134 = vpop.f32.mrb[0].mxu0
  %2135 = vmatprep.mubr.bf16.mxu0 0
  %2136 = vmatmul.mubr.bf16.gmra.mrb[0].mxu0 %v2001
  %v2137 = vpop.f32.mrb[0].mxu0
  %v2138 = vadd.f32 0.0, %v2137
  %v2139 = vpop.f32.mrb[0].mxu0
  %v2140 = vpop.f32.mrb[0].mxu0
  %v2141 = vadd.f32 0.0, %v2140
  %v2142 = vpop.f32.mrb[0].mxu0
  %2143 = vmatprep.mubr.bf16.mxu0 0
  %2144 = vmatmul.mubr.bf16.gmra.mrb[0].mxu0 %v2004
  %v2145 = vpop.f32.mrb[0].mxu0
  %v2146 = vadd.f32 0.0, %v2145
  %v2147 = vpop.f32.mrb[0].mxu0
  %v2148 = vpop.f32.mrb[0].mxu0
  %v2149 = vadd.f32 0.0, %v2148
  %v2150 = vpop.f32.mrb[0].mxu0
  %2151 = vmatprep.mubr.bf16.mxu0 0
  %2152 = vmatmul.mubr.bf16.gmra.mrb[0].mxu0 %v2007
  %v2153 = vpop.f32.mrb[0].mxu0
  %v2154 = vadd.f32 0.0, %v2153
  %v2155 = vpop.f32.mrb[0].mxu0
  %v2156 = vpop.f32.mrb[0].mxu0
  %v2157 = vadd.f32 0.0, %v2156
  %v2158 = vpop.f32.mrb[0].mxu0
  %2159 = vmatprep.mubr.bf16.mxu0 0
  %2160 = vmatmul.mubr.bf16.gmra.mrb[0].mxu0 %v2010
  %v2161 = vpop.f32.mrb[0].mxu0
  %v2162 = vadd.f32 0.0, %v2161
  %v2163 = vpop.f32.mrb[0].mxu0
  %v2164 = vpop.f32.mrb[0].mxu0
  %v2165 = vadd.f32 0.0, %v2164
  %v2166 = vpop.f32.mrb[0].mxu0
  %2167 = vmatprep.mubr.bf16.mxu0 0
  %2168 = vmatmul.mubr.bf16.gmra.mrb[0].mxu0 %v2013
  %v2169 = vpop.f32.mrb[0].mxu0
  %v2170 = vadd.f32 0.0, %v2169
  %v2171 = vpop.f32.mrb[0].mxu0
  %v2172 = vpop.f32.mrb[0].mxu0
  %v2173 = vadd.f32 0.0, %v2172
  %v2174 = vpop.f32.mrb[0].mxu0
  %2175 = vdwg.mxu0
  %v2176 = vmul.f32 %v2050, %v1326
  %v2177 = vmul.f32 %v2053, %v1329
  %v2178 = vmul.f32 %v2058, %v1334
  %v2179 = vmul.f32 %v2061, %v1337
  %v2180 = vmul.f32 %v2066, %v1342
  %v2181 = vmul.f32 %v2069, %v1345
  %v2182 = vmul.f32 %v2074, %v1350
  %v2183 = vmul.f32 %v2077, %v1353
  %v2184 = vmul.f32 %v2082, %v1358
  %v2185 = vmul.f32 %v2085, %v1361
  %v2186 = vmul.f32 %v2090, %v1366
  %v2187 = vmul.f32 %v2093, %v1369
  %v2188 = vmul.f32 %v2098, %v1374
  %v2189 = vmul.f32 %v2101, %v1377
  %v2190 = vmul.f32 %v2106, %v1382
  %v2191 = vmul.f32 %v2109, %v1385
  %v2192 = vmul.f32 %v2114, %v1390
  %v2193 = vmul.f32 %v2117, %v1393
  %v2194 = vmul.f32 %v2122, %v1398
  %v2195 = vmul.f32 %v2125, %v1401
  %v2196 = vmul.f32 %v2130, %v1406
  %v2197 = vmul.f32 %v2133, %v1409
  %v2198 = vmul.f32 %v2138, %v1414
  %v2199 = vmul.f32 %v2141, %v1417
  %v2200 = vmul.f32 %v2146, %v1422
  %v2201 = vmul.f32 %v2149, %v1425
  %v2202 = vmul.f32 %v2154, %v1430
  %v2203 = vmul.f32 %v2157, %v1433
  %v2204 = vmul.f32 %v2162, %v1438
  %v2205 = vmul.f32 %v2165, %v1441
  %v2206 = vmul.f32 %v2170, %v1446
  %v2207 = vmul.f32 %v2173, %v1449
  %v2208 = vpack.c.bf16 %v2177, %v2176
  %v2209 = vpack.c.bf16 %v2179, %v2178
  %v2210 = vpack.c.bf16 %v2181, %v2180
  %v2211 = vpack.c.bf16 %v2183, %v2182
  %v2212 = vpack.c.bf16 %v2185, %v2184
  %v2213 = vpack.c.bf16 %v2187, %v2186
  %v2214 = vpack.c.bf16 %v2189, %v2188
  %v2215 = vpack.c.bf16 %v2191, %v2190
  %v2216 = vpack.c.bf16 %v2193, %v2192
  %v2217 = vpack.c.bf16 %v2195, %v2194
  %v2218 = vpack.c.bf16 %v2197, %v2196
  %v2219 = vpack.c.bf16 %v2199, %v2198
  %v2220 = vpack.c.bf16 %v2201, %v2200
  %v2221 = vpack.c.bf16 %v2203, %v2202
  %v2222 = vpack.c.bf16 %v2205, %v2204
  %v2223 = vpack.c.bf16 %v2207, %v2206
  %v2224 = vld [vmem:[#allocation2] sm:$0xff]
  %v2225 = vld [vmem:[#allocation2 + $0x8] sm:$0xff]
  %v2226 = vld [vmem:[#allocation2 + $0x10] sm:$0xff]
  %v2227 = vld [vmem:[#allocation2 + $0x18] sm:$0xff]
  %v2228 = vld [vmem:[#allocation2 + $0x20] sm:$0xff]
  %v2229 = vld [vmem:[#allocation2 + $0x28] sm:$0xff]
  %v2230 = vld [vmem:[#allocation2 + $0x30] sm:$0xff]
  %v2231 = vld [vmem:[#allocation2 + $0x38] sm:$0xff]
  %2232 = vxpose.xlu0.c.b16.start [1/8] %v1918, 128
  %2233 = vxpose.xlu0.c.b16.cont [2/8] %v1919, 128
  %2234 = vxpose.xlu0.c.b16.cont [3/8] %v1920, 128
  %2235 = vxpose.xlu0.c.b16.cont [4/8] %v1921, 128
  %2236 = vxpose.xlu0.c.b16.cont [5/8] %v1922, 128
  %2237 = vxpose.xlu0.c.b16.cont [6/8] %v1923, 128
  %2238 = vxpose.xlu0.c.b16.cont [7/8] %v1924, 128
  %2239 = vxpose.xlu0.c.b16.end [8/8] %v1925, 128
  %v2240 = vpop.trf.xlu0
  %v2241 = vpop.trf.xlu0
  %v2242 = vpop.trf.xlu0
  %v2243 = vpop.trf.xlu0
  %v2244 = vpop.trf.xlu0
  %v2245 = vpop.trf.xlu0
  %v2246 = vpop.trf.xlu0
  %v2247 = vpop.trf.xlu0
  %2248 = vxpose.xlu0.c.b16.start [1/8] %v1926, 128
  %2249 = vxpose.xlu0.c.b16.cont [2/8] %v1927, 128
  %2250 = vxpose.xlu0.c.b16.cont [3/8] %v1928, 128
  %2251 = vxpose.xlu0.c.b16.cont [4/8] %v1929, 128
  %2252 = vxpose.xlu0.c.b16.cont [5/8] %v1930, 128
  %2253 = vxpose.xlu0.c.b16.cont [6/8] %v1931, 128
  %2254 = vxpose.xlu0.c.b16.cont [7/8] %v1932, 128
  %2255 = vxpose.xlu0.c.b16.end [8/8] %v1933, 128
  %v2256 = vpop.trf.xlu0
  %v2257 = vpop.trf.xlu0
  %v2258 = vpop.trf.xlu0
  %v2259 = vpop.trf.xlu0
  %v2260 = vpop.trf.xlu0
  %v2261 = vpop.trf.xlu0
  %v2262 = vpop.trf.xlu0
  %v2263 = vpop.trf.xlu0
  %2264 = vmatprep.subr.bf16.mxu0 0
  %2265 = vmatpush1.bf16.msra.mxu0 %v2208
  %2266 = vmatprep.subr.bf16.mxu0 0
  %2267 = vmatpush1.bf16.msra.mxu0 %v2209
  %2268 = vmatprep.subr.bf16.mxu0 0
  %2269 = vmatpush1.bf16.msra.mxu0 %v2210
  %2270 = vmatprep.subr.bf16.mxu0 0
  %2271 = vmatpush1.bf16.msra.mxu0 %v2211
  %2272 = vmatprep.subr.bf16.mxu0 0
  %2273 = vmatpush1.bf16.msra.mxu0 %v2212
  %2274 = vmatprep.subr.bf16.mxu0 0
  %2275 = vmatpush1.bf16.msra.mxu0 %v2213
  %2276 = vmatprep.subr.bf16.mxu0 0
  %2277 = vmatpush1.bf16.msra.mxu0 %v2214
  %2278 = vmatprep.subr.bf16.mxu0 0
  %2279 = vmatpush1.bf16.msra.mxu0 %v2215
  %2280 = vmatprep.subr.bf16.mxu0 0
  %2281 = vmatpush1.bf16.msra.mxu0 %v2216
  %2282 = vmatprep.subr.bf16.mxu0 0
  %2283 = vmatpush1.bf16.msra.mxu0 %v2217
  %2284 = vmatprep.subr.bf16.mxu0 0
  %2285 = vmatpush1.bf16.msra.mxu0 %v2218
  %2286 = vmatprep.subr.bf16.mxu0 0
  %2287 = vmatpush1.bf16.msra.mxu0 %v2219
  %2288 = vmatprep.subr.bf16.mxu0 0
  %2289 = vmatpush1.bf16.msra.mxu0 %v2220
  %2290 = vmatprep.subr.bf16.mxu0 0
  %2291 = vmatpush1.bf16.msra.mxu0 %v2221
  %2292 = vmatprep.subr.bf16.mxu0 0
  %2293 = vmatpush1.bf16.msra.mxu0 %v2222
  %2294 = vmatprep.subr.bf16.mxu0 0
  %2295 = vmatpush1.bf16.msra.mxu0 %v2223
  %2296 = vmatprep.mubr.bf16.mxu0 %v2256
  %2297 = vmatmul.mubr.bf16.gmra.mrb[0].mxu0 %v2240
  %v2298 = vpop.f32.mrb[0].mxu0
  %v2299 = vadd.f32 0.0, %v2298
  %v2300 = vpop.f32.mrb[0].mxu0
  %v2301 = vpop.f32.mrb[0].mxu0
  %v2302 = vadd.f32 0.0, %v2301
  %v2303 = vpop.f32.mrb[0].mxu0
  %2304 = vmatprep.mubr.bf16.mxu0 %v2257
  %2305 = vmatmul.mubr.bf16.gmra.mrb[0].mxu0 %v2241
  %v2306 = vpop.f32.mrb[0].mxu0
  %v2307 = vadd.f32 0.0, %v2306
  %v2308 = vpop.f32.mrb[0].mxu0
  %v2309 = vpop.f32.mrb[0].mxu0
  %v2310 = vadd.f32 0.0, %v2309
  %v2311 = vpop.f32.mrb[0].mxu0
  %2312 = vmatprep.mubr.bf16.mxu0 %v2258
  %2313 = vmatmul.mubr.bf16.gmra.mrb[0].mxu0 %v2242
  %v2314 = vpop.f32.mrb[0].mxu0
  %v2315 = vadd.f32 0.0, %v2314
  %v2316 = vpop.f32.mrb[0].mxu0
  %v2317 = vpop.f32.mrb[0].mxu0
  %v2318 = vadd.f32 0.0, %v2317
  %v2319 = vpop.f32.mrb[0].mxu0
  %2320 = vmatprep.mubr.bf16.mxu0 %v2259
  %2321 = vmatmul.mubr.bf16.gmra.mrb[0].mxu0 %v2243
  %v2322 = vpop.f32.mrb[0].mxu0
  %v2323 = vadd.f32 0.0, %v2322
  %v2324 = vpop.f32.mrb[0].mxu0
  %v2325 = vpop.f32.mrb[0].mxu0
  %v2326 = vadd.f32 0.0, %v2325
  %v2327 = vpop.f32.mrb[0].mxu0
  %2328 = vdwg.mxu0
  %v2329 = vadd.f32 %v2224, %v2299
  %v2330 = vadd.f32 %v2225, %v2302
  %v2331 = vadd.f32 %v2226, %v2307
  %v2332 = vadd.f32 %v2227, %v2310
  %v2333 = vadd.f32 %v2228, %v2315
  %v2334 = vadd.f32 %v2229, %v2318
  %v2335 = vadd.f32 %v2230, %v2323
  %v2336 = vadd.f32 %v2231, %v2326
  %vm2337 = vcmask 261120
  %2338 = vst.msk [vmem:[#allocation2] sm:$0xff] %vm2337, %v2329
  %2339 = vst.msk [vmem:[#allocation2 + $0x8] sm:$0xff] %vm2337, %v2330
  %2340 = vst.msk [vmem:[#allocation2 + $0x10] sm:$0xff] %vm2337, %v2331
  %2341 = vst.msk [vmem:[#allocation2 + $0x18] sm:$0xff] %vm2337, %v2332
  %2342 = vst.msk [vmem:[#allocation2 + $0x20] sm:$0xff] %vm2337, %v2333
  %2343 = vst.msk [vmem:[#allocation2 + $0x28] sm:$0xff] %vm2337, %v2334
  %2344 = vst.msk [vmem:[#allocation2 + $0x30] sm:$0xff] %vm2337, %v2335
  %2345 = vst.msk [vmem:[#allocation2 + $0x38] sm:$0xff] %vm2337, %v2336
  // Predicated region
  $region62: #{graph_convolution_forward.3} parent=0 // pred_check
    %p2346 = pneg %p48
  $region63: #{graph_convolution_forward.3} parent=0 // pred_check_branch
    %2348 = sbr.rel (%p2346) target = $region65
  $region64: #{graph_convolution_forward.3} parent=0 // pred_region
    %v2349 = vld [vmem:[#allocation2] sm:$0xff]
    %v2350 = vld [vmem:[#allocation2 + $0x8] sm:$0xff]
    %v2351 = vld [vmem:[#allocation2 + $0x10] sm:$0xff]
    %v2352 = vld [vmem:[#allocation2 + $0x18] sm:$0xff]
    %v2353 = vld [vmem:[#allocation2 + $0x20] sm:$0xff]
    %v2354 = vld [vmem:[#allocation2 + $0x28] sm:$0xff]
    %v2355 = vld [vmem:[#allocation2 + $0x30] sm:$0xff]
    %v2356 = vld [vmem:[#allocation2 + $0x38] sm:$0xff]
    %v2357 = vld [vmem:[%s10] sm:$0xff]
    %v2358 = vld [vmem:[%s10 + $0x8] sm:$0xff]
    %v2359 = vld [vmem:[%s10 + $0x10] sm:$0xff]
    %v2360 = vld [vmem:[%s10 + $0x18] sm:$0xff]
    %v2361 = vld [vmem:[%s10 + $0x20] sm:$0xff]
    %v2362 = vld [vmem:[%s10 + $0x28] sm:$0xff]
    %v2363 = vld [vmem:[%s10 + $0x30] sm:$0xff]
    %v2364 = vld [vmem:[%s10 + $0x38] sm:$0xff]
    %v2365 = vrsqrt.pop %v2357
    %v2366 = vrsqrt.pop %v2358
    %v2367 = vrsqrt.pop %v2359
    %v2368 = vrsqrt.pop %v2360
    %v2369 = vrsqrt.pop %v2361
    %v2370 = vrsqrt.pop %v2362
    %v2371 = vrsqrt.pop %v2363
    %v2372 = vrsqrt.pop %v2364
    %2374 = vset.pattern.permute.xlu0 0
    %2375 = vperm.xlu0 %2374, %v2365
    %v2376 = vpop.permute.xlu0 %2375
    %2379 = vset.pattern.permute.xlu0 0
    %2380 = vperm.xlu0 %2379, %v2366
    %v2381 = vpop.permute.xlu0 %2380
    %2384 = vset.pattern.permute.xlu0 0
    %2385 = vperm.xlu0 %2384, %v2367
    %v2386 = vpop.permute.xlu0 %2385
    %2389 = vset.pattern.permute.xlu0 0
    %2390 = vperm.xlu0 %2389, %v2368
    %v2391 = vpop.permute.xlu0 %2390
    %2394 = vset.pattern.permute.xlu0 0
    %2395 = vperm.xlu0 %2394, %v2369
    %v2396 = vpop.permute.xlu0 %2395
    %2399 = vset.pattern.permute.xlu0 0
    %2400 = vperm.xlu0 %2399, %v2370
    %v2401 = vpop.permute.xlu0 %2400
    %2404 = vset.pattern.permute.xlu0 0
    %2405 = vperm.xlu0 %2404, %v2371
    %v2406 = vpop.permute.xlu0 %2405
    %2409 = vset.pattern.permute.xlu0 0
    %2410 = vperm.xlu0 %2409, %v2372
    %v2411 = vpop.permute.xlu0 %2410
    %v2413 = vmul.f32 %v2349, %v2376
    %v2414 = vmul.f32 %v2350, %v2381
    %v2415 = vmul.f32 %v2351, %v2386
    %v2416 = vmul.f32 %v2352, %v2391
    %v2417 = vmul.f32 %v2353, %v2396
    %v2418 = vmul.f32 %v2354, %v2401
    %v2419 = vmul.f32 %v2355, %v2406
    %v2420 = vmul.f32 %v2356, %v2411
    %v2421 = vpack.c.bf16 %v2414, %v2413
    %v2422 = vpack.c.bf16 %v2416, %v2415
    %v2423 = vpack.c.bf16 %v2418, %v2417
    %v2424 = vpack.c.bf16 %v2420, %v2419
    %v2425 = vld [vmem:[%s11] sm:$0xff]
    %v2426 = vld [vmem:[%s11 + $0x8] sm:$0xff]
    %v2427 = vld [vmem:[%s11 + $0x10] sm:$0xff]
    %v2428 = vld [vmem:[%s11 + $0x18] sm:$0xff]
    %v2433 = vunpack.c.l.b16 %v2425
    %v2434 = vunpack.c.h.b16 %v2425
    %v2435 = vunpack.c.l.b16 %v2426
    %v2436 = vunpack.c.h.b16 %v2426
    %v2437 = vunpack.c.l.b16 %v2427
    %v2438 = vunpack.c.h.b16 %v2427
    %v2439 = vunpack.c.l.b16 %v2428
    %v2440 = vunpack.c.h.b16 %v2428
    %v2441 = vpack.c.b16 %v2435, %v2433
    %v2442 = vpack.c.b16 %v2436, %v2434
    %v2443 = vpack.c.b16 %v2439, %v2437
    %v2444 = vpack.c.b16 %v2440, %v2438
    %v2450 = vsel %vm2337, %v2421, 0
    %v2453 = vsel %vm2337, %v2422, 0
    %v2456 = vsel %vm2337, %v2423, 0
    %v2459 = vsel %vm2337, %v2424, 0
    %2461 = vmatprep.subr.bf16.mxu0 %v2442
    %2462 = vmatpush1.bf16.msra.mxu0 %v2441
    %2463 = vmatprep.subr.bf16.mxu0 %v2444
    %2464 = vmatpush1.bf16.msra.mxu0 %v2443
    %2465 = vmatprep.subr.bf16.mxu0 0
    %2466 = vmatpush1.bf16.msra.mxu0 0
    %2467 = vmatprep.subr.bf16.mxu0 0
    %2468 = vmatpush1.bf16.msra.mxu0 0
    %2469 = vmatprep.subr.bf16.mxu0 0
    %2470 = vmatpush1.bf16.msra.mxu0 0
    %2471 = vmatprep.subr.bf16.mxu0 0
    %2472 = vmatpush1.bf16.msra.mxu0 0
    %2473 = vmatprep.subr.bf16.mxu0 0
    %2474 = vmatpush1.bf16.msra.mxu0 0
    %2475 = vmatprep.subr.bf16.mxu0 0
    %2476 = vmatpush1.bf16.msra.mxu0 0
    %2477 = vmatprep.subr.bf16.mxu0 0
    %2478 = vmatpush1.bf16.msra.mxu0 0
    %2479 = vmatprep.subr.bf16.mxu0 0
    %2480 = vmatpush1.bf16.msra.mxu0 0
    %2481 = vmatprep.subr.bf16.mxu0 0
    %2482 = vmatpush1.bf16.msra.mxu0 0
    %2483 = vmatprep.subr.bf16.mxu0 0
    %2484 = vmatpush1.bf16.msra.mxu0 0
    %2485 = vmatprep.subr.bf16.mxu0 0
    %2486 = vmatpush1.bf16.msra.mxu0 0
    %2487 = vmatprep.subr.bf16.mxu0 0
    %2488 = vmatpush1.bf16.msra.mxu0 0
    %2489 = vmatprep.subr.bf16.mxu0 0
    %2490 = vmatpush1.bf16.msra.mxu0 0
    %2491 = vmatprep.subr.bf16.mxu0 0
    %2492 = vmatpush1.bf16.msra.mxu0 0
    %2493 = vmatprep.mubr.bf16.mxu0 0
    %2494 = vmatmul.mubr.bf16.gmra.mrb[0].mxu0 %v2450
    %v2495 = vpop.f32.mrb[0].mxu0
    %v2496 = vadd.f32 0.0, %v2495
    %v2497 = vpop.f32.mrb[0].mxu0
    %v2498 = vadd.f32 0.0, %v2497
    %v2499 = vpop.f32.mrb[0].mxu0
    %v2500 = vadd.f32 0.0, %v2499
    %v2501 = vpop.f32.mrb[0].mxu0
    %v2502 = vadd.f32 0.0, %v2501
    %2503 = vmatprep.mubr.bf16.mxu0 0
    %2504 = vmatmul.mubr.bf16.gmra.mrb[0].mxu0 %v2453
    %v2505 = vpop.f32.mrb[0].mxu0
    %v2506 = vadd.f32 0.0, %v2505
    %v2507 = vpop.f32.mrb[0].mxu0
    %v2508 = vadd.f32 0.0, %v2507
    %v2509 = vpop.f32.mrb[0].mxu0
    %v2510 = vadd.f32 0.0, %v2509
    %v2511 = vpop.f32.mrb[0].mxu0
    %v2512 = vadd.f32 0.0, %v2511
    %2513 = vmatprep.mubr.bf16.mxu0 0
    %2514 = vmatmul.mubr.bf16.gmra.mrb[0].mxu0 %v2456
    %v2515 = vpop.f32.mrb[0].mxu0
    %v2516 = vadd.f32 0.0, %v2515
    %v2517 = vpop.f32.mrb[0].mxu0
    %v2518 = vadd.f32 0.0, %v2517
    %v2519 = vpop.f32.mrb[0].mxu0
    %v2520 = vadd.f32 0.0, %v2519
    %v2521 = vpop.f32.mrb[0].mxu0
    %v2522 = vadd.f32 0.0, %v2521
    %2523 = vmatprep.mubr.bf16.mxu0 0
    %2524 = vmatmul.mubr.bf16.gmra.mrb[0].mxu0 %v2459
    %v2525 = vpop.f32.mrb[0].mxu0
    %v2526 = vadd.f32 0.0, %v2525
    %v2527 = vpop.f32.mrb[0].mxu0
    %v2528 = vadd.f32 0.0, %v2527
    %v2529 = vpop.f32.mrb[0].mxu0
    %v2530 = vadd.f32 0.0, %v2529
    %v2531 = vpop.f32.mrb[0].mxu0
    %v2532 = vadd.f32 0.0, %v2531
    %2533 = vdwg.mxu0
    %v2534 = vld [vmem:[%s9] sm:$0xf]
    %v2535 = vld [vmem:[%s9 + $0x4] sm:$0xf]
    %v2536 = vld [vmem:[%s9 + $0x8] sm:$0xf]
    %v2537 = vld [vmem:[%s9 + $0xc] sm:$0xf]
    %v2538 = vld [vmem:[%s9 + $0x10] sm:$0xf]
    %v2539 = vld [vmem:[%s9 + $0x14] sm:$0xf]
    %v2540 = vld [vmem:[%s9 + $0x18] sm:$0xf]
    %v2541 = vld [vmem:[%s9 + $0x1c] sm:$0xf]
    %v2542 = vld [vmem:[%s12] sm:$0xff]
    %v2551 = vunpack.c.l.b16 %v2534
    %v2552 = vunpack.c.l.b16 %v2535
    %v2553 = vunpack.c.l.b16 %v2536
    %v2554 = vunpack.c.l.b16 %v2537
    %v2555 = vunpack.c.l.b16 %v2538
    %v2556 = vunpack.c.l.b16 %v2539
    %v2557 = vunpack.c.l.b16 %v2540
    %v2558 = vunpack.c.l.b16 %v2541
    %v2559 = vpack.c.b16 %v2552, %v2551
    %v2560 = vpack.c.b16 %v2554, %v2553
    %v2561 = vpack.c.b16 %v2556, %v2555
    %v2562 = vpack.c.b16 %v2558, %v2557
    %v2564 = vunpack.c.l.b16 %v2542
    %v2565 = vunpack.c.h.b16 %v2542
    %v2566 = vpack.c.b16 %v2564, %v2564
    %v2567 = vpack.c.b16 %v2565, %v2565
    %v2569 = vsel %vm965, %v2559, 0
    %v2572 = vsel %vm965, %v2560, 0
    %v2575 = vsel %vm965, %v2561, 0
    %v2578 = vsel %vm965, %v2562, 0
    %v2581 = vsel %vm1014, %v2566, 0
    %v2584 = vsel %vm1014, %v2567, 0
    %2586 = vmatprep.subr.bf16.mxu0 %v2584
    %2587 = vmatpush1.bf16.msra.mxu0 %v2581
    %2588 = vmatprep.subr.bf16.mxu0 0
    %2589 = vmatpush1.bf16.msra.mxu0 0
    %2590 = vmatprep.subr.bf16.mxu0 0
    %2591 = vmatpush1.bf16.msra.mxu0 0
    %2592 = vmatprep.subr.bf16.mxu0 0
    %2593 = vmatpush1.bf16.msra.mxu0 0
    %2594 = vmatprep.subr.bf16.mxu0 0
    %2595 = vmatpush1.bf16.msra.mxu0 0
    %2596 = vmatprep.subr.bf16.mxu0 0
    %2597 = vmatpush1.bf16.msra.mxu0 0
    %2598 = vmatprep.subr.bf16.mxu0 0
    %2599 = vmatpush1.bf16.msra.mxu0 0
    %2600 = vmatprep.subr.bf16.mxu0 0
    %2601 = vmatpush1.bf16.msra.mxu0 0
    %2602 = vmatprep.subr.bf16.mxu0 0
    %2603 = vmatpush1.bf16.msra.mxu0 0
    %2604 = vmatprep.subr.bf16.mxu0 0
    %2605 = vmatpush1.bf16.msra.mxu0 0
    %2606 = vmatprep.subr.bf16.mxu0 0
    %2607 = vmatpush1.bf16.msra.mxu0 0
    %2608 = vmatprep.subr.bf16.mxu0 0
    %2609 = vmatpush1.bf16.msra.mxu0 0
    %2610 = vmatprep.subr.bf16.mxu0 0
    %2611 = vmatpush1.bf16.msra.mxu0 0
    %2612 = vmatprep.subr.bf16.mxu0 0
    %2613 = vmatpush1.bf16.msra.mxu0 0
    %2614 = vmatprep.subr.bf16.mxu0 0
    %2615 = vmatpush1.bf16.msra.mxu0 0
    %2616 = vmatprep.subr.bf16.mxu0 0
    %2617 = vmatpush1.bf16.msra.mxu0 0
    %2618 = vmatprep.mubr.bf16.mxu0 0
    %2619 = vmatmul.mubr.bf16.gmra.mrb[0].mxu0 %v2569
    %v2620 = vpop.f32.mrb[0].mxu0
    %v2621 = vadd.f32 0.0, %v2620
    %v2622 = vpop.f32.mrb[0].mxu0
    %v2623 = vadd.f32 0.0, %v2622
    %v2624 = vpop.f32.mrb[0].mxu0
    %v2625 = vadd.f32 0.0, %v2624
    %v2626 = vpop.f32.mrb[0].mxu0
    %v2627 = vadd.f32 0.0, %v2626
    %2628 = vmatprep.mubr.bf16.mxu0 0
    %2629 = vmatmul.mubr.bf16.gmra.mrb[0].mxu0 %v2572
    %v2630 = vpop.f32.mrb[0].mxu0
    %v2631 = vadd.f32 0.0, %v2630
    %v2632 = vpop.f32.mrb[0].mxu0
    %v2633 = vadd.f32 0.0, %v2632
    %v2634 = vpop.f32.mrb[0].mxu0
    %v2635 = vadd.f32 0.0, %v2634
    %v2636 = vpop.f32.mrb[0].mxu0
    %v2637 = vadd.f32 0.0, %v2636
    %2638 = vmatprep.mubr.bf16.mxu0 0
    %2639 = vmatmul.mubr.bf16.gmra.mrb[0].mxu0 %v2575
    %v2640 = vpop.f32.mrb[0].mxu0
    %v2641 = vadd.f32 0.0, %v2640
    %v2642 = vpop.f32.mrb[0].mxu0
    %v2643 = vadd.f32 0.0, %v2642
    %v2644 = vpop.f32.mrb[0].mxu0
    %v2645 = vadd.f32 0.0, %v2644
    %v2646 = vpop.f32.mrb[0].mxu0
    %v2647 = vadd.f32 0.0, %v2646
    %2648 = vmatprep.mubr.bf16.mxu0 0
    %2649 = vmatmul.mubr.bf16.gmra.mrb[0].mxu0 %v2578
    %v2650 = vpop.f32.mrb[0].mxu0
    %v2651 = vadd.f32 0.0, %v2650
    %v2652 = vpop.f32.mrb[0].mxu0
    %v2653 = vadd.f32 0.0, %v2652
    %v2654 = vpop.f32.mrb[0].mxu0
    %v2655 = vadd.f32 0.0, %v2654
    %v2656 = vpop.f32.mrb[0].mxu0
    %v2657 = vadd.f32 0.0, %v2656
    %2658 = vdwg.mxu0
    %v2659 = vmul.f32 %v2496, %v2621
    %v2660 = vmul.f32 %v2498, %v2623
    %v2661 = vmul.f32 %v2500, %v2625
    %v2662 = vmul.f32 %v2502, %v2627
    %v2663 = vmul.f32 %v2506, %v2631
    %v2664 = vmul.f32 %v2508, %v2633
    %v2665 = vmul.f32 %v2510, %v2635
    %v2666 = vmul.f32 %v2512, %v2637
    %v2667 = vmul.f32 %v2516, %v2641
    %v2668 = vmul.f32 %v2518, %v2643
    %v2669 = vmul.f32 %v2520, %v2645
    %v2670 = vmul.f32 %v2522, %v2647
    %v2671 = vmul.f32 %v2526, %v2651
    %v2672 = vmul.f32 %v2528, %v2653
    %v2673 = vmul.f32 %v2530, %v2655
    %v2674 = vmul.f32 %v2532, %v2657
    %v2675 = vpack.c.bf16 %v2661, %v2659
    %v2676 = vpack.c.bf16 %v2662, %v2660
    %v2677 = vpack.c.bf16 %v2665, %v2663
    %v2678 = vpack.c.bf16 %v2666, %v2664
    %v2679 = vpack.c.bf16 %v2669, %v2667
    %v2680 = vpack.c.bf16 %v2670, %v2668
    %v2681 = vpack.c.bf16 %v2673, %v2671
    %v2682 = vpack.c.bf16 %v2674, %v2672
    %v2683 = vld [vmem:[%s13] sm:$0xf]
    %v2684 = vld [vmem:[%s13 + $0x4] sm:$0xf]
    %v2685 = vld [vmem:[%s13 + $0x8] sm:$0xf]
    %v2686 = vld [vmem:[%s13 + $0xc] sm:$0xf]
    %v2687 = vld [vmem:[%s13 + $0x10] sm:$0xf]
    %v2688 = vld [vmem:[%s13 + $0x14] sm:$0xf]
    %v2689 = vld [vmem:[%s13 + $0x18] sm:$0xf]
    %v2690 = vld [vmem:[%s13 + $0x1c] sm:$0xf]
    %v2691 = vld [vmem:[%s13 + $0x20] sm:$0xf]
    %v2692 = vld [vmem:[%s13 + $0x24] sm:$0xf]
    %v2693 = vld [vmem:[%s13 + $0x28] sm:$0xf]
    %v2694 = vld [vmem:[%s13 + $0x2c] sm:$0xf]
    %v2695 = vld [vmem:[%s13 + $0x30] sm:$0xf]
    %v2696 = vld [vmem:[%s13 + $0x34] sm:$0xf]
    %v2697 = vld [vmem:[%s13 + $0x38] sm:$0xf]
    %v2698 = vld [vmem:[%s13 + $0x3c] sm:$0xf]
    %v2699 = vld [vmem:[%s13 + $0x40] sm:$0xf]
    %v2700 = vld [vmem:[%s13 + $0x44] sm:$0xf]
    %v2701 = vld [vmem:[%s13 + $0x48] sm:$0xf]
    %v2702 = vld [vmem:[%s13 + $0x4c] sm:$0xf]
    %v2703 = vld [vmem:[%s13 + $0x50] sm:$0xf]
    %v2704 = vld [vmem:[%s13 + $0x54] sm:$0xf]
    %v2705 = vld [vmem:[%s13 + $0x58] sm:$0xf]
    %v2706 = vld [vmem:[%s13 + $0x5c] sm:$0xf]
    %v2707 = vld [vmem:[%s13 + $0x60] sm:$0xf]
    %v2708 = vld [vmem:[%s13 + $0x64] sm:$0xf]
    %v2709 = vld [vmem:[%s13 + $0x68] sm:$0xf]
    %v2710 = vld [vmem:[%s13 + $0x6c] sm:$0xf]
    %v2711 = vld [vmem:[%s13 + $0x70] sm:$0xf]
    %v2712 = vld [vmem:[%s13 + $0x74] sm:$0xf]
    %v2713 = vld [vmem:[%s13 + $0x78] sm:$0xf]
    %v2714 = vld [vmem:[%s13 + $0x7c] sm:$0xf]
    %v2747 = vunpack.c.l.b16 %v2683
    %v2748 = vunpack.c.l.b16 %v2684
    %v2749 = vunpack.c.l.b16 %v2685
    %v2750 = vunpack.c.l.b16 %v2686
    %v2751 = vunpack.c.l.b16 %v2687
    %v2752 = vunpack.c.l.b16 %v2688
    %v2753 = vunpack.c.l.b16 %v2689
    %v2754 = vunpack.c.l.b16 %v2690
    %v2755 = vunpack.c.l.b16 %v2691
    %v2756 = vunpack.c.l.b16 %v2692
    %v2757 = vunpack.c.l.b16 %v2693
    %v2758 = vunpack.c.l.b16 %v2694
    %v2759 = vunpack.c.l.b16 %v2695
    %v2760 = vunpack.c.l.b16 %v2696
    %v2761 = vunpack.c.l.b16 %v2697
    %v2762 = vunpack.c.l.b16 %v2698
    %v2763 = vunpack.c.l.b16 %v2699
    %v2764 = vunpack.c.l.b16 %v2700
    %v2765 = vunpack.c.l.b16 %v2701
    %v2766 = vunpack.c.l.b16 %v2702
    %v2767 = vunpack.c.l.b16 %v2703
    %v2768 = vunpack.c.l.b16 %v2704
    %v2769 = vunpack.c.l.b16 %v2705
    %v2770 = vunpack.c.l.b16 %v2706
    %v2771 = vunpack.c.l.b16 %v2707
    %v2772 = vunpack.c.l.b16 %v2708
    %v2773 = vunpack.c.l.b16 %v2709
    %v2774 = vunpack.c.l.b16 %v2710
    %v2775 = vunpack.c.l.b16 %v2711
    %v2776 = vunpack.c.l.b16 %v2712
    %v2777 = vunpack.c.l.b16 %v2713
    %v2778 = vunpack.c.l.b16 %v2714
    %v2779 = vpack.c.b16 %v2748, %v2747
    %v2780 = vpack.c.b16 %v2750, %v2749
    %v2781 = vpack.c.b16 %v2752, %v2751
    %v2782 = vpack.c.b16 %v2754, %v2753
    %v2783 = vpack.c.b16 %v2756, %v2755
    %v2784 = vpack.c.b16 %v2758, %v2757
    %v2785 = vpack.c.b16 %v2760, %v2759
    %v2786 = vpack.c.b16 %v2762, %v2761
    %v2787 = vpack.c.b16 %v2764, %v2763
    %v2788 = vpack.c.b16 %v2766, %v2765
    %v2789 = vpack.c.b16 %v2768, %v2767
    %v2790 = vpack.c.b16 %v2770, %v2769
    %v2791 = vpack.c.b16 %v2772, %v2771
    %v2792 = vpack.c.b16 %v2774, %v2773
    %v2793 = vpack.c.b16 %v2776, %v2775
    %v2794 = vpack.c.b16 %v2778, %v2777
    %2811 = vmatprep.subr.bf16.mxu0 0
    %2812 = vmatpush1.bf16.msra.mxu0 %v2779
    %2813 = vmatprep.subr.bf16.mxu0 0
    %2814 = vmatpush1.bf16.msra.mxu0 %v2780
    %2815 = vmatprep.subr.bf16.mxu0 0
    %2816 = vmatpush1.bf16.msra.mxu0 %v2781
    %2817 = vmatprep.subr.bf16.mxu0 0
    %2818 = vmatpush1.bf16.msra.mxu0 %v2782
    %2819 = vmatprep.subr.bf16.mxu0 0
    %2820 = vmatpush1.bf16.msra.mxu0 %v2783
    %2821 = vmatprep.subr.bf16.mxu0 0
    %2822 = vmatpush1.bf16.msra.mxu0 %v2784
    %2823 = vmatprep.subr.bf16.mxu0 0
    %2824 = vmatpush1.bf16.msra.mxu0 %v2785
    %2825 = vmatprep.subr.bf16.mxu0 0
    %2826 = vmatpush1.bf16.msra.mxu0 %v2786
    %2827 = vmatprep.subr.bf16.mxu0 0
    %2828 = vmatpush1.bf16.msra.mxu0 %v2787
    %2829 = vmatprep.subr.bf16.mxu0 0
    %2830 = vmatpush1.bf16.msra.mxu0 %v2788
    %2831 = vmatprep.subr.bf16.mxu0 0
    %2832 = vmatpush1.bf16.msra.mxu0 %v2789
    %2833 = vmatprep.subr.bf16.mxu0 0
    %2834 = vmatpush1.bf16.msra.mxu0 %v2790
    %2835 = vmatprep.subr.bf16.mxu0 0
    %2836 = vmatpush1.bf16.msra.mxu0 %v2791
    %2837 = vmatprep.subr.bf16.mxu0 0
    %2838 = vmatpush1.bf16.msra.mxu0 %v2792
    %2839 = vmatprep.subr.bf16.mxu0 0
    %2840 = vmatpush1.bf16.msra.mxu0 %v2793
    %2841 = vmatprep.subr.bf16.mxu0 0
    %2842 = vmatpush1.bf16.msra.mxu0 %v2794
    %2843 = vmatprep.mubr.bf16.mxu0 %v2676
    %2844 = vmatmul.mubr.bf16.gmra.mrb[0].mxu0 %v2675
    %v2845 = vpop.f32.mrb[0].mxu0
    %v2846 = vadd.f32 0.0, %v2845
    %v2847 = vpop.f32.mrb[0].mxu0
    %v2848 = vpop.f32.mrb[0].mxu0
    %v2849 = vadd.f32 0.0, %v2848
    %v2850 = vpop.f32.mrb[0].mxu0
    %2851 = vmatprep.mubr.bf16.mxu0 %v2678
    %2852 = vmatmul.mubr.bf16.gmra.mrb[0].mxu0 %v2677
    %v2853 = vpop.f32.mrb[0].mxu0
    %v2854 = vadd.f32 0.0, %v2853
    %v2855 = vpop.f32.mrb[0].mxu0
    %v2856 = vpop.f32.mrb[0].mxu0
    %v2857 = vadd.f32 0.0, %v2856
    %v2858 = vpop.f32.mrb[0].mxu0
    %2859 = vmatprep.mubr.bf16.mxu0 %v2680
    %2860 = vmatmul.mubr.bf16.gmra.mrb[0].mxu0 %v2679
    %v2861 = vpop.f32.mrb[0].mxu0
    %v2862 = vadd.f32 0.0, %v2861
    %v2863 = vpop.f32.mrb[0].mxu0
    %v2864 = vpop.f32.mrb[0].mxu0
    %v2865 = vadd.f32 0.0, %v2864
    %v2866 = vpop.f32.mrb[0].mxu0
    %2867 = vmatprep.mubr.bf16.mxu0 %v2682
    %2868 = vmatmul.mubr.bf16.gmra.mrb[0].mxu0 %v2681
    %v2869 = vpop.f32.mrb[0].mxu0
    %v2870 = vadd.f32 0.0, %v2869
    %v2871 = vpop.f32.mrb[0].mxu0
    %v2872 = vpop.f32.mrb[0].mxu0
    %v2873 = vadd.f32 0.0, %v2872
    %v2874 = vpop.f32.mrb[0].mxu0
    %2875 = vdwg.mxu0
    %v2876 = vunpack.c.l.bf16 %v1934
    %v2877 = vunpack.c.l.bf16 %v1935
    %v2878 = vunpack.c.l.bf16 %v1936
    %v2879 = vunpack.c.l.bf16 %v1937
    %v2880 = vunpack.c.l.bf16 %v1938
    %v2881 = vunpack.c.l.bf16 %v1939
    %v2882 = vunpack.c.l.bf16 %v1940
    %v2883 = vunpack.c.l.bf16 %v1941
    %2892 = vrot.lane.b32.xlu0 %v2846, 32
    %v2893 = vpop.permute.xlu0 %2892
    %2894 = vrot.lane.b32.xlu0 %v2849, 32
    %v2895 = vpop.permute.xlu0 %2894
    %2896 = vrot.lane.b32.xlu0 %v2854, 32
    %v2897 = vpop.permute.xlu0 %2896
    %2898 = vrot.lane.b32.xlu0 %v2857, 32
    %v2899 = vpop.permute.xlu0 %2898
    %2900 = vrot.lane.b32.xlu0 %v2862, 32
    %v2901 = vpop.permute.xlu0 %2900
    %2902 = vrot.lane.b32.xlu0 %v2865, 32
    %v2903 = vpop.permute.xlu0 %2902
    %2904 = vrot.lane.b32.xlu0 %v2870, 32
    %v2905 = vpop.permute.xlu0 %2904
    %2906 = vrot.lane.b32.xlu0 %v2873, 32
    %v2907 = vpop.permute.xlu0 %2906
    %v2916 = vadd.f32 %v2876, %v2893
    %v2917 = vadd.f32 %v2877, %v2895
    %v2918 = vadd.f32 %v2878, %v2897
    %v2919 = vadd.f32 %v2879, %v2899
    %v2920 = vadd.f32 %v2880, %v2901
    %v2921 = vadd.f32 %v2881, %v2903
    %v2922 = vadd.f32 %v2882, %v2905
    %v2923 = vadd.f32 %v2883, %v2907
    %2932 = vrot.lane.b32.xlu0 %v2916, 96
    %v2933 = vpop.permute.xlu0 %2932
    %2934 = vrot.lane.b32.xlu0 %v2917, 96
    %v2935 = vpop.permute.xlu0 %2934
    %2936 = vrot.lane.b32.xlu0 %v2918, 96
    %v2937 = vpop.permute.xlu0 %2936
    %2938 = vrot.lane.b32.xlu0 %v2919, 96
    %v2939 = vpop.permute.xlu0 %2938
    %2940 = vrot.lane.b32.xlu0 %v2920, 96
    %v2941 = vpop.permute.xlu0 %2940
    %2942 = vrot.lane.b32.xlu0 %v2921, 96
    %v2943 = vpop.permute.xlu0 %2942
    %2944 = vrot.lane.b32.xlu0 %v2922, 96
    %v2945 = vpop.permute.xlu0 %2944
    %2946 = vrot.lane.b32.xlu0 %v2923, 96
    %v2947 = vpop.permute.xlu0 %2946
    %2956 = vst.msk [vmem:[%s14] sm:$0xff] %vm642, %v2933
    %2957 = vst.msk [vmem:[%s14 + $0x8] sm:$0xff] %vm642, %v2935
    %2958 = vst.msk [vmem:[%s14 + $0x10] sm:$0xff] %vm642, %v2937
    %2959 = vst.msk [vmem:[%s14 + $0x18] sm:$0xff] %vm642, %v2939
    %2960 = vst.msk [vmem:[%s14 + $0x20] sm:$0xff] %vm642, %v2941
    %2961 = vst.msk [vmem:[%s14 + $0x28] sm:$0xff] %vm642, %v2943
    %2962 = vst.msk [vmem:[%s14 + $0x30] sm:$0xff] %vm642, %v2945
    %2963 = vst.msk [vmem:[%s14 + $0x38] sm:$0xff] %vm642, %v2947
  $region65: #{graph_convolution_forward.3} parent=0 // pred_fallthru
    _
  // Predicated region
  $region66: #{graph_convolution_forward.3} parent=0 // pred_check
    _
  $region67: #{graph_convolution_forward.3} parent=0 // pred_check_branch
    %2965 = sbr.rel (0) target = $region69
  $region68: #{graph_convolution_forward.3} parent=0 // pred_region
    _
  $region69: #{graph_convolution_forward.3} parent=0 // pred_fallthru
    _
  // Predicated region
  $region70: #{graph_convolution_forward.3} parent=0 // pred_check
    _
  $region71: #{graph_convolution_forward.3} parent=0 // pred_check_branch
    %2967 = sbr.rel (0) target = $region73
  $region72: #{graph_convolution_forward.3} parent=0 // pred_region
    _
  $region73: #{graph_convolution_forward.3} parent=0 // pred_fallthru
    _

</llo_original>
